<compile_context>
chip_gen: v6e
topology: v6e:2x2x1
jax: 0.10.0
libtpu: 0.0.40
codegen_flags: <defaults>
</compile_context>

<pallas_src>
import functools

import jax
import jax.numpy as jnp
from jax.experimental import pallas as pl
from jax.experimental.pallas import tpu as pltpu


_LANES = 128              # padded feature width (lane-dense stores)
_TILE = 512               # node tile for the large-N tiled path
_FUSED_MAX_NODES = 1024   # below this, run the whole forward in one kernel
_NEG_INF = -1e30


def _round_up(x, m):
    return (x + m - 1) // m * m


def _pad_to(a, rows, cols, dtype):
    out = jnp.zeros((rows, cols), dtype)
    return out.at[: a.shape[0], : a.shape[1]].set(a.astype(dtype))


def _log_softmax_masked(y, valid_cols):
    """f32 log_softmax over the first `valid_cols` lanes (padded lanes masked)."""
    lane = jax.lax.broadcasted_iota(jnp.int32, y.shape, 1)
    y = jnp.where(lane < valid_cols, y, _NEG_INF)
    mx = jnp.max(y, axis=1, keepdims=True)
    shifted = y - mx
    lse = jnp.log(jnp.sum(jnp.exp(shifted), axis=1, keepdims=True))
    return shifted - lse


# --------------------------------------------------------------------------
# Fused 4-layer forward for small graphs: one pallas_call, all VMEM-resident.
# --------------------------------------------------------------------------
def _fused_forward_kernel(adj_g_ref, adj_m_ref, x_ref, w1_ref, b1_ref,
                          w2_ref, b2_ref, out_ref, *, valid_cols):
    adj_g = adj_g_ref[...]                      # (N, N) bf16
    adj_m = adj_m_ref[...]                      # (N, N) bf16
    w1 = w1_ref[...]                            # (F, F) bf16
    w2 = w2_ref[...]
    b1 = b1_ref[...]                            # (1, F) f32
    b2 = b2_ref[...]

    def layer(adj, x_bf16, w_bf16, b_f32, relu):
        agg = jnp.dot(adj, x_bf16, preferred_element_type=jnp.float32)
        y = jnp.dot(agg.astype(jnp.bfloat16), w_bf16,
                    preferred_element_type=jnp.float32) + b_f32
        if relu:
            y = jnp.maximum(y, 0.0)
        return y

    h = layer(adj_g, x_ref[...], w1, b1, True).astype(jnp.bfloat16)
    g = layer(adj_g, h, w2, b2, False).astype(jnp.bfloat16)
    m = layer(adj_m, g, w1, b1, True).astype(jnp.bfloat16)
    y = layer(adj_m, m, w2, b2, False)
    out_ref[...] = _log_softmax_masked(y, valid_cols)


def _fused_forward(adj_g, adj_m, x_bf16, w1, b1, w2, b2, *, valid_cols):
    n_pad = adj_g.shape[0]
    f = x_bf16.shape[1]

    flops = 4 * (2 * n_pad * n_pad * f + 2 * n_pad * f * f)
    bytes_accessed = (2 * n_pad * n_pad * 2 + n_pad * f * 2
                      + 2 * (f * f * 2 + f * 4) + n_pad * f * 4)
    vmem_limit = min(max(2 * n_pad * n_pad * 2 + (16 << 20), 32 << 20), 48 << 20)

    vmem_spec = pl.BlockSpec(memory_space=pltpu.MemorySpace.VMEM)
    return pl.pallas_call(
        functools.partial(_fused_forward_kernel, valid_cols=valid_cols),
        out_shape=jax.ShapeDtypeStruct((n_pad, f), jnp.float32),
        in_specs=[vmem_spec] * 7,
        out_specs=vmem_spec,
        compiler_params=pltpu.CompilerParams(vmem_limit_bytes=vmem_limit),
        cost_estimate=pl.CostEstimate(flops=flops,
                                      transcendentals=n_pad * f,
                                      bytes_accessed=bytes_accessed),
    )(adj_g, adj_m, x_bf16, w1, b1, w2, b2)


# --------------------------------------------------------------------------
# Tiled GCN layer kernel for large graphs:  out = act((Â @ X) @ W + b)
#   grid = (node-row tiles ["parallel"], contraction tiles ["arbitrary"])
# --------------------------------------------------------------------------
def _gcn_layer_kernel(a_ref, x_ref, w_ref, b_ref, out_ref, acc_ref, *,
                      activation, valid_cols, tk, x_resident):
    k = pl.program_id(1)

    @pl.when(k == 0)
    def _init():
        acc_ref[...] = jnp.zeros_like(acc_ref)

    # Dominant N^2 contraction on the MXU: bf16 inputs, f32 accumulation.
    a_t = a_ref[...]                                   # (TM, TK) bf16
    if x_resident:
        start = pl.multiple_of(k * tk, tk)
        x_t = x_ref[pl.ds(start, tk), :]               # slice VMEM-resident X
    else:
        x_t = x_ref[...]                               # (TK, F) bf16 tile
    acc_ref[...] += jnp.dot(a_t, x_t, preferred_element_type=jnp.float32)

    @pl.when(k == pl.num_programs(1) - 1)
    def _finalize():
        agg = acc_ref[...].astype(jnp.bfloat16)        # (TM, F)
        y = jnp.dot(agg, w_ref[...],
                    preferred_element_type=jnp.float32) + b_ref[...]
        if activation == "relu":
            y = jnp.maximum(y, 0.0)
        elif activation == "log_softmax":
            y = _log_softmax_masked(y, valid_cols)
        out_ref[...] = y.astype(out_ref.dtype)


def _gcn_layer(adj_bf16, x_bf16, w_bf16, b_f32, *, activation, out_dtype,
               valid_cols=_LANES, tile=_TILE):
    n_pad = adj_bf16.shape[0]
    f = x_bf16.shape[1]
    tm = tk = min(tile, n_pad)
    grid = (n_pad // tm, n_pad // tk)
    out_itemsize = jnp.dtype(out_dtype).itemsize

    # Keep X fully VMEM-resident when its (double-buffered) footprint is small;
    # otherwise fall back to streaming X tiles along the contraction axis.
    x_resident = 2 * n_pad * f * 2 <= (16 << 20)
    if x_resident:
        x_spec = pl.BlockSpec((n_pad, f), lambda i, k: (0, 0))
        x_vmem = 2 * n_pad * f * 2
        x_hbm = n_pad * f * 2
    else:
        x_spec = pl.BlockSpec((tk, f), lambda i, k: (k, 0))
        x_vmem = 2 * tk * f * 2
        x_hbm = grid[0] * n_pad * f * 2

    # Triple-buffer the big streaming Â input (only when the grid is long
    # enough for it to matter).
    a_pipeline = pl.Buffered(3) if grid[0] * grid[1] >= 3 else None
    a_bufs = 3 if a_pipeline is not None else 2
    a_spec = pl.BlockSpec((tm, tk), lambda i, k: (i, k), pipeline_mode=a_pipeline)

    vmem_need = (a_bufs * tm * tk * 2
                 + x_vmem
                 + 2 * f * f * 2 + 2 * f * 4
                 + 2 * tm * f * out_itemsize
                 + tm * f * 4)
    vmem_limit = min(max(vmem_need + (4 << 20), 32 << 20), 48 << 20)

    kernel = functools.partial(_gcn_layer_kernel, activation=activation,
                               valid_cols=valid_cols, tk=tk,
                               x_resident=x_resident)

    flops = 2 * n_pad * n_pad * f + 2 * n_pad * f * f
    transcendentals = n_pad * f if activation == "log_softmax" else 0
    bytes_accessed = (n_pad * n_pad * 2 + x_hbm + f * f * 2 + f * 4
                      + n_pad * f * out_itemsize)

    return pl.pallas_call(
        kernel,
        out_shape=jax.ShapeDtypeStruct((n_pad, f), out_dtype),
        grid_spec=pltpu.PrefetchScalarGridSpec(
            num_scalar_prefetch=0,
            grid=grid,
            in_specs=[
                a_spec,                                       # Â tile stream
                x_spec,                                       # X (resident/tiled)
                pl.BlockSpec((f, f), lambda i, k: (0, 0)),    # W (resident)
                pl.BlockSpec((1, f), lambda i, k: (0, 0)),    # b (resident)
            ],
            out_specs=pl.BlockSpec((tm, f), lambda i, k: (i, 0)),
            scratch_shapes=[pltpu.VMEM((tm, f), jnp.float32)],
        ),
        compiler_params=pltpu.CompilerParams(
            dimension_semantics=("parallel", "arbitrary"),
            vmem_limit_bytes=vmem_limit,
        ),
        cost_estimate=pl.CostEstimate(flops=flops,
                                      transcendentals=transcendentals,
                                      bytes_accessed=bytes_accessed),
    )(adj_bf16, x_bf16, w_bf16, b_f32)


# --------------------------------------------------------------------------
# Full forward pass (matching the PyTorch module)
# --------------------------------------------------------------------------
def graph_of_graphs_forward(x, adj_graph, adj_meta, w1, b1, w2, b2,
                            *, force_tiled=False):
    n, cin = x.shape
    hidden = w1.shape[1]
    cout = w2.shape[1]
    # conv1 is re-applied to conv2's output -> requires in_channels == out_channels.
    assert cin == cout, "GraphOfGraphsModel requires in_channels == out_channels"
    assert max(cin, hidden, cout) <= _LANES

    use_fused = (not force_tiled) and n <= _FUSED_MAX_NODES
    n_pad = _round_up(n, 256 if use_fused else _TILE)

    # Lane-dense, zero-padded operands.  Adjacencies / weights / activations in
    # bf16 (native MXU rate, half the HBM bytes); biases / accumulation in f32.
    adj_g = _pad_to(adj_graph, n_pad, n_pad, jnp.bfloat16)
    adj_m = _pad_to(adj_meta, n_pad, n_pad, jnp.bfloat16)
    x_p = _pad_to(x, n_pad, _LANES, jnp.bfloat16)
    w1_p = _pad_to(w1, _LANES, _LANES, jnp.bfloat16)
    b1_p = _pad_to(b1, 1, _LANES, jnp.float32)
    w2_p = _pad_to(w2, _LANES, _LANES, jnp.bfloat16)
    b2_p = _pad_to(b2, 1, _LANES, jnp.float32)

    if use_fused:
        out = _fused_forward(adj_g, adj_m, x_p, w1_p, b1_p, w2_p, b2_p,
                             valid_cols=cout)
    else:
        h = _gcn_layer(adj_g, x_p, w1_p, b1_p, activation="relu",
                       out_dtype=jnp.bfloat16)
        g = _gcn_layer(adj_g, h, w2_p, b2_p, activation="none",
                       out_dtype=jnp.bfloat16)
        m = _gcn_layer(adj_m, g, w1_p, b1_p, activation="relu",
                       out_dtype=jnp.bfloat16)
        out = _gcn_layer(adj_m, m, w2_p, b2_p, activation="log_softmax",
                         out_dtype=jnp.float32, valid_cols=cout)
    return out[:n, :cout]


def gcn_normalized_adjacency(edge_index, num_nodes):
    """Dense Â = D^{-1/2}(A + I)D^{-1/2}; edge_index[0]=src, [1]=dst (PyG)."""
    src, dst = edge_index[0], edge_index[1]
    a = jnp.zeros((num_nodes, num_nodes), jnp.float32)
    a = a.at[dst, src].add(1.0)             # message flows src -> dst
    a = a + jnp.eye(num_nodes, dtype=jnp.float32)
    deg = jnp.sum(a, axis=1)
    d_inv_sqrt = jnp.where(deg > 0, 1.0 / jnp.sqrt(deg), 0.0)
    return d_inv_sqrt[:, None] * a * d_inv_sqrt[None, :]


# --------------------------------------------------------------------------
# References for correctness checking
# --------------------------------------------------------------------------
def _layer_ref_matched(a, x_bf16, w, b, activation):
    """Mirrors the kernel math: bf16 MXU inputs, f32 accumulation/epilogue."""
    agg = jnp.dot(a.astype(jnp.bfloat16), x_bf16,
                  preferred_element_type=jnp.float32)
    y = jnp.dot(agg.astype(jnp.bfloat16), w.astype(jnp.bfloat16),
                preferred_element_type=jnp.float32) + b
    if activation == "relu":
        y = jnp.maximum(y, 0.0)
    elif activation == "log_softmax":
        y = jax.nn.log_softmax(y, axis=1)
    return y


def _reference_forward_matched(x, adj_g, adj_m, w1, b1, w2, b2):
    xb = x.astype(jnp.bfloat16)
    h = _layer_ref_matched(adj_g, xb, w1, b1, "relu").astype(jnp.bfloat16)
    g = _layer_ref_matched(adj_g, h, w2, b2, "none").astype(jnp.bfloat16)
    m = _layer_ref_matched(adj_m, g, w1, b1, "relu").astype(jnp.bfloat16)
    return _layer_ref_matched(adj_m, m, w2, b2, "log_softmax")


def _reference_forward_f32(x, adj_g, adj_m, w1, b1, w2, b2):
    h = jnp.maximum(adj_g @ (x @ w1) + b1, 0.0)
    g = adj_g @ (h @ w2) + b2
    m = jnp.maximum(adj_m @ (g @ w1) + b1, 0.0)
    m = adj_m @ (m @ w2) + b2
    return jax.nn.log_softmax(m, axis=1)


# --------------------------------------------------------------------------
# Deterministic example construction + checks
# --------------------------------------------------------------------------
def _make_example(key, n, cin, hidden, cout):
    k_x, k_eg, k_em, k_w1, k_b1, k_w2, k_b2 = jax.random.split(key, 7)
    x = jax.random.normal(k_x, (n, cin), jnp.float32)
    ring_src = jnp.arange(n, dtype=jnp.int32)
    ring_dst = (ring_src + 1) % n
    chord_src = jax.random.randint(k_eg, (n,), 0, n, dtype=jnp.int32)
    chord_dst = jax.random.randint(k_em, (n,), 0, n, dtype=jnp.int32)
    ei_graph = jnp.stack([jnp.concatenate([ring_src, chord_src]),
                          jnp.concatenate([ring_dst, chord_dst])], axis=0)
    ei_meta = jnp.stack([jnp.concatenate([ring_dst, chord_dst]),
                         jnp.concatenate([ring_src, chord_src])], axis=0)
    w1 = jax.random.normal(k_w1, (cin, hidden), jnp.float32) * 0.1
    b1 = jax.random.normal(k_b1, (1, hidden), jnp.float32) * 0.01
    w2 = jax.random.normal(k_w2, (hidden, cout), jnp.float32) * 0.1
    b2 = jax.random.normal(k_b2, (1, cout), jnp.float32) * 0.01
    return x, ei_graph, ei_meta, w1, b1, w2, b2


def _run_and_check(key, n, cin, hidden, cout, *, force_tiled):
    x, ei_g, ei_m, w1, b1, w2, b2 = _make_example(key, n, cin, hidden, cout)
    adj_g = gcn_normalized_adjacency(ei_g, n)
    adj_m = gcn_normalized_adjacency(ei_m, n)

    out = graph_of_graphs_forward(x, adj_g, adj_m, w1, b1, w2, b2,
                                  force_tiled=force_tiled)
    out = jax.block_until_ready(out)

    assert out.shape == (n, cout)
    assert bool(jnp.all(jnp.isfinite(out)))

    # Tight check vs a reference mirroring the kernel's bf16/f32 math.
    ref_matched = _reference_forward_matched(x, adj_g, adj_m, w1, b1, w2, b2)
    assert jnp.allclose(out, ref_matched, atol=5e-4, rtol=5e-4), \
        "mismatch vs bf16-matched reference"

    # Loose check vs the pure-f32 reference (original module semantics);
    # tolerance accounts for bf16 activations/adjacency/intermediates.
    ref_f32 = _reference_forward_f32(x, adj_g, adj_m, w1, b1, w2, b2)
    assert jnp.allclose(out, ref_f32, atol=1e-1, rtol=0.0), \
        "mismatch vs f32 reference"
    return out


if __name__ == "__main__":
    key = jax.random.PRNGKey(0)
    k_small, k_large = jax.random.split(key, 2)

    IN_CHANNELS = 8
    HIDDEN_CHANNELS = 32
    OUT_CHANNELS = 8        # must equal IN_CHANNELS (conv1 reuse on conv2 output)

    # Small graph -> fully fused single-kernel path (n_pad = 512).
    _run_and_check(k_small, 300, IN_CHANNELS, HIDDEN_CHANNELS, OUT_CHANNELS,
                   force_tiled=False)

    # Larger graph -> tiled per-layer path (n_pad = 1024, 2x2 grid per layer,
    # VMEM-resident bf16 X, triple-buffered Â).
    _run_and_check(k_large, 700, IN_CHANNELS, HIDDEN_CHANNELS, OUT_CHANNELS,
                   force_tiled=True)

    print("KERNEL_OK")
</pallas_src>

<mosaic_0001>
module attributes {stable_mosaic.version = 11 : i64} {
  func.func @_fused_forward_kernel(%arg0: memref<512x512xbf16, #tpu.memory_space<vmem>>, %arg1: memref<512x512xbf16, #tpu.memory_space<vmem>>, %arg2: memref<512x128xbf16, #tpu.memory_space<vmem>>, %arg3: memref<128x128xbf16, #tpu.memory_space<vmem>>, %arg4: memref<1x128xf32, #tpu.memory_space<vmem>>, %arg5: memref<128x128xbf16, #tpu.memory_space<vmem>>, %arg6: memref<1x128xf32, #tpu.memory_space<vmem>>, %arg7: memref<512x128xf32, #tpu.memory_space<vmem>>) attributes {dimension_semantics = [], scalar_prefetch = 0 : i64, scratch_operands = 0 : i64, tpu.core_type = #tpu.core_type<tc>} {
    %c0 = arith.constant 0 : index
    %c0_0 = arith.constant 0 : index
    %0 = vector.load %arg0[%c0, %c0_0] : memref<512x512xbf16, #tpu.memory_space<vmem>>, vector<512x512xbf16>
    %c0_1 = arith.constant 0 : index
    %c0_2 = arith.constant 0 : index
    %1 = vector.load %arg1[%c0_1, %c0_2] : memref<512x512xbf16, #tpu.memory_space<vmem>>, vector<512x512xbf16>
    %c0_3 = arith.constant 0 : index
    %c0_4 = arith.constant 0 : index
    %2 = vector.load %arg3[%c0_3, %c0_4] : memref<128x128xbf16, #tpu.memory_space<vmem>>, vector<128x128xbf16>
    %c0_5 = arith.constant 0 : index
    %c0_6 = arith.constant 0 : index
    %3 = vector.load %arg5[%c0_5, %c0_6] : memref<128x128xbf16, #tpu.memory_space<vmem>>, vector<128x128xbf16>
    %c0_7 = arith.constant 0 : index
    %c0_8 = arith.constant 0 : index
    %4 = vector.load %arg4[%c0_7, %c0_8] : memref<1x128xf32, #tpu.memory_space<vmem>>, vector<1x128xf32>
    %c0_9 = arith.constant 0 : index
    %c0_10 = arith.constant 0 : index
    %5 = vector.load %arg6[%c0_9, %c0_10] : memref<1x128xf32, #tpu.memory_space<vmem>>, vector<1x128xf32>
    %c0_11 = arith.constant 0 : index
    %c0_12 = arith.constant 0 : index
    %6 = vector.load %arg2[%c0_11, %c0_12] : memref<512x128xbf16, #tpu.memory_space<vmem>>, vector<512x128xbf16>
    %cst = arith.constant dense<0.000000e+00> : vector<512x128xf32>
    %7 = tpu.matmul %0, %6, %cst {dimension_numbers = #tpu.dot_dimension_numbers<[1], [0], [0], [1], [0, 0, 1, 1], [], []>} : vector<512x512xbf16>, vector<512x128xbf16>, vector<512x128xf32> -> vector<512x128xf32>
    %8 = arith.truncf %7 : vector<512x128xf32> to vector<512x128xbf16>
    %cst_13 = arith.constant dense<0.000000e+00> : vector<512x128xf32>
    %9 = tpu.matmul %8, %2, %cst_13 {dimension_numbers = #tpu.dot_dimension_numbers<[1], [0], [0], [1], [0, 0, 1, 1], [], []>} : vector<512x128xbf16>, vector<128x128xbf16>, vector<512x128xf32> -> vector<512x128xf32>
    %10 = vector.broadcast %4 : vector<1x128xf32> to vector<512x128xf32>
    %11 = arith.addf %9, %10 : vector<512x128xf32>
    %cst_14 = arith.constant 0.000000e+00 : f32
    %12 = vector.broadcast %cst_14 : f32 to vector<512x128xf32>
    %13 = arith.maximumf %11, %12 : vector<512x128xf32>
    %14 = arith.truncf %13 : vector<512x128xf32> to vector<512x128xbf16>
    %cst_15 = arith.constant dense<0.000000e+00> : vector<512x128xf32>
    %15 = tpu.matmul %0, %14, %cst_15 {dimension_numbers = #tpu.dot_dimension_numbers<[1], [0], [0], [1], [0, 0, 1, 1], [], []>} : vector<512x512xbf16>, vector<512x128xbf16>, vector<512x128xf32> -> vector<512x128xf32>
    %16 = arith.truncf %15 : vector<512x128xf32> to vector<512x128xbf16>
    %cst_16 = arith.constant dense<0.000000e+00> : vector<512x128xf32>
    %17 = tpu.matmul %16, %3, %cst_16 {dimension_numbers = #tpu.dot_dimension_numbers<[1], [0], [0], [1], [0, 0, 1, 1], [], []>} : vector<512x128xbf16>, vector<128x128xbf16>, vector<512x128xf32> -> vector<512x128xf32>
    %18 = vector.broadcast %5 : vector<1x128xf32> to vector<512x128xf32>
    %19 = arith.addf %17, %18 : vector<512x128xf32>
    %20 = arith.truncf %19 : vector<512x128xf32> to vector<512x128xbf16>
    %cst_17 = arith.constant dense<0.000000e+00> : vector<512x128xf32>
    %21 = tpu.matmul %1, %20, %cst_17 {dimension_numbers = #tpu.dot_dimension_numbers<[1], [0], [0], [1], [0, 0, 1, 1], [], []>} : vector<512x512xbf16>, vector<512x128xbf16>, vector<512x128xf32> -> vector<512x128xf32>
    %22 = arith.truncf %21 : vector<512x128xf32> to vector<512x128xbf16>
    %cst_18 = arith.constant dense<0.000000e+00> : vector<512x128xf32>
    %23 = tpu.matmul %22, %2, %cst_18 {dimension_numbers = #tpu.dot_dimension_numbers<[1], [0], [0], [1], [0, 0, 1, 1], [], []>} : vector<512x128xbf16>, vector<128x128xbf16>, vector<512x128xf32> -> vector<512x128xf32>
    %24 = vector.broadcast %4 : vector<1x128xf32> to vector<512x128xf32>
    %25 = arith.addf %23, %24 : vector<512x128xf32>
    %cst_19 = arith.constant 0.000000e+00 : f32
    %26 = vector.broadcast %cst_19 : f32 to vector<512x128xf32>
    %27 = arith.maximumf %25, %26 : vector<512x128xf32>
    %28 = arith.truncf %27 : vector<512x128xf32> to vector<512x128xbf16>
    %cst_20 = arith.constant dense<0.000000e+00> : vector<512x128xf32>
    %29 = tpu.matmul %1, %28, %cst_20 {dimension_numbers = #tpu.dot_dimension_numbers<[1], [0], [0], [1], [0, 0, 1, 1], [], []>} : vector<512x512xbf16>, vector<512x128xbf16>, vector<512x128xf32> -> vector<512x128xf32>
    %30 = arith.truncf %29 : vector<512x128xf32> to vector<512x128xbf16>
    %cst_21 = arith.constant dense<0.000000e+00> : vector<512x128xf32>
    %31 = tpu.matmul %30, %3, %cst_21 {dimension_numbers = #tpu.dot_dimension_numbers<[1], [0], [0], [1], [0, 0, 1, 1], [], []>} : vector<512x128xbf16>, vector<128x128xbf16>, vector<512x128xf32> -> vector<512x128xf32>
    %32 = vector.broadcast %5 : vector<1x128xf32> to vector<512x128xf32>
    %33 = arith.addf %31, %32 : vector<512x128xf32>
    %34 = tpu.iota {dimensions = array<i32: 1>} : vector<512x128xi32>
    %c8_i32 = arith.constant 8 : i32
    %35 = vector.broadcast %c8_i32 : i32 to vector<512x128xi32>
    %36 = arith.cmpi slt, %34, %35 : vector<512x128xi32>
    %cst_22 = arith.constant -1.000000e+30 : f32
    %37 = vector.broadcast %cst_22 : f32 to vector<512x128xf32>
    %38 = arith.select %36, %33, %37 : vector<512x128xi1>, vector<512x128xf32>
    %cst_23 = arith.constant dense<0xFF800000> : vector<512xf32>
    %39 = vector.multi_reduction <maximumf>, %38, %cst_23 [1] : vector<512x128xf32> to vector<512xf32>
    %40 = vector.shape_cast %39 : vector<512xf32> to vector<512x1xf32>
    %41 = vector.broadcast %40 : vector<512x1xf32> to vector<512x128xf32>
    %42 = arith.subf %38, %41 : vector<512x128xf32>
    %43 = math.exp %42 : vector<512x128xf32>
    %cst_24 = arith.constant dense<0.000000e+00> : vector<512xf32>
    %44 = vector.multi_reduction <add>, %43, %cst_24 [1] : vector<512x128xf32> to vector<512xf32>
    %45 = vector.shape_cast %44 : vector<512xf32> to vector<512x1xf32>
    %46 = math.log %45 : vector<512x1xf32>
    %47 = vector.broadcast %46 : vector<512x1xf32> to vector<512x128xf32>
    %48 = arith.subf %42, %47 : vector<512x128xf32>
    %c0_25 = arith.constant 0 : index
    %c0_26 = arith.constant 0 : index
    %49 = vector.load %arg7[%c0_25, %c0_26] : memref<512x128xf32, #tpu.memory_space<vmem>>, vector<512x128xf32>
    tpu.vector_store %arg7[%c0_25, %c0_26], %48 {strides = array<i32>} : memref<512x128xf32, #tpu.memory_space<vmem>>, vector<512x128xf32>,
    return
  }
}

</mosaic_0001>

<llo_original>
// kernel: tpu_custom_call.1
$region0: #{tpu_custom_call.1}
  #allocation0 [shape = 'u32[]', space=smem, size = 0x4, offset = 0x4, fixed_abs, tag = 'smem constant byte address 0x4 - core index']
  #allocation1 [shape = 'u32[144,128]{1,0:T(1,128)}', space=vmem, size = 0x12000, scoped, tag = 'internal scratch']
  %s0 = inlined_call_operand.hbm [shape: bf16[512,512], index: 0, kind: input, shape index: {}]
  %s1 = inlined_call_operand.hbm [shape: bf16[512,512], index: 1, kind: input, shape index: {}]
  %s2 = inlined_call_operand.hbm [shape: bf16[512,128], index: 2, kind: input, shape index: {}]
  %s3 = inlined_call_operand.hbm [shape: bf16[128,128], index: 3, kind: input, shape index: {}]
  %s4 = inlined_call_operand.vmem [shape: f32[1,128], index: 4, kind: input, shape index: {}]
  %s5 = inlined_call_operand.hbm [shape: bf16[128,128], index: 5, kind: input, shape index: {}]
  %s6 = inlined_call_operand.vmem [shape: f32[1,128], index: 6, kind: input, shape index: {}]
  %s7 = inlined_call_operand.hbm [shape: f32[512,128], index: 7, kind: output, shape index: {}]
  %s8 = sld [smem:[#allocation0]]
  $region58: #{tpu_custom_call.1} parent=0
    _
  %s10 = ssub.s32 1, %s8
  %s11 = scalar_select 0, %s10, %s8
  $region1: #{tpu_custom_call.1} parent=0
    #allocation2 [shape = 'u8[524288]{0}', space=vmem, size = 0x80000, scoped, tag = 'input window, operand 0, single buffered']
    #allocation3 [shape = 's32[1]{0}', space=sflag, size = 0x4, scoped, tag = 'scoped memory for tpu_custom_call.1']
    #allocation4 [shape = 's32[1]{0}', space=sflag, size = 0x4, scoped, tag = 'scoped memory for tpu_custom_call.1']
    #allocation5 [shape = 'u8[524288]{0}', space=vmem, size = 0x80000, scoped, tag = 'input window, operand 1, single buffered']
    #allocation6 [shape = 's32[1]{0}', space=sflag, size = 0x4, scoped, tag = 'scoped memory for tpu_custom_call.1']
    #allocation7 [shape = 'u8[131072]{0}', space=vmem, size = 0x20000, scoped, tag = 'input window, operand 2, single buffered']
    #allocation8 [shape = 'u8[32768]{0}', space=vmem, size = 0x8000, scoped, tag = 'input window, operand 3, single buffered']
    #allocation9 [shape = 's32[1]{0}', space=sflag, size = 0x4, scoped, tag = 'scoped memory for tpu_custom_call.1']
    #allocation10 [shape = 'u8[32768]{0}', space=vmem, size = 0x8000, scoped, tag = 'input window, operand 5, single buffered']
    #allocation11 [shape = 'u8[262144]{0}', space=vmem, size = 0x40000, scoped, tag = 'output window, operand 0, single buffered']
    %12 = vsyncpa [#allocation3], 0
    %13 = vsyncpa [#allocation6], 0
    %14 = vsyncpa [#allocation9], 0
    %15 = vsyncpa [#allocation4], 0
    // Predicated region
    $region2: #{tpu_custom_call.1} parent=1 // pred_check
      _
    $region3: #{tpu_custom_call.1} parent=1 // pred_check_branch
      %17 = sbr.rel (0) target = $region5
    $region4: #{tpu_custom_call.1} parent=1 // pred_region
      %s19 = ssub.s32 16384, 16384
      %20 = vsyncadd [#allocation3], %s19
      %s21 = sshll.u32 [#allocation2], 4
      %s22 = int_to_ptr.vmem [resolvable:$true] %s21
      %27 = dma.hbm_to_vmem [thread:$0]  %s0, 16384, %s22, [#allocation3], 256, 256, 16
    $region5: #{tpu_custom_call.1} parent=1 // pred_fallthru
      _
    // Predicated region
    $region6: #{tpu_custom_call.1} parent=1 // pred_check
      _
    $region7: #{tpu_custom_call.1} parent=1 // pred_check_branch
      %29 = sbr.rel (0) target = $region9
    $region8: #{tpu_custom_call.1} parent=1 // pred_region
      %s31 = ssub.s32 16384, 16384
      %32 = vsyncadd [#allocation6], %s31
      %s33 = sshll.u32 [#allocation5], 4
      %s34 = int_to_ptr.vmem [resolvable:$true] %s33
      %39 = dma.hbm_to_vmem [thread:$0]  %s1, 16384, %s34, [#allocation6], 256, 256, 16
    $region9: #{tpu_custom_call.1} parent=1 // pred_fallthru
      _
    // Predicated region
    $region10: #{tpu_custom_call.1} parent=1 // pred_check
      _
    $region11: #{tpu_custom_call.1} parent=1 // pred_check_branch
      %41 = sbr.rel (0) target = $region13
    $region12: #{tpu_custom_call.1} parent=1 // pred_region
      %s43 = ssub.s32 4096, 4096
      %44 = vsyncadd [#allocation6], %s43
      %s45 = sshll.u32 [#allocation7], 4
      %s46 = int_to_ptr.vmem [resolvable:$true] %s45
      %51 = dma.hbm_to_vmem [thread:$0]  %s2, 4096, %s46, [#allocation6], 64, 64, 4
    $region13: #{tpu_custom_call.1} parent=1 // pred_fallthru
      _
    // Predicated region
    $region14: #{tpu_custom_call.1} parent=1 // pred_check
      _
    $region15: #{tpu_custom_call.1} parent=1 // pred_check_branch
      %53 = sbr.rel (0) target = $region17
    $region16: #{tpu_custom_call.1} parent=1 // pred_region
      %s55 = ssub.s32 1024, 1024
      %56 = vsyncadd [#allocation9], %s55
      %s57 = sshll.u32 [#allocation8], 4
      %s58 = int_to_ptr.vmem [resolvable:$true] %s57
      %63 = dma.hbm_to_vmem [thread:$0]  %s3, 1024, %s58, [#allocation9], 64, 64, 4
    $region17: #{tpu_custom_call.1} parent=1 // pred_fallthru
      _
    // Predicated region
    $region18: #{tpu_custom_call.1} parent=1 // pred_check
      _
    $region19: #{tpu_custom_call.1} parent=1 // pred_check_branch
      %65 = sbr.rel (0) target = $region21
    $region20: #{tpu_custom_call.1} parent=1 // pred_region
      _
    $region21: #{tpu_custom_call.1} parent=1 // pred_fallthru
      _
    // Predicated region
    $region22: #{tpu_custom_call.1} parent=1 // pred_check
      _
    $region23: #{tpu_custom_call.1} parent=1 // pred_check_branch
      %67 = sbr.rel (0) target = $region25
    $region24: #{tpu_custom_call.1} parent=1 // pred_region
      %s69 = ssub.s32 1024, 1024
      %70 = vsyncadd [#allocation9], %s69
      %s71 = sshll.u32 [#allocation10], 4
      %s72 = int_to_ptr.vmem [resolvable:$true] %s71
      %77 = dma.hbm_to_vmem [thread:$0]  %s5, 1024, %s72, [#allocation9], 64, 64, 4
    $region25: #{tpu_custom_call.1} parent=1 // pred_fallthru
      _
    // Predicated region
    $region26: #{tpu_custom_call.1} parent=1 // pred_check
      _
    $region27: #{tpu_custom_call.1} parent=1 // pred_check_branch
      %79 = sbr.rel (0) target = $region29
    $region28: #{tpu_custom_call.1} parent=1 // pred_region
      _
    $region29: #{tpu_custom_call.1} parent=1 // pred_fallthru
      _
    // Predicated region
    $region30: #{tpu_custom_call.1} parent=1 // pred_check
      _
    $region31: #{tpu_custom_call.1} parent=1 // pred_check_branch
      %81 = sbr.rel (0) target = $region33
    $region32: #{tpu_custom_call.1} parent=1 // pred_region
      %82 = dma.done [#allocation3], 16384
    $region33: #{tpu_custom_call.1} parent=1 // pred_fallthru
      _
    // Predicated region
    $region34: #{tpu_custom_call.1} parent=1 // pred_check
      _
    $region35: #{tpu_custom_call.1} parent=1 // pred_check_branch
      %84 = sbr.rel (0) target = $region37
    $region36: #{tpu_custom_call.1} parent=1 // pred_region
      %85 = dma.done [#allocation6], 16384
    $region37: #{tpu_custom_call.1} parent=1 // pred_fallthru
      _
    // Predicated region
    $region38: #{tpu_custom_call.1} parent=1 // pred_check
      _
    $region39: #{tpu_custom_call.1} parent=1 // pred_check_branch
      %87 = sbr.rel (0) target = $region41
    $region40: #{tpu_custom_call.1} parent=1 // pred_region
      %88 = dma.done [#allocation6], 4096
    $region41: #{tpu_custom_call.1} parent=1 // pred_fallthru
      _
    // Predicated region
    $region42: #{tpu_custom_call.1} parent=1 // pred_check
      _
    $region43: #{tpu_custom_call.1} parent=1 // pred_check_branch
      %90 = sbr.rel (0) target = $region45
    $region44: #{tpu_custom_call.1} parent=1 // pred_region
      %91 = dma.done [#allocation9], 1024
    $region45: #{tpu_custom_call.1} parent=1 // pred_fallthru
      _
    // Predicated region
    $region46: #{tpu_custom_call.1} parent=1 // pred_check
      _
    $region47: #{tpu_custom_call.1} parent=1 // pred_check_branch
      %93 = sbr.rel (0) target = $region49
    $region48: #{tpu_custom_call.1} parent=1 // pred_region
      %94 = dma.done [#allocation9], 1024
    $region49: #{tpu_custom_call.1} parent=1 // pred_fallthru
      _
    %v96 = vld [vmem:[#allocation2] sm:$0xff]
    %v97 = vld [vmem:[#allocation2 + $0x8] sm:$0xff]
    %v98 = vld [vmem:[#allocation2 + $0x10] sm:$0xff]
    %v99 = vld [vmem:[#allocation2 + $0x18] sm:$0xff]
    %v100 = vld [vmem:[#allocation2 + $0x20] sm:$0xff]
    %v101 = vld [vmem:[#allocation2 + $0x28] sm:$0xff]
    %v102 = vld [vmem:[#allocation2 + $0x30] sm:$0xff]
    %v103 = vld [vmem:[#allocation2 + $0x38] sm:$0xff]
    %v104 = vld [vmem:[#allocation2 + $0x40] sm:$0xff]
    %v105 = vld [vmem:[#allocation2 + $0x48] sm:$0xff]
    %v106 = vld [vmem:[#allocation2 + $0x50] sm:$0xff]
    %v107 = vld [vmem:[#allocation2 + $0x58] sm:$0xff]
    %v108 = vld [vmem:[#allocation2 + $0x60] sm:$0xff]
    %v109 = vld [vmem:[#allocation2 + $0x68] sm:$0xff]
    %v110 = vld [vmem:[#allocation2 + $0x70] sm:$0xff]
    %v111 = vld [vmem:[#allocation2 + $0x78] sm:$0xff]
    %v112 = vld [vmem:[#allocation2 + $0x80] sm:$0xff]
    %v113 = vld [vmem:[#allocation2 + $0x88] sm:$0xff]
    %v114 = vld [vmem:[#allocation2 + $0x90] sm:$0xff]
    %v115 = vld [vmem:[#allocation2 + $0x98] sm:$0xff]
    %v116 = vld [vmem:[#allocation2 + $0xa0] sm:$0xff]
    %v117 = vld [vmem:[#allocation2 + $0xa8] sm:$0xff]
    %v118 = vld [vmem:[#allocation2 + $0xb0] sm:$0xff]
    %v119 = vld [vmem:[#allocation2 + $0xb8] sm:$0xff]
    %v120 = vld [vmem:[#allocation2 + $0xc0] sm:$0xff]
    %v121 = vld [vmem:[#allocation2 + $0xc8] sm:$0xff]
    %v122 = vld [vmem:[#allocation2 + $0xd0] sm:$0xff]
    %v123 = vld [vmem:[#allocation2 + $0xd8] sm:$0xff]
    %v124 = vld [vmem:[#allocation2 + $0xe0] sm:$0xff]
    %v125 = vld [vmem:[#allocation2 + $0xe8] sm:$0xff]
    %v126 = vld [vmem:[#allocation2 + $0xf0] sm:$0xff]
    %v127 = vld [vmem:[#allocation2 + $0xf8] sm:$0xff]
    %v128 = vld [vmem:[#allocation2 + $0x100] sm:$0xff]
    %v129 = vld [vmem:[#allocation2 + $0x108] sm:$0xff]
    %v130 = vld [vmem:[#allocation2 + $0x110] sm:$0xff]
    %v131 = vld [vmem:[#allocation2 + $0x118] sm:$0xff]
    %v132 = vld [vmem:[#allocation2 + $0x120] sm:$0xff]
    %v133 = vld [vmem:[#allocation2 + $0x128] sm:$0xff]
    %v134 = vld [vmem:[#allocation2 + $0x130] sm:$0xff]
    %v135 = vld [vmem:[#allocation2 + $0x138] sm:$0xff]
    %v136 = vld [vmem:[#allocation2 + $0x140] sm:$0xff]
    %v137 = vld [vmem:[#allocation2 + $0x148] sm:$0xff]
    %v138 = vld [vmem:[#allocation2 + $0x150] sm:$0xff]
    %v139 = vld [vmem:[#allocation2 + $0x158] sm:$0xff]
    %v140 = vld [vmem:[#allocation2 + $0x160] sm:$0xff]
    %v141 = vld [vmem:[#allocation2 + $0x168] sm:$0xff]
    %v142 = vld [vmem:[#allocation2 + $0x170] sm:$0xff]
    %v143 = vld [vmem:[#allocation2 + $0x178] sm:$0xff]
    %v144 = vld [vmem:[#allocation2 + $0x180] sm:$0xff]
    %v145 = vld [vmem:[#allocation2 + $0x188] sm:$0xff]
    %v146 = vld [vmem:[#allocation2 + $0x190] sm:$0xff]
    %v147 = vld [vmem:[#allocation2 + $0x198] sm:$0xff]
    %v148 = vld [vmem:[#allocation2 + $0x1a0] sm:$0xff]
    %v149 = vld [vmem:[#allocation2 + $0x1a8] sm:$0xff]
    %v150 = vld [vmem:[#allocation2 + $0x1b0] sm:$0xff]
    %v151 = vld [vmem:[#allocation2 + $0x1b8] sm:$0xff]
    %v152 = vld [vmem:[#allocation2 + $0x1c0] sm:$0xff]
    %v153 = vld [vmem:[#allocation2 + $0x1c8] sm:$0xff]
    %v154 = vld [vmem:[#allocation2 + $0x1d0] sm:$0xff]
    %v155 = vld [vmem:[#allocation2 + $0x1d8] sm:$0xff]
    %v156 = vld [vmem:[#allocation2 + $0x1e0] sm:$0xff]
    %v157 = vld [vmem:[#allocation2 + $0x1e8] sm:$0xff]
    %v158 = vld [vmem:[#allocation2 + $0x1f0] sm:$0xff]
    %v159 = vld [vmem:[#allocation2 + $0x1f8] sm:$0xff]
    %v160 = vld [vmem:[#allocation2 + $0x200] sm:$0xff]
    %v161 = vld [vmem:[#allocation2 + $0x208] sm:$0xff]
    %v162 = vld [vmem:[#allocation2 + $0x210] sm:$0xff]
    %v163 = vld [vmem:[#allocation2 + $0x218] sm:$0xff]
    %v164 = vld [vmem:[#allocation2 + $0x220] sm:$0xff]
    %v165 = vld [vmem:[#allocation2 + $0x228] sm:$0xff]
    %v166 = vld [vmem:[#allocation2 + $0x230] sm:$0xff]
    %v167 = vld [vmem:[#allocation2 + $0x238] sm:$0xff]
    %v168 = vld [vmem:[#allocation2 + $0x240] sm:$0xff]
    %v169 = vld [vmem:[#allocation2 + $0x248] sm:$0xff]
    %v170 = vld [vmem:[#allocation2 + $0x250] sm:$0xff]
    %v171 = vld [vmem:[#allocation2 + $0x258] sm:$0xff]
    %v172 = vld [vmem:[#allocation2 + $0x260] sm:$0xff]
    %v173 = vld [vmem:[#allocation2 + $0x268] sm:$0xff]
    %v174 = vld [vmem:[#allocation2 + $0x270] sm:$0xff]
    %v175 = vld [vmem:[#allocation2 + $0x278] sm:$0xff]
    %v176 = vld [vmem:[#allocation2 + $0x280] sm:$0xff]
    %v177 = vld [vmem:[#allocation2 + $0x288] sm:$0xff]
    %v178 = vld [vmem:[#allocation2 + $0x290] sm:$0xff]
    %v179 = vld [vmem:[#allocation2 + $0x298] sm:$0xff]
    %v180 = vld [vmem:[#allocation2 + $0x2a0] sm:$0xff]
    %v181 = vld [vmem:[#allocation2 + $0x2a8] sm:$0xff]
    %v182 = vld [vmem:[#allocation2 + $0x2b0] sm:$0xff]
    %v183 = vld [vmem:[#allocation2 + $0x2b8] sm:$0xff]
    %v184 = vld [vmem:[#allocation2 + $0x2c0] sm:$0xff]
    %v185 = vld [vmem:[#allocation2 + $0x2c8] sm:$0xff]
    %v186 = vld [vmem:[#allocation2 + $0x2d0] sm:$0xff]
    %v187 = vld [vmem:[#allocation2 + $0x2d8] sm:$0xff]
    %v188 = vld [vmem:[#allocation2 + $0x2e0] sm:$0xff]
    %v189 = vld [vmem:[#allocation2 + $0x2e8] sm:$0xff]
    %v190 = vld [vmem:[#allocation2 + $0x2f0] sm:$0xff]
    %v191 = vld [vmem:[#allocation2 + $0x2f8] sm:$0xff]
    %v192 = vld [vmem:[#allocation2 + $0x300] sm:$0xff]
    %v193 = vld [vmem:[#allocation2 + $0x308] sm:$0xff]
    %v194 = vld [vmem:[#allocation2 + $0x310] sm:$0xff]
    %v195 = vld [vmem:[#allocation2 + $0x318] sm:$0xff]
    %v196 = vld [vmem:[#allocation2 + $0x320] sm:$0xff]
    %v197 = vld [vmem:[#allocation2 + $0x328] sm:$0xff]
    %v198 = vld [vmem:[#allocation2 + $0x330] sm:$0xff]
    %v199 = vld [vmem:[#allocation2 + $0x338] sm:$0xff]
    %v200 = vld [vmem:[#allocation2 + $0x340] sm:$0xff]
    %v201 = vld [vmem:[#allocation2 + $0x348] sm:$0xff]
    %v202 = vld [vmem:[#allocation2 + $0x350] sm:$0xff]
    %v203 = vld [vmem:[#allocation2 + $0x358] sm:$0xff]
    %v204 = vld [vmem:[#allocation2 + $0x360] sm:$0xff]
    %v205 = vld [vmem:[#allocation2 + $0x368] sm:$0xff]
    %v206 = vld [vmem:[#allocation2 + $0x370] sm:$0xff]
    %v207 = vld [vmem:[#allocation2 + $0x378] sm:$0xff]
    %v208 = vld [vmem:[#allocation2 + $0x380] sm:$0xff]
    %v209 = vld [vmem:[#allocation2 + $0x388] sm:$0xff]
    %v210 = vld [vmem:[#allocation2 + $0x390] sm:$0xff]
    %v211 = vld [vmem:[#allocation2 + $0x398] sm:$0xff]
    %v212 = vld [vmem:[#allocation2 + $0x3a0] sm:$0xff]
    %v213 = vld [vmem:[#allocation2 + $0x3a8] sm:$0xff]
    %v214 = vld [vmem:[#allocation2 + $0x3b0] sm:$0xff]
    %v215 = vld [vmem:[#allocation2 + $0x3b8] sm:$0xff]
    %v216 = vld [vmem:[#allocation2 + $0x3c0] sm:$0xff]
    %v217 = vld [vmem:[#allocation2 + $0x3c8] sm:$0xff]
    %v218 = vld [vmem:[#allocation2 + $0x3d0] sm:$0xff]
    %v219 = vld [vmem:[#allocation2 + $0x3d8] sm:$0xff]
    %v220 = vld [vmem:[#allocation2 + $0x3e0] sm:$0xff]
    %v221 = vld [vmem:[#allocation2 + $0x3e8] sm:$0xff]
    %v222 = vld [vmem:[#allocation2 + $0x3f0] sm:$0xff]
    %v223 = vld [vmem:[#allocation2 + $0x3f8] sm:$0xff]
    %v224 = vld [vmem:[#allocation5] sm:$0xff]
    %v225 = vld [vmem:[#allocation5 + $0x8] sm:$0xff]
    %v226 = vld [vmem:[#allocation5 + $0x10] sm:$0xff]
    %v227 = vld [vmem:[#allocation5 + $0x18] sm:$0xff]
    %v228 = vld [vmem:[#allocation5 + $0x20] sm:$0xff]
    %v229 = vld [vmem:[#allocation5 + $0x28] sm:$0xff]
    %v230 = vld [vmem:[#allocation5 + $0x30] sm:$0xff]
    %v231 = vld [vmem:[#allocation5 + $0x38] sm:$0xff]
    %v232 = vld [vmem:[#allocation5 + $0x40] sm:$0xff]
    %v233 = vld [vmem:[#allocation5 + $0x48] sm:$0xff]
    %v234 = vld [vmem:[#allocation5 + $0x50] sm:$0xff]
    %v235 = vld [vmem:[#allocation5 + $0x58] sm:$0xff]
    %v236 = vld [vmem:[#allocation5 + $0x60] sm:$0xff]
    %v237 = vld [vmem:[#allocation5 + $0x68] sm:$0xff]
    %v238 = vld [vmem:[#allocation5 + $0x70] sm:$0xff]
    %v239 = vld [vmem:[#allocation5 + $0x78] sm:$0xff]
    %v240 = vld [vmem:[#allocation5 + $0x80] sm:$0xff]
    %v241 = vld [vmem:[#allocation5 + $0x88] sm:$0xff]
    %v242 = vld [vmem:[#allocation5 + $0x90] sm:$0xff]
    %v243 = vld [vmem:[#allocation5 + $0x98] sm:$0xff]
    %v244 = vld [vmem:[#allocation5 + $0xa0] sm:$0xff]
    %v245 = vld [vmem:[#allocation5 + $0xa8] sm:$0xff]
    %v246 = vld [vmem:[#allocation5 + $0xb0] sm:$0xff]
    %v247 = vld [vmem:[#allocation5 + $0xb8] sm:$0xff]
    %v248 = vld [vmem:[#allocation5 + $0xc0] sm:$0xff]
    %v249 = vld [vmem:[#allocation5 + $0xc8] sm:$0xff]
    %v250 = vld [vmem:[#allocation5 + $0xd0] sm:$0xff]
    %v251 = vld [vmem:[#allocation5 + $0xd8] sm:$0xff]
    %v252 = vld [vmem:[#allocation5 + $0xe0] sm:$0xff]
    %v253 = vld [vmem:[#allocation5 + $0xe8] sm:$0xff]
    %v254 = vld [vmem:[#allocation5 + $0xf0] sm:$0xff]
    %v255 = vld [vmem:[#allocation5 + $0xf8] sm:$0xff]
    %v256 = vld [vmem:[#allocation5 + $0x100] sm:$0xff]
    %v257 = vld [vmem:[#allocation5 + $0x108] sm:$0xff]
    %v258 = vld [vmem:[#allocation5 + $0x110] sm:$0xff]
    %v259 = vld [vmem:[#allocation5 + $0x118] sm:$0xff]
    %v260 = vld [vmem:[#allocation5 + $0x120] sm:$0xff]
    %v261 = vld [vmem:[#allocation5 + $0x128] sm:$0xff]
    %v262 = vld [vmem:[#allocation5 + $0x130] sm:$0xff]
    %v263 = vld [vmem:[#allocation5 + $0x138] sm:$0xff]
    %v264 = vld [vmem:[#allocation5 + $0x140] sm:$0xff]
    %v265 = vld [vmem:[#allocation5 + $0x148] sm:$0xff]
    %v266 = vld [vmem:[#allocation5 + $0x150] sm:$0xff]
    %v267 = vld [vmem:[#allocation5 + $0x158] sm:$0xff]
    %v268 = vld [vmem:[#allocation5 + $0x160] sm:$0xff]
    %v269 = vld [vmem:[#allocation5 + $0x168] sm:$0xff]
    %v270 = vld [vmem:[#allocation5 + $0x170] sm:$0xff]
    %v271 = vld [vmem:[#allocation5 + $0x178] sm:$0xff]
    %v272 = vld [vmem:[#allocation5 + $0x180] sm:$0xff]
    %v273 = vld [vmem:[#allocation5 + $0x188] sm:$0xff]
    %v274 = vld [vmem:[#allocation5 + $0x190] sm:$0xff]
    %v275 = vld [vmem:[#allocation5 + $0x198] sm:$0xff]
    %v276 = vld [vmem:[#allocation5 + $0x1a0] sm:$0xff]
    %v277 = vld [vmem:[#allocation5 + $0x1a8] sm:$0xff]
    %v278 = vld [vmem:[#allocation5 + $0x1b0] sm:$0xff]
    %v279 = vld [vmem:[#allocation5 + $0x1b8] sm:$0xff]
    %v280 = vld [vmem:[#allocation5 + $0x1c0] sm:$0xff]
    %v281 = vld [vmem:[#allocation5 + $0x1c8] sm:$0xff]
    %v282 = vld [vmem:[#allocation5 + $0x1d0] sm:$0xff]
    %v283 = vld [vmem:[#allocation5 + $0x1d8] sm:$0xff]
    %v284 = vld [vmem:[#allocation5 + $0x1e0] sm:$0xff]
    %v285 = vld [vmem:[#allocation5 + $0x1e8] sm:$0xff]
    %v286 = vld [vmem:[#allocation5 + $0x1f0] sm:$0xff]
    %v287 = vld [vmem:[#allocation5 + $0x1f8] sm:$0xff]
    %v288 = vld [vmem:[#allocation5 + $0x200] sm:$0xff]
    %v289 = vld [vmem:[#allocation5 + $0x208] sm:$0xff]
    %v290 = vld [vmem:[#allocation5 + $0x210] sm:$0xff]
    %v291 = vld [vmem:[#allocation5 + $0x218] sm:$0xff]
    %v292 = vld [vmem:[#allocation5 + $0x220] sm:$0xff]
    %v293 = vld [vmem:[#allocation5 + $0x228] sm:$0xff]
    %v294 = vld [vmem:[#allocation5 + $0x230] sm:$0xff]
    %v295 = vld [vmem:[#allocation5 + $0x238] sm:$0xff]
    %v296 = vld [vmem:[#allocation5 + $0x240] sm:$0xff]
    %v297 = vld [vmem:[#allocation5 + $0x248] sm:$0xff]
    %v298 = vld [vmem:[#allocation5 + $0x250] sm:$0xff]
    %v299 = vld [vmem:[#allocation5 + $0x258] sm:$0xff]
    %v300 = vld [vmem:[#allocation5 + $0x260] sm:$0xff]
    %v301 = vld [vmem:[#allocation5 + $0x268] sm:$0xff]
    %v302 = vld [vmem:[#allocation5 + $0x270] sm:$0xff]
    %v303 = vld [vmem:[#allocation5 + $0x278] sm:$0xff]
    %v304 = vld [vmem:[#allocation5 + $0x280] sm:$0xff]
    %v305 = vld [vmem:[#allocation5 + $0x288] sm:$0xff]
    %v306 = vld [vmem:[#allocation5 + $0x290] sm:$0xff]
    %v307 = vld [vmem:[#allocation5 + $0x298] sm:$0xff]
    %v308 = vld [vmem:[#allocation5 + $0x2a0] sm:$0xff]
    %v309 = vld [vmem:[#allocation5 + $0x2a8] sm:$0xff]
    %v310 = vld [vmem:[#allocation5 + $0x2b0] sm:$0xff]
    %v311 = vld [vmem:[#allocation5 + $0x2b8] sm:$0xff]
    %v312 = vld [vmem:[#allocation5 + $0x2c0] sm:$0xff]
    %v313 = vld [vmem:[#allocation5 + $0x2c8] sm:$0xff]
    %v314 = vld [vmem:[#allocation5 + $0x2d0] sm:$0xff]
    %v315 = vld [vmem:[#allocation5 + $0x2d8] sm:$0xff]
    %v316 = vld [vmem:[#allocation5 + $0x2e0] sm:$0xff]
    %v317 = vld [vmem:[#allocation5 + $0x2e8] sm:$0xff]
    %v318 = vld [vmem:[#allocation5 + $0x2f0] sm:$0xff]
    %v319 = vld [vmem:[#allocation5 + $0x2f8] sm:$0xff]
    %v320 = vld [vmem:[#allocation5 + $0x300] sm:$0xff]
    %v321 = vld [vmem:[#allocation5 + $0x308] sm:$0xff]
    %v322 = vld [vmem:[#allocation5 + $0x310] sm:$0xff]
    %v323 = vld [vmem:[#allocation5 + $0x318] sm:$0xff]
    %v324 = vld [vmem:[#allocation5 + $0x320] sm:$0xff]
    %v325 = vld [vmem:[#allocation5 + $0x328] sm:$0xff]
    %v326 = vld [vmem:[#allocation5 + $0x330] sm:$0xff]
    %v327 = vld [vmem:[#allocation5 + $0x338] sm:$0xff]
    %v328 = vld [vmem:[#allocation5 + $0x340] sm:$0xff]
    %v329 = vld [vmem:[#allocation5 + $0x348] sm:$0xff]
    %v330 = vld [vmem:[#allocation5 + $0x350] sm:$0xff]
    %v331 = vld [vmem:[#allocation5 + $0x358] sm:$0xff]
    %v332 = vld [vmem:[#allocation5 + $0x360] sm:$0xff]
    %v333 = vld [vmem:[#allocation5 + $0x368] sm:$0xff]
    %v334 = vld [vmem:[#allocation5 + $0x370] sm:$0xff]
    %v335 = vld [vmem:[#allocation5 + $0x378] sm:$0xff]
    %v336 = vld [vmem:[#allocation5 + $0x380] sm:$0xff]
    %v337 = vld [vmem:[#allocation5 + $0x388] sm:$0xff]
    %v338 = vld [vmem:[#allocation5 + $0x390] sm:$0xff]
    %v339 = vld [vmem:[#allocation5 + $0x398] sm:$0xff]
    %v340 = vld [vmem:[#allocation5 + $0x3a0] sm:$0xff]
    %v341 = vld [vmem:[#allocation5 + $0x3a8] sm:$0xff]
    %v342 = vld [vmem:[#allocation5 + $0x3b0] sm:$0xff]
    %v343 = vld [vmem:[#allocation5 + $0x3b8] sm:$0xff]
    %v344 = vld [vmem:[#allocation5 + $0x3c0] sm:$0xff]
    %v345 = vld [vmem:[#allocation5 + $0x3c8] sm:$0xff]
    %v346 = vld [vmem:[#allocation5 + $0x3d0] sm:$0xff]
    %v347 = vld [vmem:[#allocation5 + $0x3d8] sm:$0xff]
    %v348 = vld [vmem:[#allocation5 + $0x3e0] sm:$0xff]
    %v349 = vld [vmem:[#allocation5 + $0x3e8] sm:$0xff]
    %v350 = vld [vmem:[#allocation5 + $0x3f0] sm:$0xff]
    %v351 = vld [vmem:[#allocation5 + $0x3f8] sm:$0xff]
    %v352 = vld [vmem:[#allocation8] sm:$0xf]
    %v353 = vld [vmem:[#allocation8 + $0x4] sm:$0xf]
    %v354 = vld [vmem:[#allocation8 + $0x8] sm:$0xf]
    %v355 = vld [vmem:[#allocation8 + $0xc] sm:$0xf]
    %v356 = vld [vmem:[#allocation8 + $0x10] sm:$0xf]
    %v357 = vld [vmem:[#allocation8 + $0x14] sm:$0xf]
    %v358 = vld [vmem:[#allocation8 + $0x18] sm:$0xf]
    %v359 = vld [vmem:[#allocation8 + $0x1c] sm:$0xf]
    %v360 = vld [vmem:[#allocation8 + $0x20] sm:$0xf]
    %v361 = vld [vmem:[#allocation8 + $0x24] sm:$0xf]
    %v362 = vld [vmem:[#allocation8 + $0x28] sm:$0xf]
    %v363 = vld [vmem:[#allocation8 + $0x2c] sm:$0xf]
    %v364 = vld [vmem:[#allocation8 + $0x30] sm:$0xf]
    %v365 = vld [vmem:[#allocation8 + $0x34] sm:$0xf]
    %v366 = vld [vmem:[#allocation8 + $0x38] sm:$0xf]
    %v367 = vld [vmem:[#allocation8 + $0x3c] sm:$0xf]
    %v368 = vld [vmem:[#allocation10] sm:$0xf]
    %v369 = vld [vmem:[#allocation10 + $0x4] sm:$0xf]
    %v370 = vld [vmem:[#allocation10 + $0x8] sm:$0xf]
    %v371 = vld [vmem:[#allocation10 + $0xc] sm:$0xf]
    %v372 = vld [vmem:[#allocation10 + $0x10] sm:$0xf]
    %v373 = vld [vmem:[#allocation10 + $0x14] sm:$0xf]
    %v374 = vld [vmem:[#allocation10 + $0x18] sm:$0xf]
    %v375 = vld [vmem:[#allocation10 + $0x1c] sm:$0xf]
    %v376 = vld [vmem:[#allocation10 + $0x20] sm:$0xf]
    %v377 = vld [vmem:[#allocation10 + $0x24] sm:$0xf]
    %v378 = vld [vmem:[#allocation10 + $0x28] sm:$0xf]
    %v379 = vld [vmem:[#allocation10 + $0x2c] sm:$0xf]
    %v380 = vld [vmem:[#allocation10 + $0x30] sm:$0xf]
    %v381 = vld [vmem:[#allocation10 + $0x34] sm:$0xf]
    %v382 = vld [vmem:[#allocation10 + $0x38] sm:$0xf]
    %v383 = vld [vmem:[#allocation10 + $0x3c] sm:$0xf]
    %v384 = vld [vmem:[%s4] sm:$0x1]
    %v385 = vld [vmem:[%s6] sm:$0x1]
    %v386 = vld [vmem:[#allocation7] sm:$0xf]
    %v387 = vld [vmem:[#allocation7 + $0x4] sm:$0xf]
    %v388 = vld [vmem:[#allocation7 + $0x8] sm:$0xf]
    %v389 = vld [vmem:[#allocation7 + $0xc] sm:$0xf]
    %v390 = vld [vmem:[#allocation7 + $0x10] sm:$0xf]
    %v391 = vld [vmem:[#allocation7 + $0x14] sm:$0xf]
    %v392 = vld [vmem:[#allocation7 + $0x18] sm:$0xf]
    %v393 = vld [vmem:[#allocation7 + $0x1c] sm:$0xf]
    %v394 = vld [vmem:[#allocation7 + $0x20] sm:$0xf]
    %v395 = vld [vmem:[#allocation7 + $0x24] sm:$0xf]
    %v396 = vld [vmem:[#allocation7 + $0x28] sm:$0xf]
    %v397 = vld [vmem:[#allocation7 + $0x2c] sm:$0xf]
    %v398 = vld [vmem:[#allocation7 + $0x30] sm:$0xf]
    %v399 = vld [vmem:[#allocation7 + $0x34] sm:$0xf]
    %v400 = vld [vmem:[#allocation7 + $0x38] sm:$0xf]
    %v401 = vld [vmem:[#allocation7 + $0x3c] sm:$0xf]
    %v402 = vld [vmem:[#allocation7 + $0x40] sm:$0xf]
    %v403 = vld [vmem:[#allocation7 + $0x44] sm:$0xf]
    %v404 = vld [vmem:[#allocation7 + $0x48] sm:$0xf]
    %v405 = vld [vmem:[#allocation7 + $0x4c] sm:$0xf]
    %v406 = vld [vmem:[#allocation7 + $0x50] sm:$0xf]
    %v407 = vld [vmem:[#allocation7 + $0x54] sm:$0xf]
    %v408 = vld [vmem:[#allocation7 + $0x58] sm:$0xf]
    %v409 = vld [vmem:[#allocation7 + $0x5c] sm:$0xf]
    %v410 = vld [vmem:[#allocation7 + $0x60] sm:$0xf]
    %v411 = vld [vmem:[#allocation7 + $0x64] sm:$0xf]
    %v412 = vld [vmem:[#allocation7 + $0x68] sm:$0xf]
    %v413 = vld [vmem:[#allocation7 + $0x6c] sm:$0xf]
    %v414 = vld [vmem:[#allocation7 + $0x70] sm:$0xf]
    %v415 = vld [vmem:[#allocation7 + $0x74] sm:$0xf]
    %v416 = vld [vmem:[#allocation7 + $0x78] sm:$0xf]
    %v417 = vld [vmem:[#allocation7 + $0x7c] sm:$0xf]
    %v418 = vld [vmem:[#allocation7 + $0x80] sm:$0xf]
    %v419 = vld [vmem:[#allocation7 + $0x84] sm:$0xf]
    %v420 = vld [vmem:[#allocation7 + $0x88] sm:$0xf]
    %v421 = vld [vmem:[#allocation7 + $0x8c] sm:$0xf]
    %v422 = vld [vmem:[#allocation7 + $0x90] sm:$0xf]
    %v423 = vld [vmem:[#allocation7 + $0x94] sm:$0xf]
    %v424 = vld [vmem:[#allocation7 + $0x98] sm:$0xf]
    %v425 = vld [vmem:[#allocation7 + $0x9c] sm:$0xf]
    %v426 = vld [vmem:[#allocation7 + $0xa0] sm:$0xf]
    %v427 = vld [vmem:[#allocation7 + $0xa4] sm:$0xf]
    %v428 = vld [vmem:[#allocation7 + $0xa8] sm:$0xf]
    %v429 = vld [vmem:[#allocation7 + $0xac] sm:$0xf]
    %v430 = vld [vmem:[#allocation7 + $0xb0] sm:$0xf]
    %v431 = vld [vmem:[#allocation7 + $0xb4] sm:$0xf]
    %v432 = vld [vmem:[#allocation7 + $0xb8] sm:$0xf]
    %v433 = vld [vmem:[#allocation7 + $0xbc] sm:$0xf]
    %v434 = vld [vmem:[#allocation7 + $0xc0] sm:$0xf]
    %v435 = vld [vmem:[#allocation7 + $0xc4] sm:$0xf]
    %v436 = vld [vmem:[#allocation7 + $0xc8] sm:$0xf]
    %v437 = vld [vmem:[#allocation7 + $0xcc] sm:$0xf]
    %v438 = vld [vmem:[#allocation7 + $0xd0] sm:$0xf]
    %v439 = vld [vmem:[#allocation7 + $0xd4] sm:$0xf]
    %v440 = vld [vmem:[#allocation7 + $0xd8] sm:$0xf]
    %v441 = vld [vmem:[#allocation7 + $0xdc] sm:$0xf]
    %v442 = vld [vmem:[#allocation7 + $0xe0] sm:$0xf]
    %v443 = vld [vmem:[#allocation7 + $0xe4] sm:$0xf]
    %v444 = vld [vmem:[#allocation7 + $0xe8] sm:$0xf]
    %v445 = vld [vmem:[#allocation7 + $0xec] sm:$0xf]
    %v446 = vld [vmem:[#allocation7 + $0xf0] sm:$0xf]
    %v447 = vld [vmem:[#allocation7 + $0xf4] sm:$0xf]
    %v448 = vld [vmem:[#allocation7 + $0xf8] sm:$0xf]
    %v449 = vld [vmem:[#allocation7 + $0xfc] sm:$0xf]
    %v578 = vunpack.c.l.b16 %v96
    %v579 = vunpack.c.h.b16 %v96
    %v580 = vunpack.c.l.b16 %v97
    %v581 = vunpack.c.h.b16 %v97
    %v582 = vunpack.c.l.b16 %v98
    %v583 = vunpack.c.h.b16 %v98
    %v584 = vunpack.c.l.b16 %v99
    %v585 = vunpack.c.h.b16 %v99
    %v586 = vunpack.c.l.b16 %v100
    %v587 = vunpack.c.h.b16 %v100
    %v588 = vunpack.c.l.b16 %v101
    %v589 = vunpack.c.h.b16 %v101
    %v590 = vunpack.c.l.b16 %v102
    %v591 = vunpack.c.h.b16 %v102
    %v592 = vunpack.c.l.b16 %v103
    %v593 = vunpack.c.h.b16 %v103
    %v594 = vunpack.c.l.b16 %v104
    %v595 = vunpack.c.h.b16 %v104
    %v596 = vunpack.c.l.b16 %v105
    %v597 = vunpack.c.h.b16 %v105
    %v598 = vunpack.c.l.b16 %v106
    %v599 = vunpack.c.h.b16 %v106
    %v600 = vunpack.c.l.b16 %v107
    %v601 = vunpack.c.h.b16 %v107
    %v602 = vunpack.c.l.b16 %v108
    %v603 = vunpack.c.h.b16 %v108
    %v604 = vunpack.c.l.b16 %v109
    %v605 = vunpack.c.h.b16 %v109
    %v606 = vunpack.c.l.b16 %v110
    %v607 = vunpack.c.h.b16 %v110
    %v608 = vunpack.c.l.b16 %v111
    %v609 = vunpack.c.h.b16 %v111
    %v610 = vunpack.c.l.b16 %v112
    %v611 = vunpack.c.h.b16 %v112
    %v612 = vunpack.c.l.b16 %v113
    %v613 = vunpack.c.h.b16 %v113
    %v614 = vunpack.c.l.b16 %v114
    %v615 = vunpack.c.h.b16 %v114
    %v616 = vunpack.c.l.b16 %v115
    %v617 = vunpack.c.h.b16 %v115
    %v618 = vunpack.c.l.b16 %v116
    %v619 = vunpack.c.h.b16 %v116
    %v620 = vunpack.c.l.b16 %v117
    %v621 = vunpack.c.h.b16 %v117
    %v622 = vunpack.c.l.b16 %v118
    %v623 = vunpack.c.h.b16 %v118
    %v624 = vunpack.c.l.b16 %v119
    %v625 = vunpack.c.h.b16 %v119
    %v626 = vunpack.c.l.b16 %v120
    %v627 = vunpack.c.h.b16 %v120
    %v628 = vunpack.c.l.b16 %v121
    %v629 = vunpack.c.h.b16 %v121
    %v630 = vunpack.c.l.b16 %v122
    %v631 = vunpack.c.h.b16 %v122
    %v632 = vunpack.c.l.b16 %v123
    %v633 = vunpack.c.h.b16 %v123
    %v634 = vunpack.c.l.b16 %v124
    %v635 = vunpack.c.h.b16 %v124
    %v636 = vunpack.c.l.b16 %v125
    %v637 = vunpack.c.h.b16 %v125
    %v638 = vunpack.c.l.b16 %v126
    %v639 = vunpack.c.h.b16 %v126
    %v640 = vunpack.c.l.b16 %v127
    %v641 = vunpack.c.h.b16 %v127
    %v642 = vunpack.c.l.b16 %v128
    %v643 = vunpack.c.h.b16 %v128
    %v644 = vunpack.c.l.b16 %v129
    %v645 = vunpack.c.h.b16 %v129
    %v646 = vunpack.c.l.b16 %v130
    %v647 = vunpack.c.h.b16 %v130
    %v648 = vunpack.c.l.b16 %v131
    %v649 = vunpack.c.h.b16 %v131
    %v650 = vunpack.c.l.b16 %v132
    %v651 = vunpack.c.h.b16 %v132
    %v652 = vunpack.c.l.b16 %v133
    %v653 = vunpack.c.h.b16 %v133
    %v654 = vunpack.c.l.b16 %v134
    %v655 = vunpack.c.h.b16 %v134
    %v656 = vunpack.c.l.b16 %v135
    %v657 = vunpack.c.h.b16 %v135
    %v658 = vunpack.c.l.b16 %v136
    %v659 = vunpack.c.h.b16 %v136
    %v660 = vunpack.c.l.b16 %v137
    %v661 = vunpack.c.h.b16 %v137
    %v662 = vunpack.c.l.b16 %v138
    %v663 = vunpack.c.h.b16 %v138
    %v664 = vunpack.c.l.b16 %v139
    %v665 = vunpack.c.h.b16 %v139
    %v666 = vunpack.c.l.b16 %v140
    %v667 = vunpack.c.h.b16 %v140
    %v668 = vunpack.c.l.b16 %v141
    %v669 = vunpack.c.h.b16 %v141
    %v670 = vunpack.c.l.b16 %v142
    %v671 = vunpack.c.h.b16 %v142
    %v672 = vunpack.c.l.b16 %v143
    %v673 = vunpack.c.h.b16 %v143
    %v674 = vunpack.c.l.b16 %v144
    %v675 = vunpack.c.h.b16 %v144
    %v676 = vunpack.c.l.b16 %v145
    %v677 = vunpack.c.h.b16 %v145
    %v678 = vunpack.c.l.b16 %v146
    %v679 = vunpack.c.h.b16 %v146
    %v680 = vunpack.c.l.b16 %v147
    %v681 = vunpack.c.h.b16 %v147
    %v682 = vunpack.c.l.b16 %v148
    %v683 = vunpack.c.h.b16 %v148
    %v684 = vunpack.c.l.b16 %v149
    %v685 = vunpack.c.h.b16 %v149
    %v686 = vunpack.c.l.b16 %v150
    %v687 = vunpack.c.h.b16 %v150
    %v688 = vunpack.c.l.b16 %v151
    %v689 = vunpack.c.h.b16 %v151
    %v690 = vunpack.c.l.b16 %v152
    %v691 = vunpack.c.h.b16 %v152
    %v692 = vunpack.c.l.b16 %v153
    %v693 = vunpack.c.h.b16 %v153
    %v694 = vunpack.c.l.b16 %v154
    %v695 = vunpack.c.h.b16 %v154
    %v696 = vunpack.c.l.b16 %v155
    %v697 = vunpack.c.h.b16 %v155
    %v698 = vunpack.c.l.b16 %v156
    %v699 = vunpack.c.h.b16 %v156
    %v700 = vunpack.c.l.b16 %v157
    %v701 = vunpack.c.h.b16 %v157
    %v702 = vunpack.c.l.b16 %v158
    %v703 = vunpack.c.h.b16 %v158
    %v704 = vunpack.c.l.b16 %v159
    %v705 = vunpack.c.h.b16 %v159
    %v706 = vunpack.c.l.b16 %v160
    %v707 = vunpack.c.h.b16 %v160
    %v708 = vunpack.c.l.b16 %v161
    %v709 = vunpack.c.h.b16 %v161
    %v710 = vunpack.c.l.b16 %v162
    %v711 = vunpack.c.h.b16 %v162
    %v712 = vunpack.c.l.b16 %v163
    %v713 = vunpack.c.h.b16 %v163
    %v714 = vunpack.c.l.b16 %v164
    %v715 = vunpack.c.h.b16 %v164
    %v716 = vunpack.c.l.b16 %v165
    %v717 = vunpack.c.h.b16 %v165
    %v718 = vunpack.c.l.b16 %v166
    %v719 = vunpack.c.h.b16 %v166
    %v720 = vunpack.c.l.b16 %v167
    %v721 = vunpack.c.h.b16 %v167
    %v722 = vunpack.c.l.b16 %v168
    %v723 = vunpack.c.h.b16 %v168
    %v724 = vunpack.c.l.b16 %v169
    %v725 = vunpack.c.h.b16 %v169
    %v726 = vunpack.c.l.b16 %v170
    %v727 = vunpack.c.h.b16 %v170
    %v728 = vunpack.c.l.b16 %v171
    %v729 = vunpack.c.h.b16 %v171
    %v730 = vunpack.c.l.b16 %v172
    %v731 = vunpack.c.h.b16 %v172
    %v732 = vunpack.c.l.b16 %v173
    %v733 = vunpack.c.h.b16 %v173
    %v734 = vunpack.c.l.b16 %v174
    %v735 = vunpack.c.h.b16 %v174
    %v736 = vunpack.c.l.b16 %v175
    %v737 = vunpack.c.h.b16 %v175
    %v738 = vunpack.c.l.b16 %v176
    %v739 = vunpack.c.h.b16 %v176
    %v740 = vunpack.c.l.b16 %v177
    %v741 = vunpack.c.h.b16 %v177
    %v742 = vunpack.c.l.b16 %v178
    %v743 = vunpack.c.h.b16 %v178
    %v744 = vunpack.c.l.b16 %v179
    %v745 = vunpack.c.h.b16 %v179
    %v746 = vunpack.c.l.b16 %v180
    %v747 = vunpack.c.h.b16 %v180
    %v748 = vunpack.c.l.b16 %v181
    %v749 = vunpack.c.h.b16 %v181
    %v750 = vunpack.c.l.b16 %v182
    %v751 = vunpack.c.h.b16 %v182
    %v752 = vunpack.c.l.b16 %v183
    %v753 = vunpack.c.h.b16 %v183
    %v754 = vunpack.c.l.b16 %v184
    %v755 = vunpack.c.h.b16 %v184
    %v756 = vunpack.c.l.b16 %v185
    %v757 = vunpack.c.h.b16 %v185
    %v758 = vunpack.c.l.b16 %v186
    %v759 = vunpack.c.h.b16 %v186
    %v760 = vunpack.c.l.b16 %v187
    %v761 = vunpack.c.h.b16 %v187
    %v762 = vunpack.c.l.b16 %v188
    %v763 = vunpack.c.h.b16 %v188
    %v764 = vunpack.c.l.b16 %v189
    %v765 = vunpack.c.h.b16 %v189
    %v766 = vunpack.c.l.b16 %v190
    %v767 = vunpack.c.h.b16 %v190
    %v768 = vunpack.c.l.b16 %v191
    %v769 = vunpack.c.h.b16 %v191
    %v770 = vunpack.c.l.b16 %v192
    %v771 = vunpack.c.h.b16 %v192
    %v772 = vunpack.c.l.b16 %v193
    %v773 = vunpack.c.h.b16 %v193
    %v774 = vunpack.c.l.b16 %v194
    %v775 = vunpack.c.h.b16 %v194
    %v776 = vunpack.c.l.b16 %v195
    %v777 = vunpack.c.h.b16 %v195
    %v778 = vunpack.c.l.b16 %v196
    %v779 = vunpack.c.h.b16 %v196
    %v780 = vunpack.c.l.b16 %v197
    %v781 = vunpack.c.h.b16 %v197
    %v782 = vunpack.c.l.b16 %v198
    %v783 = vunpack.c.h.b16 %v198
    %v784 = vunpack.c.l.b16 %v199
    %v785 = vunpack.c.h.b16 %v199
    %v786 = vunpack.c.l.b16 %v200
    %v787 = vunpack.c.h.b16 %v200
    %v788 = vunpack.c.l.b16 %v201
    %v789 = vunpack.c.h.b16 %v201
    %v790 = vunpack.c.l.b16 %v202
    %v791 = vunpack.c.h.b16 %v202
    %v792 = vunpack.c.l.b16 %v203
    %v793 = vunpack.c.h.b16 %v203
    %v794 = vunpack.c.l.b16 %v204
    %v795 = vunpack.c.h.b16 %v204
    %v796 = vunpack.c.l.b16 %v205
    %v797 = vunpack.c.h.b16 %v205
    %v798 = vunpack.c.l.b16 %v206
    %v799 = vunpack.c.h.b16 %v206
    %v800 = vunpack.c.l.b16 %v207
    %v801 = vunpack.c.h.b16 %v207
    %v802 = vunpack.c.l.b16 %v208
    %v803 = vunpack.c.h.b16 %v208
    %v804 = vunpack.c.l.b16 %v209
    %v805 = vunpack.c.h.b16 %v209
    %v806 = vunpack.c.l.b16 %v210
    %v807 = vunpack.c.h.b16 %v210
    %v808 = vunpack.c.l.b16 %v211
    %v809 = vunpack.c.h.b16 %v211
    %v810 = vunpack.c.l.b16 %v212
    %v811 = vunpack.c.h.b16 %v212
    %v812 = vunpack.c.l.b16 %v213
    %v813 = vunpack.c.h.b16 %v213
    %v814 = vunpack.c.l.b16 %v214
    %v815 = vunpack.c.h.b16 %v214
    %v816 = vunpack.c.l.b16 %v215
    %v817 = vunpack.c.h.b16 %v215
    %v818 = vunpack.c.l.b16 %v216
    %v819 = vunpack.c.h.b16 %v216
    %v820 = vunpack.c.l.b16 %v217
    %v821 = vunpack.c.h.b16 %v217
    %v822 = vunpack.c.l.b16 %v218
    %v823 = vunpack.c.h.b16 %v218
    %v824 = vunpack.c.l.b16 %v219
    %v825 = vunpack.c.h.b16 %v219
    %v826 = vunpack.c.l.b16 %v220
    %v827 = vunpack.c.h.b16 %v220
    %v828 = vunpack.c.l.b16 %v221
    %v829 = vunpack.c.h.b16 %v221
    %v830 = vunpack.c.l.b16 %v222
    %v831 = vunpack.c.h.b16 %v222
    %v832 = vunpack.c.l.b16 %v223
    %v833 = vunpack.c.h.b16 %v223
    %v834 = vpack.c.b16 %v582, %v578
    %v835 = vpack.c.b16 %v583, %v579
    %v836 = vpack.c.b16 %v584, %v580
    %v837 = vpack.c.b16 %v585, %v581
    %v838 = vpack.c.b16 %v590, %v586
    %v839 = vpack.c.b16 %v591, %v587
    %v840 = vpack.c.b16 %v592, %v588
    %v841 = vpack.c.b16 %v593, %v589
    %v842 = vpack.c.b16 %v598, %v594
    %v843 = vpack.c.b16 %v599, %v595
    %v844 = vpack.c.b16 %v600, %v596
    %v845 = vpack.c.b16 %v601, %v597
    %v846 = vpack.c.b16 %v606, %v602
    %v847 = vpack.c.b16 %v607, %v603
    %v848 = vpack.c.b16 %v608, %v604
    %v849 = vpack.c.b16 %v609, %v605
    %v850 = vpack.c.b16 %v614, %v610
    %v851 = vpack.c.b16 %v615, %v611
    %v852 = vpack.c.b16 %v616, %v612
    %v853 = vpack.c.b16 %v617, %v613
    %v854 = vpack.c.b16 %v622, %v618
    %v855 = vpack.c.b16 %v623, %v619
    %v856 = vpack.c.b16 %v624, %v620
    %v857 = vpack.c.b16 %v625, %v621
    %v858 = vpack.c.b16 %v630, %v626
    %v859 = vpack.c.b16 %v631, %v627
    %v860 = vpack.c.b16 %v632, %v628
    %v861 = vpack.c.b16 %v633, %v629
    %v862 = vpack.c.b16 %v638, %v634
    %v863 = vpack.c.b16 %v639, %v635
    %v864 = vpack.c.b16 %v640, %v636
    %v865 = vpack.c.b16 %v641, %v637
    %v866 = vpack.c.b16 %v646, %v642
    %v867 = vpack.c.b16 %v647, %v643
    %v868 = vpack.c.b16 %v648, %v644
    %v869 = vpack.c.b16 %v649, %v645
    %v870 = vpack.c.b16 %v654, %v650
    %v871 = vpack.c.b16 %v655, %v651
    %v872 = vpack.c.b16 %v656, %v652
    %v873 = vpack.c.b16 %v657, %v653
    %v874 = vpack.c.b16 %v662, %v658
    %v875 = vpack.c.b16 %v663, %v659
    %v876 = vpack.c.b16 %v664, %v660
    %v877 = vpack.c.b16 %v665, %v661
    %v878 = vpack.c.b16 %v670, %v666
    %v879 = vpack.c.b16 %v671, %v667
    %v880 = vpack.c.b16 %v672, %v668
    %v881 = vpack.c.b16 %v673, %v669
    %v882 = vpack.c.b16 %v678, %v674
    %v883 = vpack.c.b16 %v679, %v675
    %v884 = vpack.c.b16 %v680, %v676
    %v885 = vpack.c.b16 %v681, %v677
    %v886 = vpack.c.b16 %v686, %v682
    %v887 = vpack.c.b16 %v687, %v683
    %v888 = vpack.c.b16 %v688, %v684
    %v889 = vpack.c.b16 %v689, %v685
    %v890 = vpack.c.b16 %v694, %v690
    %v891 = vpack.c.b16 %v695, %v691
    %v892 = vpack.c.b16 %v696, %v692
    %v893 = vpack.c.b16 %v697, %v693
    %v894 = vpack.c.b16 %v702, %v698
    %v895 = vpack.c.b16 %v703, %v699
    %v896 = vpack.c.b16 %v704, %v700
    %v897 = vpack.c.b16 %v705, %v701
    %v898 = vpack.c.b16 %v710, %v706
    %v899 = vpack.c.b16 %v711, %v707
    %v900 = vpack.c.b16 %v712, %v708
    %v901 = vpack.c.b16 %v713, %v709
    %v902 = vpack.c.b16 %v718, %v714
    %v903 = vpack.c.b16 %v719, %v715
    %v904 = vpack.c.b16 %v720, %v716
    %v905 = vpack.c.b16 %v721, %v717
    %v906 = vpack.c.b16 %v726, %v722
    %v907 = vpack.c.b16 %v727, %v723
    %v908 = vpack.c.b16 %v728, %v724
    %v909 = vpack.c.b16 %v729, %v725
    %v910 = vpack.c.b16 %v734, %v730
    %v911 = vpack.c.b16 %v735, %v731
    %v912 = vpack.c.b16 %v736, %v732
    %v913 = vpack.c.b16 %v737, %v733
    %v914 = vpack.c.b16 %v742, %v738
    %v915 = vpack.c.b16 %v743, %v739
    %v916 = vpack.c.b16 %v744, %v740
    %v917 = vpack.c.b16 %v745, %v741
    %v918 = vpack.c.b16 %v750, %v746
    %v919 = vpack.c.b16 %v751, %v747
    %v920 = vpack.c.b16 %v752, %v748
    %v921 = vpack.c.b16 %v753, %v749
    %v922 = vpack.c.b16 %v758, %v754
    %v923 = vpack.c.b16 %v759, %v755
    %v924 = vpack.c.b16 %v760, %v756
    %v925 = vpack.c.b16 %v761, %v757
    %v926 = vpack.c.b16 %v766, %v762
    %v927 = vpack.c.b16 %v767, %v763
    %v928 = vpack.c.b16 %v768, %v764
    %v929 = vpack.c.b16 %v769, %v765
    %v930 = vpack.c.b16 %v774, %v770
    %v931 = vpack.c.b16 %v775, %v771
    %v932 = vpack.c.b16 %v776, %v772
    %v933 = vpack.c.b16 %v777, %v773
    %v934 = vpack.c.b16 %v782, %v778
    %v935 = vpack.c.b16 %v783, %v779
    %v936 = vpack.c.b16 %v784, %v780
    %v937 = vpack.c.b16 %v785, %v781
    %v938 = vpack.c.b16 %v790, %v786
    %v939 = vpack.c.b16 %v791, %v787
    %v940 = vpack.c.b16 %v792, %v788
    %v941 = vpack.c.b16 %v793, %v789
    %v942 = vpack.c.b16 %v798, %v794
    %v943 = vpack.c.b16 %v799, %v795
    %v944 = vpack.c.b16 %v800, %v796
    %v945 = vpack.c.b16 %v801, %v797
    %v946 = vpack.c.b16 %v806, %v802
    %v947 = vpack.c.b16 %v807, %v803
    %v948 = vpack.c.b16 %v808, %v804
    %v949 = vpack.c.b16 %v809, %v805
    %v950 = vpack.c.b16 %v814, %v810
    %v951 = vpack.c.b16 %v815, %v811
    %v952 = vpack.c.b16 %v816, %v812
    %v953 = vpack.c.b16 %v817, %v813
    %v954 = vpack.c.b16 %v822, %v818
    %v955 = vpack.c.b16 %v823, %v819
    %v956 = vpack.c.b16 %v824, %v820
    %v957 = vpack.c.b16 %v825, %v821
    %v958 = vpack.c.b16 %v830, %v826
    %v959 = vpack.c.b16 %v831, %v827
    %v960 = vpack.c.b16 %v832, %v828
    %v961 = vpack.c.b16 %v833, %v829
    %v1154 = vunpack.c.l.b16 %v386
    %v1155 = vunpack.c.l.b16 %v387
    %v1156 = vunpack.c.l.b16 %v388
    %v1157 = vunpack.c.l.b16 %v389
    %v1158 = vunpack.c.l.b16 %v390
    %v1159 = vunpack.c.l.b16 %v391
    %v1160 = vunpack.c.l.b16 %v392
    %v1161 = vunpack.c.l.b16 %v393
    %v1162 = vunpack.c.l.b16 %v394
    %v1163 = vunpack.c.l.b16 %v395
    %v1164 = vunpack.c.l.b16 %v396
    %v1165 = vunpack.c.l.b16 %v397
    %v1166 = vunpack.c.l.b16 %v398
    %v1167 = vunpack.c.l.b16 %v399
    %v1168 = vunpack.c.l.b16 %v400
    %v1169 = vunpack.c.l.b16 %v401
    %v1170 = vunpack.c.l.b16 %v402
    %v1171 = vunpack.c.l.b16 %v403
    %v1172 = vunpack.c.l.b16 %v404
    %v1173 = vunpack.c.l.b16 %v405
    %v1174 = vunpack.c.l.b16 %v406
    %v1175 = vunpack.c.l.b16 %v407
    %v1176 = vunpack.c.l.b16 %v408
    %v1177 = vunpack.c.l.b16 %v409
    %v1178 = vunpack.c.l.b16 %v410
    %v1179 = vunpack.c.l.b16 %v411
    %v1180 = vunpack.c.l.b16 %v412
    %v1181 = vunpack.c.l.b16 %v413
    %v1182 = vunpack.c.l.b16 %v414
    %v1183 = vunpack.c.l.b16 %v415
    %v1184 = vunpack.c.l.b16 %v416
    %v1185 = vunpack.c.l.b16 %v417
    %v1186 = vunpack.c.l.b16 %v418
    %v1187 = vunpack.c.l.b16 %v419
    %v1188 = vunpack.c.l.b16 %v420
    %v1189 = vunpack.c.l.b16 %v421
    %v1190 = vunpack.c.l.b16 %v422
    %v1191 = vunpack.c.l.b16 %v423
    %v1192 = vunpack.c.l.b16 %v424
    %v1193 = vunpack.c.l.b16 %v425
    %v1194 = vunpack.c.l.b16 %v426
    %v1195 = vunpack.c.l.b16 %v427
    %v1196 = vunpack.c.l.b16 %v428
    %v1197 = vunpack.c.l.b16 %v429
    %v1198 = vunpack.c.l.b16 %v430
    %v1199 = vunpack.c.l.b16 %v431
    %v1200 = vunpack.c.l.b16 %v432
    %v1201 = vunpack.c.l.b16 %v433
    %v1202 = vunpack.c.l.b16 %v434
    %v1203 = vunpack.c.l.b16 %v435
    %v1204 = vunpack.c.l.b16 %v436
    %v1205 = vunpack.c.l.b16 %v437
    %v1206 = vunpack.c.l.b16 %v438
    %v1207 = vunpack.c.l.b16 %v439
    %v1208 = vunpack.c.l.b16 %v440
    %v1209 = vunpack.c.l.b16 %v441
    %v1210 = vunpack.c.l.b16 %v442
    %v1211 = vunpack.c.l.b16 %v443
    %v1212 = vunpack.c.l.b16 %v444
    %v1213 = vunpack.c.l.b16 %v445
    %v1214 = vunpack.c.l.b16 %v446
    %v1215 = vunpack.c.l.b16 %v447
    %v1216 = vunpack.c.l.b16 %v448
    %v1217 = vunpack.c.l.b16 %v449
    %v1218 = vpack.c.b16 %v1155, %v1154
    %v1219 = vpack.c.b16 %v1157, %v1156
    %v1220 = vpack.c.b16 %v1159, %v1158
    %v1221 = vpack.c.b16 %v1161, %v1160
    %v1222 = vpack.c.b16 %v1163, %v1162
    %v1223 = vpack.c.b16 %v1165, %v1164
    %v1224 = vpack.c.b16 %v1167, %v1166
    %v1225 = vpack.c.b16 %v1169, %v1168
    %v1226 = vpack.c.b16 %v1171, %v1170
    %v1227 = vpack.c.b16 %v1173, %v1172
    %v1228 = vpack.c.b16 %v1175, %v1174
    %v1229 = vpack.c.b16 %v1177, %v1176
    %v1230 = vpack.c.b16 %v1179, %v1178
    %v1231 = vpack.c.b16 %v1181, %v1180
    %v1232 = vpack.c.b16 %v1183, %v1182
    %v1233 = vpack.c.b16 %v1185, %v1184
    %v1234 = vpack.c.b16 %v1187, %v1186
    %v1235 = vpack.c.b16 %v1189, %v1188
    %v1236 = vpack.c.b16 %v1191, %v1190
    %v1237 = vpack.c.b16 %v1193, %v1192
    %v1238 = vpack.c.b16 %v1195, %v1194
    %v1239 = vpack.c.b16 %v1197, %v1196
    %v1240 = vpack.c.b16 %v1199, %v1198
    %v1241 = vpack.c.b16 %v1201, %v1200
    %v1242 = vpack.c.b16 %v1203, %v1202
    %v1243 = vpack.c.b16 %v1205, %v1204
    %v1244 = vpack.c.b16 %v1207, %v1206
    %v1245 = vpack.c.b16 %v1209, %v1208
    %v1246 = vpack.c.b16 %v1211, %v1210
    %v1247 = vpack.c.b16 %v1213, %v1212
    %v1248 = vpack.c.b16 %v1215, %v1214
    %v1249 = vpack.c.b16 %v1217, %v1216
    %1282 = vmatprep.subr.bf16.mxu0 0
    %1283 = vmatpush1.bf16.msra.mxu0 %v1225
    %1284 = vmatprep.subr.bf16.mxu0 0
    %1285 = vmatpush1.bf16.msra.mxu0 %v1224
    %1286 = vmatprep.subr.bf16.mxu0 0
    %1287 = vmatpush1.bf16.msra.mxu0 %v1223
    %1288 = vmatprep.subr.bf16.mxu0 0
    %1289 = vmatpush1.bf16.msra.mxu0 %v1222
    %1290 = vmatprep.subr.bf16.mxu0 0
    %1291 = vmatpush1.bf16.msra.mxu0 %v1221
    %1292 = vmatprep.subr.bf16.mxu0 0
    %1293 = vmatpush1.bf16.msra.mxu0 %v1220
    %1294 = vmatprep.subr.bf16.mxu0 0
    %1295 = vmatpush1.bf16.msra.mxu0 %v1219
    %1296 = vmatprep.subr.bf16.mxu0 0
    %1297 = vmatpush1.bf16.msra.mxu0 %v1218
    %1298 = vmatprep.subr.bf16.mxu0 0
    %1299 = vmatpush2.bf16.msra.mxu0 %v1233
    %1300 = vmatprep.subr.bf16.mxu0 0
    %1301 = vmatpush2.bf16.msra.mxu0 %v1232
    %1302 = vmatprep.subr.bf16.mxu0 0
    %1303 = vmatpush2.bf16.msra.mxu0 %v1231
    %1304 = vmatprep.subr.bf16.mxu0 0
    %1305 = vmatpush2.bf16.msra.mxu0 %v1230
    %1306 = vmatprep.subr.bf16.mxu0 0
    %1307 = vmatpush2.bf16.msra.mxu0 %v1229
    %1308 = vmatprep.subr.bf16.mxu0 0
    %1309 = vmatpush2.bf16.msra.mxu0 %v1228
    %1310 = vmatprep.subr.bf16.mxu0 0
    %1311 = vmatpush2.bf16.msra.mxu0 %v1227
    %1312 = vmatprep.subr.bf16.mxu0 0
    %1313 = vmatpush2.bf16.msra.mxu0 %v1226
    %1314 = vmatprep.mubr.bf16.mxu0 %v835
    %1315 = vmatmul.mubr.bf16.gmra.mxu0 %v834
    %v1316 = vpop.f32.mrf.mxu0
    %v1317 = vadd.f32 0.0, %v1316
    %v1318 = vpop.f32.mrf.mxu0
    %v1319 = vpop.f32.mrf.mxu0
    %v1320 = vadd.f32 0.0, %v1319
    %v1321 = vpop.f32.mrf.mxu0
    %1322 = vmatprep.mubr.bf16.mxu0 %v839
    %1323 = vmatmul.mubr.bf16.gmra.mxu0 %v838
    %v1324 = vpop.f32.mrf.mxu0
    %v1325 = vadd.f32 0.0, %v1324
    %v1326 = vpop.f32.mrf.mxu0
    %v1327 = vpop.f32.mrf.mxu0
    %v1328 = vadd.f32 0.0, %v1327
    %v1329 = vpop.f32.mrf.mxu0
    %1330 = vmatprep.mubr.bf16.mxu0 %v843
    %1331 = vmatmul.mubr.bf16.gmra.mxu0 %v842
    %v1332 = vpop.f32.mrf.mxu0
    %v1333 = vadd.f32 0.0, %v1332
    %v1334 = vpop.f32.mrf.mxu0
    %v1335 = vpop.f32.mrf.mxu0
    %v1336 = vadd.f32 0.0, %v1335
    %v1337 = vpop.f32.mrf.mxu0
    %1338 = vmatprep.mubr.bf16.mxu0 %v847
    %1339 = vmatmul.mubr.bf16.gmra.mxu0 %v846
    %v1340 = vpop.f32.mrf.mxu0
    %v1341 = vadd.f32 0.0, %v1340
    %v1342 = vpop.f32.mrf.mxu0
    %v1343 = vpop.f32.mrf.mxu0
    %v1344 = vadd.f32 0.0, %v1343
    %v1345 = vpop.f32.mrf.mxu0
    %1346 = vmatprep.mubr.bf16.mxu0 %v851
    %1347 = vmatmul.mubr.bf16.gmra.mxu0 %v850
    %v1348 = vpop.f32.mrf.mxu0
    %v1349 = vadd.f32 0.0, %v1348
    %v1350 = vpop.f32.mrf.mxu0
    %v1351 = vpop.f32.mrf.mxu0
    %v1352 = vadd.f32 0.0, %v1351
    %v1353 = vpop.f32.mrf.mxu0
    %1354 = vmatprep.mubr.bf16.mxu0 %v855
    %1355 = vmatmul.mubr.bf16.gmra.mxu0 %v854
    %v1356 = vpop.f32.mrf.mxu0
    %v1357 = vadd.f32 0.0, %v1356
    %v1358 = vpop.f32.mrf.mxu0
    %v1359 = vpop.f32.mrf.mxu0
    %v1360 = vadd.f32 0.0, %v1359
    %v1361 = vpop.f32.mrf.mxu0
    %1362 = vmatprep.mubr.bf16.mxu0 %v859
    %1363 = vmatmul.mubr.bf16.gmra.mxu0 %v858
    %v1364 = vpop.f32.mrf.mxu0
    %v1365 = vadd.f32 0.0, %v1364
    %v1366 = vpop.f32.mrf.mxu0
    %v1367 = vpop.f32.mrf.mxu0
    %v1368 = vadd.f32 0.0, %v1367
    %v1369 = vpop.f32.mrf.mxu0
    %1370 = vmatprep.mubr.bf16.mxu0 %v863
    %1371 = vmatmul.mubr.bf16.gmra.mxu0 %v862
    %v1372 = vpop.f32.mrf.mxu0
    %v1373 = vadd.f32 0.0, %v1372
    %v1374 = vpop.f32.mrf.mxu0
    %v1375 = vpop.f32.mrf.mxu0
    %v1376 = vadd.f32 0.0, %v1375
    %v1377 = vpop.f32.mrf.mxu0
    %1378 = vmatprep.mubr.bf16.mxu0 %v867
    %1379 = vmatmul.mubr.bf16.gmra.mxu0 %v866
    %v1380 = vpop.f32.mrf.mxu0
    %v1381 = vadd.f32 0.0, %v1380
    %v1382 = vpop.f32.mrf.mxu0
    %v1383 = vpop.f32.mrf.mxu0
    %v1384 = vadd.f32 0.0, %v1383
    %v1385 = vpop.f32.mrf.mxu0
    %1386 = vmatprep.mubr.bf16.mxu0 %v871
    %1387 = vmatmul.mubr.bf16.gmra.mxu0 %v870
    %v1388 = vpop.f32.mrf.mxu0
    %v1389 = vadd.f32 0.0, %v1388
    %v1390 = vpop.f32.mrf.mxu0
    %v1391 = vpop.f32.mrf.mxu0
    %v1392 = vadd.f32 0.0, %v1391
    %v1393 = vpop.f32.mrf.mxu0
    %1394 = vmatprep.mubr.bf16.mxu0 %v875
    %1395 = vmatmul.mubr.bf16.gmra.mxu0 %v874
    %v1396 = vpop.f32.mrf.mxu0
    %v1397 = vadd.f32 0.0, %v1396
    %v1398 = vpop.f32.mrf.mxu0
    %v1399 = vpop.f32.mrf.mxu0
    %v1400 = vadd.f32 0.0, %v1399
    %v1401 = vpop.f32.mrf.mxu0
    %1402 = vmatprep.mubr.bf16.mxu0 %v879
    %1403 = vmatmul.mubr.bf16.gmra.mxu0 %v878
    %v1404 = vpop.f32.mrf.mxu0
    %v1405 = vadd.f32 0.0, %v1404
    %v1406 = vpop.f32.mrf.mxu0
    %v1407 = vpop.f32.mrf.mxu0
    %v1408 = vadd.f32 0.0, %v1407
    %v1409 = vpop.f32.mrf.mxu0
    %1410 = vmatprep.mubr.bf16.mxu0 %v883
    %1411 = vmatmul.mubr.bf16.gmra.mxu0 %v882
    %v1412 = vpop.f32.mrf.mxu0
    %v1413 = vadd.f32 0.0, %v1412
    %v1414 = vpop.f32.mrf.mxu0
    %v1415 = vpop.f32.mrf.mxu0
    %v1416 = vadd.f32 0.0, %v1415
    %v1417 = vpop.f32.mrf.mxu0
    %1418 = vmatprep.mubr.bf16.mxu0 %v887
    %1419 = vmatmul.mubr.bf16.gmra.mxu0 %v886
    %v1420 = vpop.f32.mrf.mxu0
    %v1421 = vadd.f32 0.0, %v1420
    %v1422 = vpop.f32.mrf.mxu0
    %v1423 = vpop.f32.mrf.mxu0
    %v1424 = vadd.f32 0.0, %v1423
    %v1425 = vpop.f32.mrf.mxu0
    %1426 = vmatprep.mubr.bf16.mxu0 %v891
    %1427 = vmatmul.mubr.bf16.gmra.mxu0 %v890
    %v1428 = vpop.f32.mrf.mxu0
    %v1429 = vadd.f32 0.0, %v1428
    %v1430 = vpop.f32.mrf.mxu0
    %v1431 = vpop.f32.mrf.mxu0
    %v1432 = vadd.f32 0.0, %v1431
    %v1433 = vpop.f32.mrf.mxu0
    %1434 = vmatprep.mubr.bf16.mxu0 %v895
    %1435 = vmatmul.mubr.bf16.gmra.mxu0 %v894
    %v1436 = vpop.f32.mrf.mxu0
    %v1437 = vadd.f32 0.0, %v1436
    %v1438 = vpop.f32.mrf.mxu0
    %v1439 = vpop.f32.mrf.mxu0
    %v1440 = vadd.f32 0.0, %v1439
    %v1441 = vpop.f32.mrf.mxu0
    %1442 = vmatprep.mubr.bf16.mxu0 %v899
    %1443 = vmatmul.mubr.bf16.gmra.mxu0 %v898
    %v1444 = vpop.f32.mrf.mxu0
    %v1445 = vadd.f32 0.0, %v1444
    %v1446 = vpop.f32.mrf.mxu0
    %v1447 = vpop.f32.mrf.mxu0
    %v1448 = vadd.f32 0.0, %v1447
    %v1449 = vpop.f32.mrf.mxu0
    %1450 = vmatprep.mubr.bf16.mxu0 %v903
    %1451 = vmatmul.mubr.bf16.gmra.mxu0 %v902
    %v1452 = vpop.f32.mrf.mxu0
    %v1453 = vadd.f32 0.0, %v1452
    %v1454 = vpop.f32.mrf.mxu0
    %v1455 = vpop.f32.mrf.mxu0
    %v1456 = vadd.f32 0.0, %v1455
    %v1457 = vpop.f32.mrf.mxu0
    %1458 = vmatprep.mubr.bf16.mxu0 %v907
    %1459 = vmatmul.mubr.bf16.gmra.mxu0 %v906
    %v1460 = vpop.f32.mrf.mxu0
    %v1461 = vadd.f32 0.0, %v1460
    %v1462 = vpop.f32.mrf.mxu0
    %v1463 = vpop.f32.mrf.mxu0
    %v1464 = vadd.f32 0.0, %v1463
    %v1465 = vpop.f32.mrf.mxu0
    %1466 = vmatprep.mubr.bf16.mxu0 %v911
    %1467 = vmatmul.mubr.bf16.gmra.mxu0 %v910
    %v1468 = vpop.f32.mrf.mxu0
    %v1469 = vadd.f32 0.0, %v1468
    %v1470 = vpop.f32.mrf.mxu0
    %v1471 = vpop.f32.mrf.mxu0
    %v1472 = vadd.f32 0.0, %v1471
    %v1473 = vpop.f32.mrf.mxu0
    %1474 = vmatprep.mubr.bf16.mxu0 %v915
    %1475 = vmatmul.mubr.bf16.gmra.mxu0 %v914
    %v1476 = vpop.f32.mrf.mxu0
    %v1477 = vadd.f32 0.0, %v1476
    %v1478 = vpop.f32.mrf.mxu0
    %v1479 = vpop.f32.mrf.mxu0
    %v1480 = vadd.f32 0.0, %v1479
    %v1481 = vpop.f32.mrf.mxu0
    %1482 = vmatprep.mubr.bf16.mxu0 %v919
    %1483 = vmatmul.mubr.bf16.gmra.mxu0 %v918
    %v1484 = vpop.f32.mrf.mxu0
    %v1485 = vadd.f32 0.0, %v1484
    %v1486 = vpop.f32.mrf.mxu0
    %v1487 = vpop.f32.mrf.mxu0
    %v1488 = vadd.f32 0.0, %v1487
    %v1489 = vpop.f32.mrf.mxu0
    %1490 = vmatprep.mubr.bf16.mxu0 %v923
    %1491 = vmatmul.mubr.bf16.gmra.mxu0 %v922
    %v1492 = vpop.f32.mrf.mxu0
    %v1493 = vadd.f32 0.0, %v1492
    %v1494 = vpop.f32.mrf.mxu0
    %v1495 = vpop.f32.mrf.mxu0
    %v1496 = vadd.f32 0.0, %v1495
    %v1497 = vpop.f32.mrf.mxu0
    %1498 = vmatprep.mubr.bf16.mxu0 %v927
    %1499 = vmatmul.mubr.bf16.gmra.mxu0 %v926
    %v1500 = vpop.f32.mrf.mxu0
    %v1501 = vadd.f32 0.0, %v1500
    %v1502 = vpop.f32.mrf.mxu0
    %v1503 = vpop.f32.mrf.mxu0
    %v1504 = vadd.f32 0.0, %v1503
    %v1505 = vpop.f32.mrf.mxu0
    %1506 = vmatprep.mubr.bf16.mxu0 %v931
    %1507 = vmatmul.mubr.bf16.gmra.mxu0 %v930
    %v1508 = vpop.f32.mrf.mxu0
    %v1509 = vadd.f32 0.0, %v1508
    %v1510 = vpop.f32.mrf.mxu0
    %v1511 = vpop.f32.mrf.mxu0
    %v1512 = vadd.f32 0.0, %v1511
    %v1513 = vpop.f32.mrf.mxu0
    %1514 = vmatprep.mubr.bf16.mxu0 %v935
    %1515 = vmatmul.mubr.bf16.gmra.mxu0 %v934
    %v1516 = vpop.f32.mrf.mxu0
    %v1517 = vadd.f32 0.0, %v1516
    %v1518 = vpop.f32.mrf.mxu0
    %v1519 = vpop.f32.mrf.mxu0
    %v1520 = vadd.f32 0.0, %v1519
    %v1521 = vpop.f32.mrf.mxu0
    %1522 = vmatprep.mubr.bf16.mxu0 %v939
    %1523 = vmatmul.mubr.bf16.gmra.mxu0 %v938
    %v1524 = vpop.f32.mrf.mxu0
    %v1525 = vadd.f32 0.0, %v1524
    %v1526 = vpop.f32.mrf.mxu0
    %v1527 = vpop.f32.mrf.mxu0
    %v1528 = vadd.f32 0.0, %v1527
    %v1529 = vpop.f32.mrf.mxu0
    %1530 = vmatprep.mubr.bf16.mxu0 %v943
    %1531 = vmatmul.mubr.bf16.gmra.mxu0 %v942
    %v1532 = vpop.f32.mrf.mxu0
    %v1533 = vadd.f32 0.0, %v1532
    %v1534 = vpop.f32.mrf.mxu0
    %v1535 = vpop.f32.mrf.mxu0
    %v1536 = vadd.f32 0.0, %v1535
    %v1537 = vpop.f32.mrf.mxu0
    %1538 = vmatprep.mubr.bf16.mxu0 %v947
    %1539 = vmatmul.mubr.bf16.gmra.mxu0 %v946
    %v1540 = vpop.f32.mrf.mxu0
    %v1541 = vadd.f32 0.0, %v1540
    %v1542 = vpop.f32.mrf.mxu0
    %v1543 = vpop.f32.mrf.mxu0
    %v1544 = vadd.f32 0.0, %v1543
    %v1545 = vpop.f32.mrf.mxu0
    %1546 = vmatprep.mubr.bf16.mxu0 %v951
    %1547 = vmatmul.mubr.bf16.gmra.mxu0 %v950
    %v1548 = vpop.f32.mrf.mxu0
    %v1549 = vadd.f32 0.0, %v1548
    %v1550 = vpop.f32.mrf.mxu0
    %v1551 = vpop.f32.mrf.mxu0
    %v1552 = vadd.f32 0.0, %v1551
    %v1553 = vpop.f32.mrf.mxu0
    %1554 = vmatprep.mubr.bf16.mxu0 %v955
    %1555 = vmatmul.mubr.bf16.gmra.mxu0 %v954
    %v1556 = vpop.f32.mrf.mxu0
    %v1557 = vadd.f32 0.0, %v1556
    %v1558 = vpop.f32.mrf.mxu0
    %v1559 = vpop.f32.mrf.mxu0
    %v1560 = vadd.f32 0.0, %v1559
    %v1561 = vpop.f32.mrf.mxu0
    %1562 = vmatprep.mubr.bf16.mxu0 %v959
    %1563 = vmatmul.mubr.bf16.gmra.mxu0 %v958
    %v1564 = vpop.f32.mrf.mxu0
    %v1565 = vadd.f32 0.0, %v1564
    %v1566 = vpop.f32.mrf.mxu0
    %v1567 = vpop.f32.mrf.mxu0
    %v1568 = vadd.f32 0.0, %v1567
    %v1569 = vpop.f32.mrf.mxu0
    %1570 = vdwg.mxu0
    %1571 = vmatprep.subr.bf16.mxu0 0
    %1572 = vmatpush1.bf16.msra.mxu0 %v1241
    %1573 = vmatprep.subr.bf16.mxu0 0
    %1574 = vmatpush1.bf16.msra.mxu0 %v1240
    %1575 = vmatprep.subr.bf16.mxu0 0
    %1576 = vmatpush1.bf16.msra.mxu0 %v1239
    %1577 = vmatprep.subr.bf16.mxu0 0
    %1578 = vmatpush1.bf16.msra.mxu0 %v1238
    %1579 = vmatprep.subr.bf16.mxu0 0
    %1580 = vmatpush1.bf16.msra.mxu0 %v1237
    %1581 = vmatprep.subr.bf16.mxu0 0
    %1582 = vmatpush1.bf16.msra.mxu0 %v1236
    %1583 = vmatprep.subr.bf16.mxu0 0
    %1584 = vmatpush1.bf16.msra.mxu0 %v1235
    %1585 = vmatprep.subr.bf16.mxu0 0
    %1586 = vmatpush1.bf16.msra.mxu0 %v1234
    %1587 = vmatprep.subr.bf16.mxu0 0
    %1588 = vmatpush2.bf16.msra.mxu0 %v1249
    %1589 = vmatprep.subr.bf16.mxu0 0
    %1590 = vmatpush2.bf16.msra.mxu0 %v1248
    %1591 = vmatprep.subr.bf16.mxu0 0
    %1592 = vmatpush2.bf16.msra.mxu0 %v1247
    %1593 = vmatprep.subr.bf16.mxu0 0
    %1594 = vmatpush2.bf16.msra.mxu0 %v1246
    %1595 = vmatprep.subr.bf16.mxu0 0
    %1596 = vmatpush2.bf16.msra.mxu0 %v1245
    %1597 = vmatprep.subr.bf16.mxu0 0
    %1598 = vmatpush2.bf16.msra.mxu0 %v1244
    %1599 = vmatprep.subr.bf16.mxu0 0
    %1600 = vmatpush2.bf16.msra.mxu0 %v1243
    %1601 = vmatprep.subr.bf16.mxu0 0
    %1602 = vmatpush2.bf16.msra.mxu0 %v1242
    %1603 = vmatprep.mubr.bf16.mxu0 %v837
    %1604 = vmatmul.mubr.bf16.gmra.mxu0 %v836
    %v1605 = vpop.f32.mrf.mxu0
    %v1606 = vadd.f32 %v1317, %v1605
    %v1607 = vpop.f32.mrf.mxu0
    %v1608 = vpop.f32.mrf.mxu0
    %v1609 = vadd.f32 %v1320, %v1608
    %v1610 = vpop.f32.mrf.mxu0
    %1611 = vmatprep.mubr.bf16.mxu0 %v841
    %1612 = vmatmul.mubr.bf16.gmra.mxu0 %v840
    %v1613 = vpop.f32.mrf.mxu0
    %v1614 = vadd.f32 %v1325, %v1613
    %v1615 = vpop.f32.mrf.mxu0
    %v1616 = vpop.f32.mrf.mxu0
    %v1617 = vadd.f32 %v1328, %v1616
    %v1618 = vpop.f32.mrf.mxu0
    %1619 = vmatprep.mubr.bf16.mxu0 %v845
    %1620 = vmatmul.mubr.bf16.gmra.mxu0 %v844
    %v1621 = vpop.f32.mrf.mxu0
    %v1622 = vadd.f32 %v1333, %v1621
    %v1623 = vpop.f32.mrf.mxu0
    %v1624 = vpop.f32.mrf.mxu0
    %v1625 = vadd.f32 %v1336, %v1624
    %v1626 = vpop.f32.mrf.mxu0
    %1627 = vmatprep.mubr.bf16.mxu0 %v849
    %1628 = vmatmul.mubr.bf16.gmra.mxu0 %v848
    %v1629 = vpop.f32.mrf.mxu0
    %v1630 = vadd.f32 %v1341, %v1629
    %v1631 = vpop.f32.mrf.mxu0
    %v1632 = vpop.f32.mrf.mxu0
    %v1633 = vadd.f32 %v1344, %v1632
    %v1634 = vpop.f32.mrf.mxu0
    %1635 = vmatprep.mubr.bf16.mxu0 %v853
    %1636 = vmatmul.mubr.bf16.gmra.mxu0 %v852
    %v1637 = vpop.f32.mrf.mxu0
    %v1638 = vadd.f32 %v1349, %v1637
    %v1639 = vpop.f32.mrf.mxu0
    %v1640 = vpop.f32.mrf.mxu0
    %v1641 = vadd.f32 %v1352, %v1640
    %v1642 = vpop.f32.mrf.mxu0
    %1643 = vmatprep.mubr.bf16.mxu0 %v857
    %1644 = vmatmul.mubr.bf16.gmra.mxu0 %v856
    %v1645 = vpop.f32.mrf.mxu0
    %v1646 = vadd.f32 %v1357, %v1645
    %v1647 = vpop.f32.mrf.mxu0
    %v1648 = vpop.f32.mrf.mxu0
    %v1649 = vadd.f32 %v1360, %v1648
    %v1650 = vpop.f32.mrf.mxu0
    %1651 = vmatprep.mubr.bf16.mxu0 %v861
    %1652 = vmatmul.mubr.bf16.gmra.mxu0 %v860
    %v1653 = vpop.f32.mrf.mxu0
    %v1654 = vadd.f32 %v1365, %v1653
    %v1655 = vpop.f32.mrf.mxu0
    %v1656 = vpop.f32.mrf.mxu0
    %v1657 = vadd.f32 %v1368, %v1656
    %v1658 = vpop.f32.mrf.mxu0
    %1659 = vmatprep.mubr.bf16.mxu0 %v865
    %1660 = vmatmul.mubr.bf16.gmra.mxu0 %v864
    %v1661 = vpop.f32.mrf.mxu0
    %v1662 = vadd.f32 %v1373, %v1661
    %v1663 = vpop.f32.mrf.mxu0
    %v1664 = vpop.f32.mrf.mxu0
    %v1665 = vadd.f32 %v1376, %v1664
    %v1666 = vpop.f32.mrf.mxu0
    %1667 = vmatprep.mubr.bf16.mxu0 %v869
    %1668 = vmatmul.mubr.bf16.gmra.mxu0 %v868
    %v1669 = vpop.f32.mrf.mxu0
    %v1670 = vadd.f32 %v1381, %v1669
    %v1671 = vpop.f32.mrf.mxu0
    %v1672 = vpop.f32.mrf.mxu0
    %v1673 = vadd.f32 %v1384, %v1672
    %v1674 = vpop.f32.mrf.mxu0
    %1675 = vmatprep.mubr.bf16.mxu0 %v873
    %1676 = vmatmul.mubr.bf16.gmra.mxu0 %v872
    %v1677 = vpop.f32.mrf.mxu0
    %v1678 = vadd.f32 %v1389, %v1677
    %v1679 = vpop.f32.mrf.mxu0
    %v1680 = vpop.f32.mrf.mxu0
    %v1681 = vadd.f32 %v1392, %v1680
    %v1682 = vpop.f32.mrf.mxu0
    %1683 = vmatprep.mubr.bf16.mxu0 %v877
    %1684 = vmatmul.mubr.bf16.gmra.mxu0 %v876
    %v1685 = vpop.f32.mrf.mxu0
    %v1686 = vadd.f32 %v1397, %v1685
    %v1687 = vpop.f32.mrf.mxu0
    %v1688 = vpop.f32.mrf.mxu0
    %v1689 = vadd.f32 %v1400, %v1688
    %v1690 = vpop.f32.mrf.mxu0
    %1691 = vmatprep.mubr.bf16.mxu0 %v881
    %1692 = vmatmul.mubr.bf16.gmra.mxu0 %v880
    %v1693 = vpop.f32.mrf.mxu0
    %v1694 = vadd.f32 %v1405, %v1693
    %v1695 = vpop.f32.mrf.mxu0
    %v1696 = vpop.f32.mrf.mxu0
    %v1697 = vadd.f32 %v1408, %v1696
    %v1698 = vpop.f32.mrf.mxu0
    %1699 = vmatprep.mubr.bf16.mxu0 %v885
    %1700 = vmatmul.mubr.bf16.gmra.mxu0 %v884
    %v1701 = vpop.f32.mrf.mxu0
    %v1702 = vadd.f32 %v1413, %v1701
    %v1703 = vpop.f32.mrf.mxu0
    %v1704 = vpop.f32.mrf.mxu0
    %v1705 = vadd.f32 %v1416, %v1704
    %v1706 = vpop.f32.mrf.mxu0
    %1707 = vmatprep.mubr.bf16.mxu0 %v889
    %1708 = vmatmul.mubr.bf16.gmra.mxu0 %v888
    %v1709 = vpop.f32.mrf.mxu0
    %v1710 = vadd.f32 %v1421, %v1709
    %v1711 = vpop.f32.mrf.mxu0
    %v1712 = vpop.f32.mrf.mxu0
    %v1713 = vadd.f32 %v1424, %v1712
    %v1714 = vpop.f32.mrf.mxu0
    %1715 = vmatprep.mubr.bf16.mxu0 %v893
    %1716 = vmatmul.mubr.bf16.gmra.mxu0 %v892
    %v1717 = vpop.f32.mrf.mxu0
    %v1718 = vadd.f32 %v1429, %v1717
    %v1719 = vpop.f32.mrf.mxu0
    %v1720 = vpop.f32.mrf.mxu0
    %v1721 = vadd.f32 %v1432, %v1720
    %v1722 = vpop.f32.mrf.mxu0
    %1723 = vmatprep.mubr.bf16.mxu0 %v897
    %1724 = vmatmul.mubr.bf16.gmra.mxu0 %v896
    %v1725 = vpop.f32.mrf.mxu0
    %v1726 = vadd.f32 %v1437, %v1725
    %v1727 = vpop.f32.mrf.mxu0
    %v1728 = vpop.f32.mrf.mxu0
    %v1729 = vadd.f32 %v1440, %v1728
    %v1730 = vpop.f32.mrf.mxu0
    %1731 = vmatprep.mubr.bf16.mxu0 %v901
    %1732 = vmatmul.mubr.bf16.gmra.mxu0 %v900
    %v1733 = vpop.f32.mrf.mxu0
    %v1734 = vadd.f32 %v1445, %v1733
    %v1735 = vpop.f32.mrf.mxu0
    %v1736 = vpop.f32.mrf.mxu0
    %v1737 = vadd.f32 %v1448, %v1736
    %v1738 = vpop.f32.mrf.mxu0
    %1739 = vmatprep.mubr.bf16.mxu0 %v905
    %1740 = vmatmul.mubr.bf16.gmra.mxu0 %v904
    %v1741 = vpop.f32.mrf.mxu0
    %v1742 = vadd.f32 %v1453, %v1741
    %v1743 = vpop.f32.mrf.mxu0
    %v1744 = vpop.f32.mrf.mxu0
    %v1745 = vadd.f32 %v1456, %v1744
    %v1746 = vpop.f32.mrf.mxu0
    %1747 = vmatprep.mubr.bf16.mxu0 %v909
    %1748 = vmatmul.mubr.bf16.gmra.mxu0 %v908
    %v1749 = vpop.f32.mrf.mxu0
    %v1750 = vadd.f32 %v1461, %v1749
    %v1751 = vpop.f32.mrf.mxu0
    %v1752 = vpop.f32.mrf.mxu0
    %v1753 = vadd.f32 %v1464, %v1752
    %v1754 = vpop.f32.mrf.mxu0
    %1755 = vmatprep.mubr.bf16.mxu0 %v913
    %1756 = vmatmul.mubr.bf16.gmra.mxu0 %v912
    %v1757 = vpop.f32.mrf.mxu0
    %v1758 = vadd.f32 %v1469, %v1757
    %v1759 = vpop.f32.mrf.mxu0
    %v1760 = vpop.f32.mrf.mxu0
    %v1761 = vadd.f32 %v1472, %v1760
    %v1762 = vpop.f32.mrf.mxu0
    %1763 = vmatprep.mubr.bf16.mxu0 %v917
    %1764 = vmatmul.mubr.bf16.gmra.mxu0 %v916
    %v1765 = vpop.f32.mrf.mxu0
    %v1766 = vadd.f32 %v1477, %v1765
    %v1767 = vpop.f32.mrf.mxu0
    %v1768 = vpop.f32.mrf.mxu0
    %v1769 = vadd.f32 %v1480, %v1768
    %v1770 = vpop.f32.mrf.mxu0
    %1771 = vmatprep.mubr.bf16.mxu0 %v921
    %1772 = vmatmul.mubr.bf16.gmra.mxu0 %v920
    %v1773 = vpop.f32.mrf.mxu0
    %v1774 = vadd.f32 %v1485, %v1773
    %v1775 = vpop.f32.mrf.mxu0
    %v1776 = vpop.f32.mrf.mxu0
    %v1777 = vadd.f32 %v1488, %v1776
    %v1778 = vpop.f32.mrf.mxu0
    %1779 = vmatprep.mubr.bf16.mxu0 %v925
    %1780 = vmatmul.mubr.bf16.gmra.mxu0 %v924
    %v1781 = vpop.f32.mrf.mxu0
    %v1782 = vadd.f32 %v1493, %v1781
    %v1783 = vpop.f32.mrf.mxu0
    %v1784 = vpop.f32.mrf.mxu0
    %v1785 = vadd.f32 %v1496, %v1784
    %v1786 = vpop.f32.mrf.mxu0
    %1787 = vmatprep.mubr.bf16.mxu0 %v929
    %1788 = vmatmul.mubr.bf16.gmra.mxu0 %v928
    %v1789 = vpop.f32.mrf.mxu0
    %v1790 = vadd.f32 %v1501, %v1789
    %v1791 = vpop.f32.mrf.mxu0
    %v1792 = vpop.f32.mrf.mxu0
    %v1793 = vadd.f32 %v1504, %v1792
    %v1794 = vpop.f32.mrf.mxu0
    %1795 = vmatprep.mubr.bf16.mxu0 %v933
    %1796 = vmatmul.mubr.bf16.gmra.mxu0 %v932
    %v1797 = vpop.f32.mrf.mxu0
    %v1798 = vadd.f32 %v1509, %v1797
    %v1799 = vpop.f32.mrf.mxu0
    %v1800 = vpop.f32.mrf.mxu0
    %v1801 = vadd.f32 %v1512, %v1800
    %v1802 = vpop.f32.mrf.mxu0
    %1803 = vmatprep.mubr.bf16.mxu0 %v937
    %1804 = vmatmul.mubr.bf16.gmra.mxu0 %v936
    %v1805 = vpop.f32.mrf.mxu0
    %v1806 = vadd.f32 %v1517, %v1805
    %v1807 = vpop.f32.mrf.mxu0
    %v1808 = vpop.f32.mrf.mxu0
    %v1809 = vadd.f32 %v1520, %v1808
    %v1810 = vpop.f32.mrf.mxu0
    %1811 = vmatprep.mubr.bf16.mxu0 %v941
    %1812 = vmatmul.mubr.bf16.gmra.mxu0 %v940
    %v1813 = vpop.f32.mrf.mxu0
    %v1814 = vadd.f32 %v1525, %v1813
    %v1815 = vpop.f32.mrf.mxu0
    %v1816 = vpop.f32.mrf.mxu0
    %v1817 = vadd.f32 %v1528, %v1816
    %v1818 = vpop.f32.mrf.mxu0
    %1819 = vmatprep.mubr.bf16.mxu0 %v945
    %1820 = vmatmul.mubr.bf16.gmra.mxu0 %v944
    %v1821 = vpop.f32.mrf.mxu0
    %v1822 = vadd.f32 %v1533, %v1821
    %v1823 = vpop.f32.mrf.mxu0
    %v1824 = vpop.f32.mrf.mxu0
    %v1825 = vadd.f32 %v1536, %v1824
    %v1826 = vpop.f32.mrf.mxu0
    %1827 = vmatprep.mubr.bf16.mxu0 %v949
    %1828 = vmatmul.mubr.bf16.gmra.mxu0 %v948
    %v1829 = vpop.f32.mrf.mxu0
    %v1830 = vadd.f32 %v1541, %v1829
    %v1831 = vpop.f32.mrf.mxu0
    %v1832 = vpop.f32.mrf.mxu0
    %v1833 = vadd.f32 %v1544, %v1832
    %v1834 = vpop.f32.mrf.mxu0
    %1835 = vmatprep.mubr.bf16.mxu0 %v953
    %1836 = vmatmul.mubr.bf16.gmra.mxu0 %v952
    %v1837 = vpop.f32.mrf.mxu0
    %v1838 = vadd.f32 %v1549, %v1837
    %v1839 = vpop.f32.mrf.mxu0
    %v1840 = vpop.f32.mrf.mxu0
    %v1841 = vadd.f32 %v1552, %v1840
    %v1842 = vpop.f32.mrf.mxu0
    %1843 = vmatprep.mubr.bf16.mxu0 %v957
    %1844 = vmatmul.mubr.bf16.gmra.mxu0 %v956
    %v1845 = vpop.f32.mrf.mxu0
    %v1846 = vadd.f32 %v1557, %v1845
    %v1847 = vpop.f32.mrf.mxu0
    %v1848 = vpop.f32.mrf.mxu0
    %v1849 = vadd.f32 %v1560, %v1848
    %v1850 = vpop.f32.mrf.mxu0
    %1851 = vmatprep.mubr.bf16.mxu0 %v961
    %1852 = vmatmul.mubr.bf16.gmra.mxu0 %v960
    %v1853 = vpop.f32.mrf.mxu0
    %v1854 = vadd.f32 %v1565, %v1853
    %v1855 = vpop.f32.mrf.mxu0
    %v1856 = vpop.f32.mrf.mxu0
    %v1857 = vadd.f32 %v1568, %v1856
    %v1858 = vpop.f32.mrf.mxu0
    %1859 = vdwg.mxu0
    %v1860 = vpack.c.bf16 %v1609, %v1606
    %v1861 = vpack.c.bf16 %v1617, %v1614
    %v1862 = vpack.c.bf16 %v1625, %v1622
    %v1863 = vpack.c.bf16 %v1633, %v1630
    %v1864 = vpack.c.bf16 %v1641, %v1638
    %v1865 = vpack.c.bf16 %v1649, %v1646
    %v1866 = vpack.c.bf16 %v1657, %v1654
    %v1867 = vpack.c.bf16 %v1665, %v1662
    %v1868 = vpack.c.bf16 %v1673, %v1670
    %v1869 = vpack.c.bf16 %v1681, %v1678
    %v1870 = vpack.c.bf16 %v1689, %v1686
    %v1871 = vpack.c.bf16 %v1697, %v1694
    %v1872 = vpack.c.bf16 %v1705, %v1702
    %v1873 = vpack.c.bf16 %v1713, %v1710
    %v1874 = vpack.c.bf16 %v1721, %v1718
    %v1875 = vpack.c.bf16 %v1729, %v1726
    %v1876 = vpack.c.bf16 %v1737, %v1734
    %v1877 = vpack.c.bf16 %v1745, %v1742
    %v1878 = vpack.c.bf16 %v1753, %v1750
    %v1879 = vpack.c.bf16 %v1761, %v1758
    %v1880 = vpack.c.bf16 %v1769, %v1766
    %v1881 = vpack.c.bf16 %v1777, %v1774
    %v1882 = vpack.c.bf16 %v1785, %v1782
    %v1883 = vpack.c.bf16 %v1793, %v1790
    %v1884 = vpack.c.bf16 %v1801, %v1798
    %v1885 = vpack.c.bf16 %v1809, %v1806
    %v1886 = vpack.c.bf16 %v1817, %v1814
    %v1887 = vpack.c.bf16 %v1825, %v1822
    %v1888 = vpack.c.bf16 %v1833, %v1830
    %v1889 = vpack.c.bf16 %v1841, %v1838
    %v1890 = vpack.c.bf16 %v1849, %v1846
    %v1891 = vpack.c.bf16 %v1857, %v1854
    %v1893 = vlaneseq
    %v1894 = vshrl.u32 %v1893, 7
    %v1895 = vsub.s32 0, %v1894
    %v1896 = vrot.slane %v384, %v1895
    %v1914 = vunpack.c.l.b16 %v352
    %v1915 = vunpack.c.l.b16 %v353
    %v1916 = vunpack.c.l.b16 %v354
    %v1917 = vunpack.c.l.b16 %v355
    %v1918 = vunpack.c.l.b16 %v356
    %v1919 = vunpack.c.l.b16 %v357
    %v1920 = vunpack.c.l.b16 %v358
    %v1921 = vunpack.c.l.b16 %v359
    %v1922 = vunpack.c.l.b16 %v360
    %v1923 = vunpack.c.l.b16 %v361
    %v1924 = vunpack.c.l.b16 %v362
    %v1925 = vunpack.c.l.b16 %v363
    %v1926 = vunpack.c.l.b16 %v364
    %v1927 = vunpack.c.l.b16 %v365
    %v1928 = vunpack.c.l.b16 %v366
    %v1929 = vunpack.c.l.b16 %v367
    %v1930 = vpack.c.b16 %v1915, %v1914
    %v1931 = vpack.c.b16 %v1917, %v1916
    %v1932 = vpack.c.b16 %v1919, %v1918
    %v1933 = vpack.c.b16 %v1921, %v1920
    %v1934 = vpack.c.b16 %v1923, %v1922
    %v1935 = vpack.c.b16 %v1925, %v1924
    %v1936 = vpack.c.b16 %v1927, %v1926
    %v1937 = vpack.c.b16 %v1929, %v1928
    %1946 = vmatprep.subr.bf16.mxu0 0
    %1947 = vmatpush1.bf16.msra.mxu0 %v1937
    %1948 = vmatprep.subr.bf16.mxu0 0
    %1949 = vmatpush1.bf16.msra.mxu0 %v1936
    %1950 = vmatprep.subr.bf16.mxu0 0
    %1951 = vmatpush1.bf16.msra.mxu0 %v1935
    %1952 = vmatprep.subr.bf16.mxu0 0
    %1953 = vmatpush1.bf16.msra.mxu0 %v1934
    %1954 = vmatprep.subr.bf16.mxu0 0
    %1955 = vmatpush1.bf16.msra.mxu0 %v1933
    %1956 = vmatprep.subr.bf16.mxu0 0
    %1957 = vmatpush1.bf16.msra.mxu0 %v1932
    %1958 = vmatprep.subr.bf16.mxu0 0
    %1959 = vmatpush1.bf16.msra.mxu0 %v1931
    %1960 = vmatprep.subr.bf16.mxu0 0
    %1961 = vmatpush1.bf16.msra.mxu0 %v1930
    %1962 = vmatprep.subr.bf16.mxu0 0
    %1963 = vmatpush2.bf16.msra.mxu0 0
    %1964 = vmatprep.subr.bf16.mxu0 0
    %1965 = vmatpush2.bf16.msra.mxu0 0
    %1966 = vmatprep.subr.bf16.mxu0 0
    %1967 = vmatpush2.bf16.msra.mxu0 0
    %1968 = vmatprep.subr.bf16.mxu0 0
    %1969 = vmatpush2.bf16.msra.mxu0 0
    %1970 = vmatprep.subr.bf16.mxu0 0
    %1971 = vmatpush2.bf16.msra.mxu0 0
    %1972 = vmatprep.subr.bf16.mxu0 0
    %1973 = vmatpush2.bf16.msra.mxu0 0
    %1974 = vmatprep.subr.bf16.mxu0 0
    %1975 = vmatpush2.bf16.msra.mxu0 0
    %1976 = vmatprep.subr.bf16.mxu0 0
    %1977 = vmatpush2.bf16.msra.mxu0 0
    %1978 = vmatprep.mubr.bf16.mxu0 0
    %1979 = vmatmul.mubr.bf16.gmra.mxu0 %v1860
    %v1980 = vpop.f32.mrf.mxu0
    %v1981 = vadd.f32 %v1896, %v1980
    %v1982 = vpop.f32.mrf.mxu0
    %v1983 = vpop.f32.mrf.mxu0
    %v1984 = vadd.f32 %v1896, %v1983
    %v1985 = vpop.f32.mrf.mxu0
    %1986 = vmatprep.mubr.bf16.mxu0 0
    %1987 = vmatmul.mubr.bf16.gmra.mxu0 %v1861
    %v1988 = vpop.f32.mrf.mxu0
    %v1989 = vadd.f32 %v1896, %v1988
    %v1990 = vpop.f32.mrf.mxu0
    %v1991 = vpop.f32.mrf.mxu0
    %v1992 = vadd.f32 %v1896, %v1991
    %v1993 = vpop.f32.mrf.mxu0
    %1994 = vmatprep.mubr.bf16.mxu0 0
    %1995 = vmatmul.mubr.bf16.gmra.mxu0 %v1862
    %v1996 = vpop.f32.mrf.mxu0
    %v1997 = vadd.f32 %v1896, %v1996
    %v1998 = vpop.f32.mrf.mxu0
    %v1999 = vpop.f32.mrf.mxu0
    %v2000 = vadd.f32 %v1896, %v1999
    %v2001 = vpop.f32.mrf.mxu0
    %2002 = vmatprep.mubr.bf16.mxu0 0
    %2003 = vmatmul.mubr.bf16.gmra.mxu0 %v1863
    %v2004 = vpop.f32.mrf.mxu0
    %v2005 = vadd.f32 %v1896, %v2004
    %v2006 = vpop.f32.mrf.mxu0
    %v2007 = vpop.f32.mrf.mxu0
    %v2008 = vadd.f32 %v1896, %v2007
    %v2009 = vpop.f32.mrf.mxu0
    %2010 = vmatprep.mubr.bf16.mxu0 0
    %2011 = vmatmul.mubr.bf16.gmra.mxu0 %v1864
    %v2012 = vpop.f32.mrf.mxu0
    %v2013 = vadd.f32 %v1896, %v2012
    %v2014 = vpop.f32.mrf.mxu0
    %v2015 = vpop.f32.mrf.mxu0
    %v2016 = vadd.f32 %v1896, %v2015
    %v2017 = vpop.f32.mrf.mxu0
    %2018 = vmatprep.mubr.bf16.mxu0 0
    %2019 = vmatmul.mubr.bf16.gmra.mxu0 %v1865
    %v2020 = vpop.f32.mrf.mxu0
    %v2021 = vadd.f32 %v1896, %v2020
    %v2022 = vpop.f32.mrf.mxu0
    %v2023 = vpop.f32.mrf.mxu0
    %v2024 = vadd.f32 %v1896, %v2023
    %v2025 = vpop.f32.mrf.mxu0
    %2026 = vmatprep.mubr.bf16.mxu0 0
    %2027 = vmatmul.mubr.bf16.gmra.mxu0 %v1866
    %v2028 = vpop.f32.mrf.mxu0
    %v2029 = vadd.f32 %v1896, %v2028
    %v2030 = vpop.f32.mrf.mxu0
    %v2031 = vpop.f32.mrf.mxu0
    %v2032 = vadd.f32 %v1896, %v2031
    %v2033 = vpop.f32.mrf.mxu0
    %2034 = vmatprep.mubr.bf16.mxu0 0
    %2035 = vmatmul.mubr.bf16.gmra.mxu0 %v1867
    %v2036 = vpop.f32.mrf.mxu0
    %v2037 = vadd.f32 %v1896, %v2036
    %v2038 = vpop.f32.mrf.mxu0
    %v2039 = vpop.f32.mrf.mxu0
    %v2040 = vadd.f32 %v1896, %v2039
    %v2041 = vpop.f32.mrf.mxu0
    %2042 = vmatprep.mubr.bf16.mxu0 0
    %2043 = vmatmul.mubr.bf16.gmra.mxu0 %v1868
    %v2044 = vpop.f32.mrf.mxu0
    %v2045 = vadd.f32 %v1896, %v2044
    %v2046 = vpop.f32.mrf.mxu0
    %v2047 = vpop.f32.mrf.mxu0
    %v2048 = vadd.f32 %v1896, %v2047
    %v2049 = vpop.f32.mrf.mxu0
    %2050 = vmatprep.mubr.bf16.mxu0 0
    %2051 = vmatmul.mubr.bf16.gmra.mxu0 %v1869
    %v2052 = vpop.f32.mrf.mxu0
    %v2053 = vadd.f32 %v1896, %v2052
    %v2054 = vpop.f32.mrf.mxu0
    %v2055 = vpop.f32.mrf.mxu0
    %v2056 = vadd.f32 %v1896, %v2055
    %v2057 = vpop.f32.mrf.mxu0
    %2058 = vmatprep.mubr.bf16.mxu0 0
    %2059 = vmatmul.mubr.bf16.gmra.mxu0 %v1870
    %v2060 = vpop.f32.mrf.mxu0
    %v2061 = vadd.f32 %v1896, %v2060
    %v2062 = vpop.f32.mrf.mxu0
    %v2063 = vpop.f32.mrf.mxu0
    %v2064 = vadd.f32 %v1896, %v2063
    %v2065 = vpop.f32.mrf.mxu0
    %2066 = vmatprep.mubr.bf16.mxu0 0
    %2067 = vmatmul.mubr.bf16.gmra.mxu0 %v1871
    %v2068 = vpop.f32.mrf.mxu0
    %v2069 = vadd.f32 %v1896, %v2068
    %v2070 = vpop.f32.mrf.mxu0
    %v2071 = vpop.f32.mrf.mxu0
    %v2072 = vadd.f32 %v1896, %v2071
    %v2073 = vpop.f32.mrf.mxu0
    %2074 = vmatprep.mubr.bf16.mxu0 0
    %2075 = vmatmul.mubr.bf16.gmra.mxu0 %v1872
    %v2076 = vpop.f32.mrf.mxu0
    %v2077 = vadd.f32 %v1896, %v2076
    %v2078 = vpop.f32.mrf.mxu0
    %v2079 = vpop.f32.mrf.mxu0
    %v2080 = vadd.f32 %v1896, %v2079
    %v2081 = vpop.f32.mrf.mxu0
    %2082 = vmatprep.mubr.bf16.mxu0 0
    %2083 = vmatmul.mubr.bf16.gmra.mxu0 %v1873
    %v2084 = vpop.f32.mrf.mxu0
    %v2085 = vadd.f32 %v1896, %v2084
    %v2086 = vpop.f32.mrf.mxu0
    %v2087 = vpop.f32.mrf.mxu0
    %v2088 = vadd.f32 %v1896, %v2087
    %v2089 = vpop.f32.mrf.mxu0
    %2090 = vmatprep.mubr.bf16.mxu0 0
    %2091 = vmatmul.mubr.bf16.gmra.mxu0 %v1874
    %v2092 = vpop.f32.mrf.mxu0
    %v2093 = vadd.f32 %v1896, %v2092
    %v2094 = vpop.f32.mrf.mxu0
    %v2095 = vpop.f32.mrf.mxu0
    %v2096 = vadd.f32 %v1896, %v2095
    %v2097 = vpop.f32.mrf.mxu0
    %2098 = vmatprep.mubr.bf16.mxu0 0
    %2099 = vmatmul.mubr.bf16.gmra.mxu0 %v1875
    %v2100 = vpop.f32.mrf.mxu0
    %v2101 = vadd.f32 %v1896, %v2100
    %v2102 = vpop.f32.mrf.mxu0
    %v2103 = vpop.f32.mrf.mxu0
    %v2104 = vadd.f32 %v1896, %v2103
    %v2105 = vpop.f32.mrf.mxu0
    %2106 = vmatprep.mubr.bf16.mxu0 0
    %2107 = vmatmul.mubr.bf16.gmra.mxu0 %v1876
    %v2108 = vpop.f32.mrf.mxu0
    %v2109 = vadd.f32 %v1896, %v2108
    %v2110 = vpop.f32.mrf.mxu0
    %v2111 = vpop.f32.mrf.mxu0
    %v2112 = vadd.f32 %v1896, %v2111
    %v2113 = vpop.f32.mrf.mxu0
    %2114 = vmatprep.mubr.bf16.mxu0 0
    %2115 = vmatmul.mubr.bf16.gmra.mxu0 %v1877
    %v2116 = vpop.f32.mrf.mxu0
    %v2117 = vadd.f32 %v1896, %v2116
    %v2118 = vpop.f32.mrf.mxu0
    %v2119 = vpop.f32.mrf.mxu0
    %v2120 = vadd.f32 %v1896, %v2119
    %v2121 = vpop.f32.mrf.mxu0
    %2122 = vmatprep.mubr.bf16.mxu0 0
    %2123 = vmatmul.mubr.bf16.gmra.mxu0 %v1878
    %v2124 = vpop.f32.mrf.mxu0
    %v2125 = vadd.f32 %v1896, %v2124
    %v2126 = vpop.f32.mrf.mxu0
    %v2127 = vpop.f32.mrf.mxu0
    %v2128 = vadd.f32 %v1896, %v2127
    %v2129 = vpop.f32.mrf.mxu0
    %2130 = vmatprep.mubr.bf16.mxu0 0
    %2131 = vmatmul.mubr.bf16.gmra.mxu0 %v1879
    %v2132 = vpop.f32.mrf.mxu0
    %v2133 = vadd.f32 %v1896, %v2132
    %v2134 = vpop.f32.mrf.mxu0
    %v2135 = vpop.f32.mrf.mxu0
    %v2136 = vadd.f32 %v1896, %v2135
    %v2137 = vpop.f32.mrf.mxu0
    %2138 = vmatprep.mubr.bf16.mxu0 0
    %2139 = vmatmul.mubr.bf16.gmra.mxu0 %v1880
    %v2140 = vpop.f32.mrf.mxu0
    %v2141 = vadd.f32 %v1896, %v2140
    %v2142 = vpop.f32.mrf.mxu0
    %v2143 = vpop.f32.mrf.mxu0
    %v2144 = vadd.f32 %v1896, %v2143
    %v2145 = vpop.f32.mrf.mxu0
    %2146 = vmatprep.mubr.bf16.mxu0 0
    %2147 = vmatmul.mubr.bf16.gmra.mxu0 %v1881
    %v2148 = vpop.f32.mrf.mxu0
    %v2149 = vadd.f32 %v1896, %v2148
    %v2150 = vpop.f32.mrf.mxu0
    %v2151 = vpop.f32.mrf.mxu0
    %v2152 = vadd.f32 %v1896, %v2151
    %v2153 = vpop.f32.mrf.mxu0
    %2154 = vmatprep.mubr.bf16.mxu0 0
    %2155 = vmatmul.mubr.bf16.gmra.mxu0 %v1882
    %v2156 = vpop.f32.mrf.mxu0
    %v2157 = vadd.f32 %v1896, %v2156
    %v2158 = vpop.f32.mrf.mxu0
    %v2159 = vpop.f32.mrf.mxu0
    %v2160 = vadd.f32 %v1896, %v2159
    %v2161 = vpop.f32.mrf.mxu0
    %2162 = vmatprep.mubr.bf16.mxu0 0
    %2163 = vmatmul.mubr.bf16.gmra.mxu0 %v1883
    %v2164 = vpop.f32.mrf.mxu0
    %v2165 = vadd.f32 %v1896, %v2164
    %v2166 = vpop.f32.mrf.mxu0
    %v2167 = vpop.f32.mrf.mxu0
    %v2168 = vadd.f32 %v1896, %v2167
    %v2169 = vpop.f32.mrf.mxu0
    %2170 = vmatprep.mubr.bf16.mxu0 0
    %2171 = vmatmul.mubr.bf16.gmra.mxu0 %v1884
    %v2172 = vpop.f32.mrf.mxu0
    %v2173 = vadd.f32 %v1896, %v2172
    %v2174 = vpop.f32.mrf.mxu0
    %v2175 = vpop.f32.mrf.mxu0
    %v2176 = vadd.f32 %v1896, %v2175
    %v2177 = vpop.f32.mrf.mxu0
    %2178 = vmatprep.mubr.bf16.mxu0 0
    %2179 = vmatmul.mubr.bf16.gmra.mxu0 %v1885
    %v2180 = vpop.f32.mrf.mxu0
    %v2181 = vadd.f32 %v1896, %v2180
    %v2182 = vpop.f32.mrf.mxu0
    %v2183 = vpop.f32.mrf.mxu0
    %v2184 = vadd.f32 %v1896, %v2183
    %v2185 = vpop.f32.mrf.mxu0
    %2186 = vmatprep.mubr.bf16.mxu0 0
    %2187 = vmatmul.mubr.bf16.gmra.mxu0 %v1886
    %v2188 = vpop.f32.mrf.mxu0
    %v2189 = vadd.f32 %v1896, %v2188
    %v2190 = vpop.f32.mrf.mxu0
    %v2191 = vpop.f32.mrf.mxu0
    %v2192 = vadd.f32 %v1896, %v2191
    %v2193 = vpop.f32.mrf.mxu0
    %2194 = vmatprep.mubr.bf16.mxu0 0
    %2195 = vmatmul.mubr.bf16.gmra.mxu0 %v1887
    %v2196 = vpop.f32.mrf.mxu0
    %v2197 = vadd.f32 %v1896, %v2196
    %v2198 = vpop.f32.mrf.mxu0
    %v2199 = vpop.f32.mrf.mxu0
    %v2200 = vadd.f32 %v1896, %v2199
    %v2201 = vpop.f32.mrf.mxu0
    %2202 = vmatprep.mubr.bf16.mxu0 0
    %2203 = vmatmul.mubr.bf16.gmra.mxu0 %v1888
    %v2204 = vpop.f32.mrf.mxu0
    %v2205 = vadd.f32 %v1896, %v2204
    %v2206 = vpop.f32.mrf.mxu0
    %v2207 = vpop.f32.mrf.mxu0
    %v2208 = vadd.f32 %v1896, %v2207
    %v2209 = vpop.f32.mrf.mxu0
    %2210 = vmatprep.mubr.bf16.mxu0 0
    %2211 = vmatmul.mubr.bf16.gmra.mxu0 %v1889
    %v2212 = vpop.f32.mrf.mxu0
    %v2213 = vadd.f32 %v1896, %v2212
    %v2214 = vpop.f32.mrf.mxu0
    %v2215 = vpop.f32.mrf.mxu0
    %v2216 = vadd.f32 %v1896, %v2215
    %v2217 = vpop.f32.mrf.mxu0
    %2218 = vmatprep.mubr.bf16.mxu0 0
    %2219 = vmatmul.mubr.bf16.gmra.mxu0 %v1890
    %v2220 = vpop.f32.mrf.mxu0
    %v2221 = vadd.f32 %v1896, %v2220
    %v2222 = vpop.f32.mrf.mxu0
    %v2223 = vpop.f32.mrf.mxu0
    %v2224 = vadd.f32 %v1896, %v2223
    %v2225 = vpop.f32.mrf.mxu0
    %2226 = vmatprep.mubr.bf16.mxu0 0
    %2227 = vmatmul.mubr.bf16.gmra.mxu0 %v1891
    %v2228 = vpop.f32.mrf.mxu0
    %v2229 = vadd.f32 %v1896, %v2228
    %v2230 = vpop.f32.mrf.mxu0
    %v2231 = vpop.f32.mrf.mxu0
    %v2232 = vadd.f32 %v1896, %v2231
    %v2233 = vpop.f32.mrf.mxu0
    %2234 = vdwg.mxu0
    %v2235 = vmax.f32 %v1981, 0.0
    %v2236 = vmax.f32 %v1984, 0.0
    %v2237 = vmax.f32 %v1989, 0.0
    %v2238 = vmax.f32 %v1992, 0.0
    %v2239 = vmax.f32 %v1997, 0.0
    %v2240 = vmax.f32 %v2000, 0.0
    %v2241 = vmax.f32 %v2005, 0.0
    %v2242 = vmax.f32 %v2008, 0.0
    %v2243 = vmax.f32 %v2013, 0.0
    %v2244 = vmax.f32 %v2016, 0.0
    %v2245 = vmax.f32 %v2021, 0.0
    %v2246 = vmax.f32 %v2024, 0.0
    %v2247 = vmax.f32 %v2029, 0.0
    %v2248 = vmax.f32 %v2032, 0.0
    %v2249 = vmax.f32 %v2037, 0.0
    %v2250 = vmax.f32 %v2040, 0.0
    %v2251 = vmax.f32 %v2045, 0.0
    %v2252 = vmax.f32 %v2048, 0.0
    %v2253 = vmax.f32 %v2053, 0.0
    %v2254 = vmax.f32 %v2056, 0.0
    %v2255 = vmax.f32 %v2061, 0.0
    %v2256 = vmax.f32 %v2064, 0.0
    %v2257 = vmax.f32 %v2069, 0.0
    %v2258 = vmax.f32 %v2072, 0.0
    %v2259 = vmax.f32 %v2077, 0.0
    %v2260 = vmax.f32 %v2080, 0.0
    %v2261 = vmax.f32 %v2085, 0.0
    %v2262 = vmax.f32 %v2088, 0.0
    %v2263 = vmax.f32 %v2093, 0.0
    %v2264 = vmax.f32 %v2096, 0.0
    %v2265 = vmax.f32 %v2101, 0.0
    %v2266 = vmax.f32 %v2104, 0.0
    %v2267 = vmax.f32 %v2109, 0.0
    %v2268 = vmax.f32 %v2112, 0.0
    %v2269 = vmax.f32 %v2117, 0.0
    %v2270 = vmax.f32 %v2120, 0.0
    %v2271 = vmax.f32 %v2125, 0.0
    %v2272 = vmax.f32 %v2128, 0.0
    %v2273 = vmax.f32 %v2133, 0.0
    %v2274 = vmax.f32 %v2136, 0.0
    %v2275 = vmax.f32 %v2141, 0.0
    %v2276 = vmax.f32 %v2144, 0.0
    %v2277 = vmax.f32 %v2149, 0.0
    %v2278 = vmax.f32 %v2152, 0.0
    %v2279 = vmax.f32 %v2157, 0.0
    %v2280 = vmax.f32 %v2160, 0.0
    %v2281 = vmax.f32 %v2165, 0.0
    %v2282 = vmax.f32 %v2168, 0.0
    %v2283 = vmax.f32 %v2173, 0.0
    %v2284 = vmax.f32 %v2176, 0.0
    %v2285 = vmax.f32 %v2181, 0.0
    %v2286 = vmax.f32 %v2184, 0.0
    %v2287 = vmax.f32 %v2189, 0.0
    %v2288 = vmax.f32 %v2192, 0.0
    %v2289 = vmax.f32 %v2197, 0.0
    %v2290 = vmax.f32 %v2200, 0.0
    %v2291 = vmax.f32 %v2205, 0.0
    %v2292 = vmax.f32 %v2208, 0.0
    %v2293 = vmax.f32 %v2213, 0.0
    %v2294 = vmax.f32 %v2216, 0.0
    %v2295 = vmax.f32 %v2221, 0.0
    %v2296 = vmax.f32 %v2224, 0.0
    %v2297 = vmax.f32 %v2229, 0.0
    %v2298 = vmax.f32 %v2232, 0.0
    %v2299 = vpack.c.bf16 %v2236, %v2235
    %v2300 = vpack.c.bf16 %v2238, %v2237
    %v2301 = vpack.c.bf16 %v2240, %v2239
    %v2302 = vpack.c.bf16 %v2242, %v2241
    %v2303 = vpack.c.bf16 %v2244, %v2243
    %v2304 = vpack.c.bf16 %v2246, %v2245
    %v2305 = vpack.c.bf16 %v2248, %v2247
    %v2306 = vpack.c.bf16 %v2250, %v2249
    %v2307 = vpack.c.bf16 %v2252, %v2251
    %v2308 = vpack.c.bf16 %v2254, %v2253
    %v2309 = vpack.c.bf16 %v2256, %v2255
    %v2310 = vpack.c.bf16 %v2258, %v2257
    %v2311 = vpack.c.bf16 %v2260, %v2259
    %v2312 = vpack.c.bf16 %v2262, %v2261
    %v2313 = vpack.c.bf16 %v2264, %v2263
    %v2314 = vpack.c.bf16 %v2266, %v2265
    %v2315 = vpack.c.bf16 %v2268, %v2267
    %v2316 = vpack.c.bf16 %v2270, %v2269
    %v2317 = vpack.c.bf16 %v2272, %v2271
    %v2318 = vpack.c.bf16 %v2274, %v2273
    %v2319 = vpack.c.bf16 %v2276, %v2275
    %v2320 = vpack.c.bf16 %v2278, %v2277
    %v2321 = vpack.c.bf16 %v2280, %v2279
    %v2322 = vpack.c.bf16 %v2282, %v2281
    %v2323 = vpack.c.bf16 %v2284, %v2283
    %v2324 = vpack.c.bf16 %v2286, %v2285
    %v2325 = vpack.c.bf16 %v2288, %v2287
    %v2326 = vpack.c.bf16 %v2290, %v2289
    %v2327 = vpack.c.bf16 %v2292, %v2291
    %v2328 = vpack.c.bf16 %v2294, %v2293
    %v2329 = vpack.c.bf16 %v2296, %v2295
    %v2330 = vpack.c.bf16 %v2298, %v2297
    %2331 = vmatprep.subr.bf16.mxu0 0
    %2332 = vmatpush1.bf16.msra.mxu0 %v2306
    %2333 = vmatprep.subr.bf16.mxu0 0
    %2334 = vmatpush1.bf16.msra.mxu0 %v2305
    %2335 = vmatprep.subr.bf16.mxu0 0
    %2336 = vmatpush1.bf16.msra.mxu0 %v2304
    %2337 = vmatprep.subr.bf16.mxu0 0
    %2338 = vmatpush1.bf16.msra.mxu0 %v2303
    %2339 = vmatprep.subr.bf16.mxu0 0
    %2340 = vmatpush1.bf16.msra.mxu0 %v2302
    %2341 = vmatprep.subr.bf16.mxu0 0
    %2342 = vmatpush1.bf16.msra.mxu0 %v2301
    %2343 = vmatprep.subr.bf16.mxu0 0
    %2344 = vmatpush1.bf16.msra.mxu0 %v2300
    %2345 = vmatprep.subr.bf16.mxu0 0
    %2346 = vmatpush1.bf16.msra.mxu0 %v2299
    %2347 = vmatprep.subr.bf16.mxu0 0
    %2348 = vmatpush2.bf16.msra.mxu0 %v2314
    %2349 = vmatprep.subr.bf16.mxu0 0
    %2350 = vmatpush2.bf16.msra.mxu0 %v2313
    %2351 = vmatprep.subr.bf16.mxu0 0
    %2352 = vmatpush2.bf16.msra.mxu0 %v2312
    %2353 = vmatprep.subr.bf16.mxu0 0
    %2354 = vmatpush2.bf16.msra.mxu0 %v2311
    %2355 = vmatprep.subr.bf16.mxu0 0
    %2356 = vmatpush2.bf16.msra.mxu0 %v2310
    %2357 = vmatprep.subr.bf16.mxu0 0
    %2358 = vmatpush2.bf16.msra.mxu0 %v2309
    %2359 = vmatprep.subr.bf16.mxu0 0
    %2360 = vmatpush2.bf16.msra.mxu0 %v2308
    %2361 = vmatprep.subr.bf16.mxu0 0
    %2362 = vmatpush2.bf16.msra.mxu0 %v2307
    %2363 = vmatprep.mubr.bf16.mxu0 %v835
    %2364 = vmatmul.mubr.bf16.gmra.mxu0 %v834
    %v2365 = vpop.f32.mrf.mxu0
    %v2366 = vadd.f32 0.0, %v2365
    %v2367 = vpop.f32.mrf.mxu0
    %v2368 = vpop.f32.mrf.mxu0
    %v2369 = vadd.f32 0.0, %v2368
    %v2370 = vpop.f32.mrf.mxu0
    %2371 = vmatprep.mubr.bf16.mxu0 %v839
    %2372 = vmatmul.mubr.bf16.gmra.mxu0 %v838
    %v2373 = vpop.f32.mrf.mxu0
    %v2374 = vadd.f32 0.0, %v2373
    %v2375 = vpop.f32.mrf.mxu0
    %v2376 = vpop.f32.mrf.mxu0
    %v2377 = vadd.f32 0.0, %v2376
    %v2378 = vpop.f32.mrf.mxu0
    %2379 = vmatprep.mubr.bf16.mxu0 %v843
    %2380 = vmatmul.mubr.bf16.gmra.mxu0 %v842
    %v2381 = vpop.f32.mrf.mxu0
    %v2382 = vadd.f32 0.0, %v2381
    %v2383 = vpop.f32.mrf.mxu0
    %v2384 = vpop.f32.mrf.mxu0
    %v2385 = vadd.f32 0.0, %v2384
    %v2386 = vpop.f32.mrf.mxu0
    %2387 = vmatprep.mubr.bf16.mxu0 %v847
    %2388 = vmatmul.mubr.bf16.gmra.mxu0 %v846
    %v2389 = vpop.f32.mrf.mxu0
    %v2390 = vadd.f32 0.0, %v2389
    %v2391 = vpop.f32.mrf.mxu0
    %v2392 = vpop.f32.mrf.mxu0
    %v2393 = vadd.f32 0.0, %v2392
    %v2394 = vpop.f32.mrf.mxu0
    %2395 = vmatprep.mubr.bf16.mxu0 %v851
    %2396 = vmatmul.mubr.bf16.gmra.mxu0 %v850
    %v2397 = vpop.f32.mrf.mxu0
    %v2398 = vadd.f32 0.0, %v2397
    %v2399 = vpop.f32.mrf.mxu0
    %v2400 = vpop.f32.mrf.mxu0
    %v2401 = vadd.f32 0.0, %v2400
    %v2402 = vpop.f32.mrf.mxu0
    %2403 = vmatprep.mubr.bf16.mxu0 %v855
    %2404 = vmatmul.mubr.bf16.gmra.mxu0 %v854
    %v2405 = vpop.f32.mrf.mxu0
    %v2406 = vadd.f32 0.0, %v2405
    %v2407 = vpop.f32.mrf.mxu0
    %v2408 = vpop.f32.mrf.mxu0
    %v2409 = vadd.f32 0.0, %v2408
    %v2410 = vpop.f32.mrf.mxu0
    %2411 = vmatprep.mubr.bf16.mxu0 %v859
    %2412 = vmatmul.mubr.bf16.gmra.mxu0 %v858
    %v2413 = vpop.f32.mrf.mxu0
    %v2414 = vadd.f32 0.0, %v2413
    %v2415 = vpop.f32.mrf.mxu0
    %v2416 = vpop.f32.mrf.mxu0
    %v2417 = vadd.f32 0.0, %v2416
    %v2418 = vpop.f32.mrf.mxu0
    %2419 = vmatprep.mubr.bf16.mxu0 %v863
    %2420 = vmatmul.mubr.bf16.gmra.mxu0 %v862
    %v2421 = vpop.f32.mrf.mxu0
    %v2422 = vadd.f32 0.0, %v2421
    %v2423 = vpop.f32.mrf.mxu0
    %v2424 = vpop.f32.mrf.mxu0
    %v2425 = vadd.f32 0.0, %v2424
    %v2426 = vpop.f32.mrf.mxu0
    %2427 = vmatprep.mubr.bf16.mxu0 %v867
    %2428 = vmatmul.mubr.bf16.gmra.mxu0 %v866
    %v2429 = vpop.f32.mrf.mxu0
    %v2430 = vadd.f32 0.0, %v2429
    %v2431 = vpop.f32.mrf.mxu0
    %v2432 = vpop.f32.mrf.mxu0
    %v2433 = vadd.f32 0.0, %v2432
    %v2434 = vpop.f32.mrf.mxu0
    %2435 = vmatprep.mubr.bf16.mxu0 %v871
    %2436 = vmatmul.mubr.bf16.gmra.mxu0 %v870
    %v2437 = vpop.f32.mrf.mxu0
    %v2438 = vadd.f32 0.0, %v2437
    %v2439 = vpop.f32.mrf.mxu0
    %v2440 = vpop.f32.mrf.mxu0
    %v2441 = vadd.f32 0.0, %v2440
    %v2442 = vpop.f32.mrf.mxu0
    %2443 = vmatprep.mubr.bf16.mxu0 %v875
    %2444 = vmatmul.mubr.bf16.gmra.mxu0 %v874
    %v2445 = vpop.f32.mrf.mxu0
    %v2446 = vadd.f32 0.0, %v2445
    %v2447 = vpop.f32.mrf.mxu0
    %v2448 = vpop.f32.mrf.mxu0
    %v2449 = vadd.f32 0.0, %v2448
    %v2450 = vpop.f32.mrf.mxu0
    %2451 = vmatprep.mubr.bf16.mxu0 %v879
    %2452 = vmatmul.mubr.bf16.gmra.mxu0 %v878
    %v2453 = vpop.f32.mrf.mxu0
    %v2454 = vadd.f32 0.0, %v2453
    %v2455 = vpop.f32.mrf.mxu0
    %v2456 = vpop.f32.mrf.mxu0
    %v2457 = vadd.f32 0.0, %v2456
    %v2458 = vpop.f32.mrf.mxu0
    %2459 = vmatprep.mubr.bf16.mxu0 %v883
    %2460 = vmatmul.mubr.bf16.gmra.mxu0 %v882
    %v2461 = vpop.f32.mrf.mxu0
    %v2462 = vadd.f32 0.0, %v2461
    %v2463 = vpop.f32.mrf.mxu0
    %v2464 = vpop.f32.mrf.mxu0
    %v2465 = vadd.f32 0.0, %v2464
    %v2466 = vpop.f32.mrf.mxu0
    %2467 = vmatprep.mubr.bf16.mxu0 %v887
    %2468 = vmatmul.mubr.bf16.gmra.mxu0 %v886
    %v2469 = vpop.f32.mrf.mxu0
    %v2470 = vadd.f32 0.0, %v2469
    %v2471 = vpop.f32.mrf.mxu0
    %v2472 = vpop.f32.mrf.mxu0
    %v2473 = vadd.f32 0.0, %v2472
    %v2474 = vpop.f32.mrf.mxu0
    %2475 = vmatprep.mubr.bf16.mxu0 %v891
    %2476 = vmatmul.mubr.bf16.gmra.mxu0 %v890
    %v2477 = vpop.f32.mrf.mxu0
    %v2478 = vadd.f32 0.0, %v2477
    %v2479 = vpop.f32.mrf.mxu0
    %v2480 = vpop.f32.mrf.mxu0
    %v2481 = vadd.f32 0.0, %v2480
    %v2482 = vpop.f32.mrf.mxu0
    %2483 = vmatprep.mubr.bf16.mxu0 %v895
    %2484 = vmatmul.mubr.bf16.gmra.mxu0 %v894
    %v2485 = vpop.f32.mrf.mxu0
    %v2486 = vadd.f32 0.0, %v2485
    %v2487 = vpop.f32.mrf.mxu0
    %v2488 = vpop.f32.mrf.mxu0
    %v2489 = vadd.f32 0.0, %v2488
    %v2490 = vpop.f32.mrf.mxu0
    %2491 = vmatprep.mubr.bf16.mxu0 %v899
    %2492 = vmatmul.mubr.bf16.gmra.mxu0 %v898
    %v2493 = vpop.f32.mrf.mxu0
    %v2494 = vadd.f32 0.0, %v2493
    %v2495 = vpop.f32.mrf.mxu0
    %v2496 = vpop.f32.mrf.mxu0
    %v2497 = vadd.f32 0.0, %v2496
    %v2498 = vpop.f32.mrf.mxu0
    %2499 = vmatprep.mubr.bf16.mxu0 %v903
    %2500 = vmatmul.mubr.bf16.gmra.mxu0 %v902
    %v2501 = vpop.f32.mrf.mxu0
    %v2502 = vadd.f32 0.0, %v2501
    %v2503 = vpop.f32.mrf.mxu0
    %v2504 = vpop.f32.mrf.mxu0
    %v2505 = vadd.f32 0.0, %v2504
    %v2506 = vpop.f32.mrf.mxu0
    %2507 = vmatprep.mubr.bf16.mxu0 %v907
    %2508 = vmatmul.mubr.bf16.gmra.mxu0 %v906
    %v2509 = vpop.f32.mrf.mxu0
    %v2510 = vadd.f32 0.0, %v2509
    %v2511 = vpop.f32.mrf.mxu0
    %v2512 = vpop.f32.mrf.mxu0
    %v2513 = vadd.f32 0.0, %v2512
    %v2514 = vpop.f32.mrf.mxu0
    %2515 = vmatprep.mubr.bf16.mxu0 %v911
    %2516 = vmatmul.mubr.bf16.gmra.mxu0 %v910
    %v2517 = vpop.f32.mrf.mxu0
    %v2518 = vadd.f32 0.0, %v2517
    %v2519 = vpop.f32.mrf.mxu0
    %v2520 = vpop.f32.mrf.mxu0
    %v2521 = vadd.f32 0.0, %v2520
    %v2522 = vpop.f32.mrf.mxu0
    %2523 = vmatprep.mubr.bf16.mxu0 %v915
    %2524 = vmatmul.mubr.bf16.gmra.mxu0 %v914
    %v2525 = vpop.f32.mrf.mxu0
    %v2526 = vadd.f32 0.0, %v2525
    %v2527 = vpop.f32.mrf.mxu0
    %v2528 = vpop.f32.mrf.mxu0
    %v2529 = vadd.f32 0.0, %v2528
    %v2530 = vpop.f32.mrf.mxu0
    %2531 = vmatprep.mubr.bf16.mxu0 %v919
    %2532 = vmatmul.mubr.bf16.gmra.mxu0 %v918
    %v2533 = vpop.f32.mrf.mxu0
    %v2534 = vadd.f32 0.0, %v2533
    %v2535 = vpop.f32.mrf.mxu0
    %v2536 = vpop.f32.mrf.mxu0
    %v2537 = vadd.f32 0.0, %v2536
    %v2538 = vpop.f32.mrf.mxu0
    %2539 = vmatprep.mubr.bf16.mxu0 %v923
    %2540 = vmatmul.mubr.bf16.gmra.mxu0 %v922
    %v2541 = vpop.f32.mrf.mxu0
    %v2542 = vadd.f32 0.0, %v2541
    %v2543 = vpop.f32.mrf.mxu0
    %v2544 = vpop.f32.mrf.mxu0
    %v2545 = vadd.f32 0.0, %v2544
    %v2546 = vpop.f32.mrf.mxu0
    %2547 = vmatprep.mubr.bf16.mxu0 %v927
    %2548 = vmatmul.mubr.bf16.gmra.mxu0 %v926
    %v2549 = vpop.f32.mrf.mxu0
    %v2550 = vadd.f32 0.0, %v2549
    %v2551 = vpop.f32.mrf.mxu0
    %v2552 = vpop.f32.mrf.mxu0
    %v2553 = vadd.f32 0.0, %v2552
    %v2554 = vpop.f32.mrf.mxu0
    %2555 = vmatprep.mubr.bf16.mxu0 %v931
    %2556 = vmatmul.mubr.bf16.gmra.mxu0 %v930
    %v2557 = vpop.f32.mrf.mxu0
    %v2558 = vadd.f32 0.0, %v2557
    %v2559 = vpop.f32.mrf.mxu0
    %v2560 = vpop.f32.mrf.mxu0
    %v2561 = vadd.f32 0.0, %v2560
    %v2562 = vpop.f32.mrf.mxu0
    %2563 = vmatprep.mubr.bf16.mxu0 %v935
    %2564 = vmatmul.mubr.bf16.gmra.mxu0 %v934
    %v2565 = vpop.f32.mrf.mxu0
    %v2566 = vadd.f32 0.0, %v2565
    %v2567 = vpop.f32.mrf.mxu0
    %v2568 = vpop.f32.mrf.mxu0
    %v2569 = vadd.f32 0.0, %v2568
    %v2570 = vpop.f32.mrf.mxu0
    %2571 = vmatprep.mubr.bf16.mxu0 %v939
    %2572 = vmatmul.mubr.bf16.gmra.mxu0 %v938
    %v2573 = vpop.f32.mrf.mxu0
    %v2574 = vadd.f32 0.0, %v2573
    %v2575 = vpop.f32.mrf.mxu0
    %v2576 = vpop.f32.mrf.mxu0
    %v2577 = vadd.f32 0.0, %v2576
    %v2578 = vpop.f32.mrf.mxu0
    %2579 = vmatprep.mubr.bf16.mxu0 %v943
    %2580 = vmatmul.mubr.bf16.gmra.mxu0 %v942
    %v2581 = vpop.f32.mrf.mxu0
    %v2582 = vadd.f32 0.0, %v2581
    %v2583 = vpop.f32.mrf.mxu0
    %v2584 = vpop.f32.mrf.mxu0
    %v2585 = vadd.f32 0.0, %v2584
    %v2586 = vpop.f32.mrf.mxu0
    %2587 = vmatprep.mubr.bf16.mxu0 %v947
    %2588 = vmatmul.mubr.bf16.gmra.mxu0 %v946
    %v2589 = vpop.f32.mrf.mxu0
    %v2590 = vadd.f32 0.0, %v2589
    %v2591 = vpop.f32.mrf.mxu0
    %v2592 = vpop.f32.mrf.mxu0
    %v2593 = vadd.f32 0.0, %v2592
    %v2594 = vpop.f32.mrf.mxu0
    %2595 = vmatprep.mubr.bf16.mxu0 %v951
    %2596 = vmatmul.mubr.bf16.gmra.mxu0 %v950
    %v2597 = vpop.f32.mrf.mxu0
    %v2598 = vadd.f32 0.0, %v2597
    %v2599 = vpop.f32.mrf.mxu0
    %v2600 = vpop.f32.mrf.mxu0
    %v2601 = vadd.f32 0.0, %v2600
    %v2602 = vpop.f32.mrf.mxu0
    %2603 = vmatprep.mubr.bf16.mxu0 %v955
    %2604 = vmatmul.mubr.bf16.gmra.mxu0 %v954
    %v2605 = vpop.f32.mrf.mxu0
    %v2606 = vadd.f32 0.0, %v2605
    %v2607 = vpop.f32.mrf.mxu0
    %v2608 = vpop.f32.mrf.mxu0
    %v2609 = vadd.f32 0.0, %v2608
    %v2610 = vpop.f32.mrf.mxu0
    %2611 = vmatprep.mubr.bf16.mxu0 %v959
    %2612 = vmatmul.mubr.bf16.gmra.mxu0 %v958
    %v2613 = vpop.f32.mrf.mxu0
    %v2614 = vadd.f32 0.0, %v2613
    %v2615 = vpop.f32.mrf.mxu0
    %v2616 = vpop.f32.mrf.mxu0
    %v2617 = vadd.f32 0.0, %v2616
    %v2618 = vpop.f32.mrf.mxu0
    %2619 = vdwg.mxu0
    %2620 = vmatprep.subr.bf16.mxu0 0
    %2621 = vmatpush1.bf16.msra.mxu0 %v2322
    %2622 = vmatprep.subr.bf16.mxu0 0
    %2623 = vmatpush1.bf16.msra.mxu0 %v2321
    %2624 = vmatprep.subr.bf16.mxu0 0
    %2625 = vmatpush1.bf16.msra.mxu0 %v2320
    %2626 = vmatprep.subr.bf16.mxu0 0
    %2627 = vmatpush1.bf16.msra.mxu0 %v2319
    %2628 = vmatprep.subr.bf16.mxu0 0
    %2629 = vmatpush1.bf16.msra.mxu0 %v2318
    %2630 = vmatprep.subr.bf16.mxu0 0
    %2631 = vmatpush1.bf16.msra.mxu0 %v2317
    %2632 = vmatprep.subr.bf16.mxu0 0
    %2633 = vmatpush1.bf16.msra.mxu0 %v2316
    %2634 = vmatprep.subr.bf16.mxu0 0
    %2635 = vmatpush1.bf16.msra.mxu0 %v2315
    %2636 = vmatprep.subr.bf16.mxu0 0
    %2637 = vmatpush2.bf16.msra.mxu0 %v2330
    %2638 = vmatprep.subr.bf16.mxu0 0
    %2639 = vmatpush2.bf16.msra.mxu0 %v2329
    %2640 = vmatprep.subr.bf16.mxu0 0
    %2641 = vmatpush2.bf16.msra.mxu0 %v2328
    %2642 = vmatprep.subr.bf16.mxu0 0
    %2643 = vmatpush2.bf16.msra.mxu0 %v2327
    %2644 = vmatprep.subr.bf16.mxu0 0
    %2645 = vmatpush2.bf16.msra.mxu0 %v2326
    %2646 = vmatprep.subr.bf16.mxu0 0
    %2647 = vmatpush2.bf16.msra.mxu0 %v2325
    %2648 = vmatprep.subr.bf16.mxu0 0
    %2649 = vmatpush2.bf16.msra.mxu0 %v2324
    %2650 = vmatprep.subr.bf16.mxu0 0
    %2651 = vmatpush2.bf16.msra.mxu0 %v2323
    %2652 = vmatprep.mubr.bf16.mxu0 %v837
    %2653 = vmatmul.mubr.bf16.gmra.mxu0 %v836
    %v2654 = vpop.f32.mrf.mxu0
    %v2655 = vadd.f32 %v2366, %v2654
    %v2656 = vpop.f32.mrf.mxu0
    %v2657 = vpop.f32.mrf.mxu0
    %v2658 = vadd.f32 %v2369, %v2657
    %v2659 = vpop.f32.mrf.mxu0
    %2660 = vmatprep.mubr.bf16.mxu0 %v841
    %2661 = vmatmul.mubr.bf16.gmra.mxu0 %v840
    %v2662 = vpop.f32.mrf.mxu0
    %v2663 = vadd.f32 %v2374, %v2662
    %v2664 = vpop.f32.mrf.mxu0
    %v2665 = vpop.f32.mrf.mxu0
    %v2666 = vadd.f32 %v2377, %v2665
    %v2667 = vpop.f32.mrf.mxu0
    %2668 = vmatprep.mubr.bf16.mxu0 %v845
    %2669 = vmatmul.mubr.bf16.gmra.mxu0 %v844
    %v2670 = vpop.f32.mrf.mxu0
    %v2671 = vadd.f32 %v2382, %v2670
    %v2672 = vpop.f32.mrf.mxu0
    %v2673 = vpop.f32.mrf.mxu0
    %v2674 = vadd.f32 %v2385, %v2673
    %v2675 = vpop.f32.mrf.mxu0
    %2676 = vmatprep.mubr.bf16.mxu0 %v849
    %2677 = vmatmul.mubr.bf16.gmra.mxu0 %v848
    %v2678 = vpop.f32.mrf.mxu0
    %v2679 = vadd.f32 %v2390, %v2678
    %v2680 = vpop.f32.mrf.mxu0
    %v2681 = vpop.f32.mrf.mxu0
    %v2682 = vadd.f32 %v2393, %v2681
    %v2683 = vpop.f32.mrf.mxu0
    %2684 = vmatprep.mubr.bf16.mxu0 %v853
    %2685 = vmatmul.mubr.bf16.gmra.mxu0 %v852
    %v2686 = vpop.f32.mrf.mxu0
    %v2687 = vadd.f32 %v2398, %v2686
    %v2688 = vpop.f32.mrf.mxu0
    %v2689 = vpop.f32.mrf.mxu0
    %v2690 = vadd.f32 %v2401, %v2689
    %v2691 = vpop.f32.mrf.mxu0
    %2692 = vmatprep.mubr.bf16.mxu0 %v857
    %2693 = vmatmul.mubr.bf16.gmra.mxu0 %v856
    %v2694 = vpop.f32.mrf.mxu0
    %v2695 = vadd.f32 %v2406, %v2694
    %v2696 = vpop.f32.mrf.mxu0
    %v2697 = vpop.f32.mrf.mxu0
    %v2698 = vadd.f32 %v2409, %v2697
    %v2699 = vpop.f32.mrf.mxu0
    %2700 = vmatprep.mubr.bf16.mxu0 %v861
    %2701 = vmatmul.mubr.bf16.gmra.mxu0 %v860
    %v2702 = vpop.f32.mrf.mxu0
    %v2703 = vadd.f32 %v2414, %v2702
    %v2704 = vpop.f32.mrf.mxu0
    %v2705 = vpop.f32.mrf.mxu0
    %v2706 = vadd.f32 %v2417, %v2705
    %v2707 = vpop.f32.mrf.mxu0
    %2708 = vmatprep.mubr.bf16.mxu0 %v865
    %2709 = vmatmul.mubr.bf16.gmra.mxu0 %v864
    %v2710 = vpop.f32.mrf.mxu0
    %v2711 = vadd.f32 %v2422, %v2710
    %v2712 = vpop.f32.mrf.mxu0
    %v2713 = vpop.f32.mrf.mxu0
    %v2714 = vadd.f32 %v2425, %v2713
    %v2715 = vpop.f32.mrf.mxu0
    %2716 = vmatprep.mubr.bf16.mxu0 %v869
    %2717 = vmatmul.mubr.bf16.gmra.mxu0 %v868
    %v2718 = vpop.f32.mrf.mxu0
    %v2719 = vadd.f32 %v2430, %v2718
    %v2720 = vpop.f32.mrf.mxu0
    %v2721 = vpop.f32.mrf.mxu0
    %v2722 = vadd.f32 %v2433, %v2721
    %v2723 = vpop.f32.mrf.mxu0
    %2724 = vmatprep.mubr.bf16.mxu0 %v873
    %2725 = vmatmul.mubr.bf16.gmra.mxu0 %v872
    %v2726 = vpop.f32.mrf.mxu0
    %v2727 = vadd.f32 %v2438, %v2726
    %v2728 = vpop.f32.mrf.mxu0
    %v2729 = vpop.f32.mrf.mxu0
    %v2730 = vadd.f32 %v2441, %v2729
    %v2731 = vpop.f32.mrf.mxu0
    %2732 = vmatprep.mubr.bf16.mxu0 %v877
    %2733 = vmatmul.mubr.bf16.gmra.mxu0 %v876
    %v2734 = vpop.f32.mrf.mxu0
    %v2735 = vadd.f32 %v2446, %v2734
    %v2736 = vpop.f32.mrf.mxu0
    %v2737 = vpop.f32.mrf.mxu0
    %v2738 = vadd.f32 %v2449, %v2737
    %v2739 = vpop.f32.mrf.mxu0
    %2740 = vmatprep.mubr.bf16.mxu0 %v881
    %2741 = vmatmul.mubr.bf16.gmra.mxu0 %v880
    %v2742 = vpop.f32.mrf.mxu0
    %v2743 = vadd.f32 %v2454, %v2742
    %v2744 = vpop.f32.mrf.mxu0
    %v2745 = vpop.f32.mrf.mxu0
    %v2746 = vadd.f32 %v2457, %v2745
    %v2747 = vpop.f32.mrf.mxu0
    %2748 = vmatprep.mubr.bf16.mxu0 %v885
    %2749 = vmatmul.mubr.bf16.gmra.mxu0 %v884
    %v2750 = vpop.f32.mrf.mxu0
    %v2751 = vadd.f32 %v2462, %v2750
    %v2752 = vpop.f32.mrf.mxu0
    %v2753 = vpop.f32.mrf.mxu0
    %v2754 = vadd.f32 %v2465, %v2753
    %v2755 = vpop.f32.mrf.mxu0
    %2756 = vmatprep.mubr.bf16.mxu0 %v889
    %2757 = vmatmul.mubr.bf16.gmra.mxu0 %v888
    %v2758 = vpop.f32.mrf.mxu0
    %v2759 = vadd.f32 %v2470, %v2758
    %v2760 = vpop.f32.mrf.mxu0
    %v2761 = vpop.f32.mrf.mxu0
    %v2762 = vadd.f32 %v2473, %v2761
    %v2763 = vpop.f32.mrf.mxu0
    %2764 = vmatprep.mubr.bf16.mxu0 %v893
    %2765 = vmatmul.mubr.bf16.gmra.mxu0 %v892
    %v2766 = vpop.f32.mrf.mxu0
    %v2767 = vadd.f32 %v2478, %v2766
    %v2768 = vpop.f32.mrf.mxu0
    %v2769 = vpop.f32.mrf.mxu0
    %v2770 = vadd.f32 %v2481, %v2769
    %v2771 = vpop.f32.mrf.mxu0
    %2772 = vmatprep.mubr.bf16.mxu0 %v897
    %2773 = vmatmul.mubr.bf16.gmra.mxu0 %v896
    %v2774 = vpop.f32.mrf.mxu0
    %v2775 = vadd.f32 %v2486, %v2774
    %v2776 = vpop.f32.mrf.mxu0
    %v2777 = vpop.f32.mrf.mxu0
    %v2778 = vadd.f32 %v2489, %v2777
    %v2779 = vpop.f32.mrf.mxu0
    %2780 = vmatprep.mubr.bf16.mxu0 %v901
    %2781 = vmatmul.mubr.bf16.gmra.mxu0 %v900
    %v2782 = vpop.f32.mrf.mxu0
    %v2783 = vadd.f32 %v2494, %v2782
    %v2784 = vpop.f32.mrf.mxu0
    %v2785 = vpop.f32.mrf.mxu0
    %v2786 = vadd.f32 %v2497, %v2785
    %v2787 = vpop.f32.mrf.mxu0
    %2788 = vmatprep.mubr.bf16.mxu0 %v905
    %2789 = vmatmul.mubr.bf16.gmra.mxu0 %v904
    %v2790 = vpop.f32.mrf.mxu0
    %v2791 = vadd.f32 %v2502, %v2790
    %v2792 = vpop.f32.mrf.mxu0
    %v2793 = vpop.f32.mrf.mxu0
    %v2794 = vadd.f32 %v2505, %v2793
    %v2795 = vpop.f32.mrf.mxu0
    %2796 = vmatprep.mubr.bf16.mxu0 %v909
    %2797 = vmatmul.mubr.bf16.gmra.mxu0 %v908
    %v2798 = vpop.f32.mrf.mxu0
    %v2799 = vadd.f32 %v2510, %v2798
    %v2800 = vpop.f32.mrf.mxu0
    %v2801 = vpop.f32.mrf.mxu0
    %v2802 = vadd.f32 %v2513, %v2801
    %v2803 = vpop.f32.mrf.mxu0
    %2804 = vmatprep.mubr.bf16.mxu0 %v913
    %2805 = vmatmul.mubr.bf16.gmra.mxu0 %v912
    %v2806 = vpop.f32.mrf.mxu0
    %v2807 = vadd.f32 %v2518, %v2806
    %v2808 = vpop.f32.mrf.mxu0
    %v2809 = vpop.f32.mrf.mxu0
    %v2810 = vadd.f32 %v2521, %v2809
    %v2811 = vpop.f32.mrf.mxu0
    %2812 = vmatprep.mubr.bf16.mxu0 %v917
    %2813 = vmatmul.mubr.bf16.gmra.mxu0 %v916
    %v2814 = vpop.f32.mrf.mxu0
    %v2815 = vadd.f32 %v2526, %v2814
    %v2816 = vpop.f32.mrf.mxu0
    %v2817 = vpop.f32.mrf.mxu0
    %v2818 = vadd.f32 %v2529, %v2817
    %v2819 = vpop.f32.mrf.mxu0
    %2820 = vmatprep.mubr.bf16.mxu0 %v921
    %2821 = vmatmul.mubr.bf16.gmra.mxu0 %v920
    %v2822 = vpop.f32.mrf.mxu0
    %v2823 = vadd.f32 %v2534, %v2822
    %v2824 = vpop.f32.mrf.mxu0
    %v2825 = vpop.f32.mrf.mxu0
    %v2826 = vadd.f32 %v2537, %v2825
    %v2827 = vpop.f32.mrf.mxu0
    %2828 = vmatprep.mubr.bf16.mxu0 %v925
    %2829 = vmatmul.mubr.bf16.gmra.mxu0 %v924
    %v2830 = vpop.f32.mrf.mxu0
    %v2831 = vadd.f32 %v2542, %v2830
    %v2832 = vpop.f32.mrf.mxu0
    %v2833 = vpop.f32.mrf.mxu0
    %v2834 = vadd.f32 %v2545, %v2833
    %v2835 = vpop.f32.mrf.mxu0
    %2836 = vmatprep.mubr.bf16.mxu0 %v929
    %2837 = vmatmul.mubr.bf16.gmra.mxu0 %v928
    %v2838 = vpop.f32.mrf.mxu0
    %v2839 = vadd.f32 %v2550, %v2838
    %v2840 = vpop.f32.mrf.mxu0
    %v2841 = vpop.f32.mrf.mxu0
    %v2842 = vadd.f32 %v2553, %v2841
    %v2843 = vpop.f32.mrf.mxu0
    %2844 = vmatprep.mubr.bf16.mxu0 %v933
    %2845 = vmatmul.mubr.bf16.gmra.mxu0 %v932
    %v2846 = vpop.f32.mrf.mxu0
    %v2847 = vadd.f32 %v2558, %v2846
    %v2848 = vpop.f32.mrf.mxu0
    %v2849 = vpop.f32.mrf.mxu0
    %v2850 = vadd.f32 %v2561, %v2849
    %v2851 = vpop.f32.mrf.mxu0
    %2852 = vmatprep.mubr.bf16.mxu0 %v937
    %2853 = vmatmul.mubr.bf16.gmra.mxu0 %v936
    %v2854 = vpop.f32.mrf.mxu0
    %v2855 = vadd.f32 %v2566, %v2854
    %v2856 = vpop.f32.mrf.mxu0
    %v2857 = vpop.f32.mrf.mxu0
    %v2858 = vadd.f32 %v2569, %v2857
    %v2859 = vpop.f32.mrf.mxu0
    %2860 = vmatprep.mubr.bf16.mxu0 %v941
    %2861 = vmatmul.mubr.bf16.gmra.mxu0 %v940
    %v2862 = vpop.f32.mrf.mxu0
    %v2863 = vadd.f32 %v2574, %v2862
    %v2864 = vpop.f32.mrf.mxu0
    %v2865 = vpop.f32.mrf.mxu0
    %v2866 = vadd.f32 %v2577, %v2865
    %v2867 = vpop.f32.mrf.mxu0
    %2868 = vmatprep.mubr.bf16.mxu0 %v945
    %2869 = vmatmul.mubr.bf16.gmra.mxu0 %v944
    %v2870 = vpop.f32.mrf.mxu0
    %v2871 = vadd.f32 %v2582, %v2870
    %v2872 = vpop.f32.mrf.mxu0
    %v2873 = vpop.f32.mrf.mxu0
    %v2874 = vadd.f32 %v2585, %v2873
    %v2875 = vpop.f32.mrf.mxu0
    %2876 = vmatprep.mubr.bf16.mxu0 %v949
    %2877 = vmatmul.mubr.bf16.gmra.mxu0 %v948
    %v2878 = vpop.f32.mrf.mxu0
    %v2879 = vadd.f32 %v2590, %v2878
    %v2880 = vpop.f32.mrf.mxu0
    %v2881 = vpop.f32.mrf.mxu0
    %v2882 = vadd.f32 %v2593, %v2881
    %v2883 = vpop.f32.mrf.mxu0
    %2884 = vmatprep.mubr.bf16.mxu0 %v953
    %2885 = vmatmul.mubr.bf16.gmra.mxu0 %v952
    %v2886 = vpop.f32.mrf.mxu0
    %v2887 = vadd.f32 %v2598, %v2886
    %v2888 = vpop.f32.mrf.mxu0
    %v2889 = vpop.f32.mrf.mxu0
    %v2890 = vadd.f32 %v2601, %v2889
    %v2891 = vpop.f32.mrf.mxu0
    %2892 = vmatprep.mubr.bf16.mxu0 %v957
    %2893 = vmatmul.mubr.bf16.gmra.mxu0 %v956
    %v2894 = vpop.f32.mrf.mxu0
    %v2895 = vadd.f32 %v2606, %v2894
    %v2896 = vpop.f32.mrf.mxu0
    %v2897 = vpop.f32.mrf.mxu0
    %v2898 = vadd.f32 %v2609, %v2897
    %v2899 = vpop.f32.mrf.mxu0
    %2900 = vmatprep.mubr.bf16.mxu0 %v961
    %2901 = vmatmul.mubr.bf16.gmra.mxu0 %v960
    %v2902 = vpop.f32.mrf.mxu0
    %v2903 = vadd.f32 %v2614, %v2902
    %v2904 = vpop.f32.mrf.mxu0
    %v2905 = vpop.f32.mrf.mxu0
    %v2906 = vadd.f32 %v2617, %v2905
    %v2907 = vpop.f32.mrf.mxu0
    %2908 = vdwg.mxu0
    %v2909 = vpack.c.bf16 %v2658, %v2655
    %v2910 = vpack.c.bf16 %v2666, %v2663
    %v2911 = vpack.c.bf16 %v2674, %v2671
    %v2912 = vpack.c.bf16 %v2682, %v2679
    %v2913 = vpack.c.bf16 %v2690, %v2687
    %v2914 = vpack.c.bf16 %v2698, %v2695
    %v2915 = vpack.c.bf16 %v2706, %v2703
    %v2916 = vpack.c.bf16 %v2714, %v2711
    %v2917 = vpack.c.bf16 %v2722, %v2719
    %v2918 = vpack.c.bf16 %v2730, %v2727
    %v2919 = vpack.c.bf16 %v2738, %v2735
    %v2920 = vpack.c.bf16 %v2746, %v2743
    %v2921 = vpack.c.bf16 %v2754, %v2751
    %v2922 = vpack.c.bf16 %v2762, %v2759
    %v2923 = vpack.c.bf16 %v2770, %v2767
    %v2924 = vpack.c.bf16 %v2778, %v2775
    %v2925 = vpack.c.bf16 %v2786, %v2783
    %v2926 = vpack.c.bf16 %v2794, %v2791
    %v2927 = vpack.c.bf16 %v2802, %v2799
    %v2928 = vpack.c.bf16 %v2810, %v2807
    %v2929 = vpack.c.bf16 %v2818, %v2815
    %v2930 = vpack.c.bf16 %v2826, %v2823
    %v2931 = vpack.c.bf16 %v2834, %v2831
    %v2932 = vpack.c.bf16 %v2842, %v2839
    %v2933 = vpack.c.bf16 %v2850, %v2847
    %v2934 = vpack.c.bf16 %v2858, %v2855
    %v2935 = vpack.c.bf16 %v2866, %v2863
    %v2936 = vpack.c.bf16 %v2874, %v2871
    %v2937 = vpack.c.bf16 %v2882, %v2879
    %v2938 = vpack.c.bf16 %v2890, %v2887
    %v2939 = vpack.c.bf16 %v2898, %v2895
    %v2940 = vpack.c.bf16 %v2906, %v2903
    %v2942 = vlaneseq
    %v2943 = vshrl.u32 %v2942, 7
    %v2944 = vsub.s32 0, %v2943
    %v2945 = vrot.slane %v385, %v2944
    %v2963 = vunpack.c.l.b16 %v368
    %v2964 = vunpack.c.l.b16 %v369
    %v2965 = vunpack.c.l.b16 %v370
    %v2966 = vunpack.c.l.b16 %v371
    %v2967 = vunpack.c.l.b16 %v372
    %v2968 = vunpack.c.l.b16 %v373
    %v2969 = vunpack.c.l.b16 %v374
    %v2970 = vunpack.c.l.b16 %v375
    %v2971 = vunpack.c.l.b16 %v376
    %v2972 = vunpack.c.l.b16 %v377
    %v2973 = vunpack.c.l.b16 %v378
    %v2974 = vunpack.c.l.b16 %v379
    %v2975 = vunpack.c.l.b16 %v380
    %v2976 = vunpack.c.l.b16 %v381
    %v2977 = vunpack.c.l.b16 %v382
    %v2978 = vunpack.c.l.b16 %v383
    %v2979 = vpack.c.b16 %v2964, %v2963
    %v2980 = vpack.c.b16 %v2966, %v2965
    %v2981 = vpack.c.b16 %v2968, %v2967
    %v2982 = vpack.c.b16 %v2970, %v2969
    %v2983 = vpack.c.b16 %v2972, %v2971
    %v2984 = vpack.c.b16 %v2974, %v2973
    %v2985 = vpack.c.b16 %v2976, %v2975
    %v2986 = vpack.c.b16 %v2978, %v2977
    %2995 = vmatprep.subr.bf16.mxu0 0
    %2996 = vmatpush1.bf16.msra.mxu0 %v2986
    %2997 = vmatprep.subr.bf16.mxu0 0
    %2998 = vmatpush1.bf16.msra.mxu0 %v2985
    %2999 = vmatprep.subr.bf16.mxu0 0
    %3000 = vmatpush1.bf16.msra.mxu0 %v2984
    %3001 = vmatprep.subr.bf16.mxu0 0
    %3002 = vmatpush1.bf16.msra.mxu0 %v2983
    %3003 = vmatprep.subr.bf16.mxu0 0
    %3004 = vmatpush1.bf16.msra.mxu0 %v2982
    %3005 = vmatprep.subr.bf16.mxu0 0
    %3006 = vmatpush1.bf16.msra.mxu0 %v2981
    %3007 = vmatprep.subr.bf16.mxu0 0
    %3008 = vmatpush1.bf16.msra.mxu0 %v2980
    %3009 = vmatprep.subr.bf16.mxu0 0
    %3010 = vmatpush1.bf16.msra.mxu0 %v2979
    %3011 = vmatprep.subr.bf16.mxu0 0
    %3012 = vmatpush2.bf16.msra.mxu0 0
    %3013 = vmatprep.subr.bf16.mxu0 0
    %3014 = vmatpush2.bf16.msra.mxu0 0
    %3015 = vmatprep.subr.bf16.mxu0 0
    %3016 = vmatpush2.bf16.msra.mxu0 0
    %3017 = vmatprep.subr.bf16.mxu0 0
    %3018 = vmatpush2.bf16.msra.mxu0 0
    %3019 = vmatprep.subr.bf16.mxu0 0
    %3020 = vmatpush2.bf16.msra.mxu0 0
    %3021 = vmatprep.subr.bf16.mxu0 0
    %3022 = vmatpush2.bf16.msra.mxu0 0
    %3023 = vmatprep.subr.bf16.mxu0 0
    %3024 = vmatpush2.bf16.msra.mxu0 0
    %3025 = vmatprep.subr.bf16.mxu0 0
    %3026 = vmatpush2.bf16.msra.mxu0 0
    %3027 = vmatprep.mubr.bf16.mxu0 0
    %3028 = vmatmul.mubr.bf16.gmra.mxu0 %v2909
    %v3029 = vpop.f32.mrf.mxu0
    %v3030 = vadd.f32 %v2945, %v3029
    %v3031 = vpop.f32.mrf.mxu0
    %v3032 = vpop.f32.mrf.mxu0
    %v3033 = vadd.f32 %v2945, %v3032
    %v3034 = vpop.f32.mrf.mxu0
    %3035 = vmatprep.mubr.bf16.mxu0 0
    %3036 = vmatmul.mubr.bf16.gmra.mxu0 %v2910
    %v3037 = vpop.f32.mrf.mxu0
    %v3038 = vadd.f32 %v2945, %v3037
    %v3039 = vpop.f32.mrf.mxu0
    %v3040 = vpop.f32.mrf.mxu0
    %v3041 = vadd.f32 %v2945, %v3040
    %v3042 = vpop.f32.mrf.mxu0
    %3043 = vmatprep.mubr.bf16.mxu0 0
    %3044 = vmatmul.mubr.bf16.gmra.mxu0 %v2911
    %v3045 = vpop.f32.mrf.mxu0
    %v3046 = vadd.f32 %v2945, %v3045
    %v3047 = vpop.f32.mrf.mxu0
    %v3048 = vpop.f32.mrf.mxu0
    %v3049 = vadd.f32 %v2945, %v3048
    %v3050 = vpop.f32.mrf.mxu0
    %3051 = vmatprep.mubr.bf16.mxu0 0
    %3052 = vmatmul.mubr.bf16.gmra.mxu0 %v2912
    %v3053 = vpop.f32.mrf.mxu0
    %v3054 = vadd.f32 %v2945, %v3053
    %v3055 = vpop.f32.mrf.mxu0
    %v3056 = vpop.f32.mrf.mxu0
    %v3057 = vadd.f32 %v2945, %v3056
    %v3058 = vpop.f32.mrf.mxu0
    %3059 = vmatprep.mubr.bf16.mxu0 0
    %3060 = vmatmul.mubr.bf16.gmra.mxu0 %v2913
    %v3061 = vpop.f32.mrf.mxu0
    %v3062 = vadd.f32 %v2945, %v3061
    %v3063 = vpop.f32.mrf.mxu0
    %v3064 = vpop.f32.mrf.mxu0
    %v3065 = vadd.f32 %v2945, %v3064
    %v3066 = vpop.f32.mrf.mxu0
    %3067 = vmatprep.mubr.bf16.mxu0 0
    %3068 = vmatmul.mubr.bf16.gmra.mxu0 %v2914
    %v3069 = vpop.f32.mrf.mxu0
    %v3070 = vadd.f32 %v2945, %v3069
    %v3071 = vpop.f32.mrf.mxu0
    %v3072 = vpop.f32.mrf.mxu0
    %v3073 = vadd.f32 %v2945, %v3072
    %v3074 = vpop.f32.mrf.mxu0
    %3075 = vmatprep.mubr.bf16.mxu0 0
    %3076 = vmatmul.mubr.bf16.gmra.mxu0 %v2915
    %v3077 = vpop.f32.mrf.mxu0
    %v3078 = vadd.f32 %v2945, %v3077
    %v3079 = vpop.f32.mrf.mxu0
    %v3080 = vpop.f32.mrf.mxu0
    %v3081 = vadd.f32 %v2945, %v3080
    %v3082 = vpop.f32.mrf.mxu0
    %3083 = vmatprep.mubr.bf16.mxu0 0
    %3084 = vmatmul.mubr.bf16.gmra.mxu0 %v2916
    %v3085 = vpop.f32.mrf.mxu0
    %v3086 = vadd.f32 %v2945, %v3085
    %v3087 = vpop.f32.mrf.mxu0
    %v3088 = vpop.f32.mrf.mxu0
    %v3089 = vadd.f32 %v2945, %v3088
    %v3090 = vpop.f32.mrf.mxu0
    %3091 = vmatprep.mubr.bf16.mxu0 0
    %3092 = vmatmul.mubr.bf16.gmra.mxu0 %v2917
    %v3093 = vpop.f32.mrf.mxu0
    %v3094 = vadd.f32 %v2945, %v3093
    %v3095 = vpop.f32.mrf.mxu0
    %v3096 = vpop.f32.mrf.mxu0
    %v3097 = vadd.f32 %v2945, %v3096
    %v3098 = vpop.f32.mrf.mxu0
    %3099 = vmatprep.mubr.bf16.mxu0 0
    %3100 = vmatmul.mubr.bf16.gmra.mxu0 %v2918
    %v3101 = vpop.f32.mrf.mxu0
    %v3102 = vadd.f32 %v2945, %v3101
    %v3103 = vpop.f32.mrf.mxu0
    %v3104 = vpop.f32.mrf.mxu0
    %v3105 = vadd.f32 %v2945, %v3104
    %v3106 = vpop.f32.mrf.mxu0
    %3107 = vmatprep.mubr.bf16.mxu0 0
    %3108 = vmatmul.mubr.bf16.gmra.mxu0 %v2919
    %v3109 = vpop.f32.mrf.mxu0
    %v3110 = vadd.f32 %v2945, %v3109
    %v3111 = vpop.f32.mrf.mxu0
    %v3112 = vpop.f32.mrf.mxu0
    %v3113 = vadd.f32 %v2945, %v3112
    %v3114 = vpop.f32.mrf.mxu0
    %3115 = vmatprep.mubr.bf16.mxu0 0
    %3116 = vmatmul.mubr.bf16.gmra.mxu0 %v2920
    %v3117 = vpop.f32.mrf.mxu0
    %v3118 = vadd.f32 %v2945, %v3117
    %v3119 = vpop.f32.mrf.mxu0
    %v3120 = vpop.f32.mrf.mxu0
    %v3121 = vadd.f32 %v2945, %v3120
    %v3122 = vpop.f32.mrf.mxu0
    %3123 = vmatprep.mubr.bf16.mxu0 0
    %3124 = vmatmul.mubr.bf16.gmra.mxu0 %v2921
    %v3125 = vpop.f32.mrf.mxu0
    %v3126 = vadd.f32 %v2945, %v3125
    %v3127 = vpop.f32.mrf.mxu0
    %v3128 = vpop.f32.mrf.mxu0
    %v3129 = vadd.f32 %v2945, %v3128
    %v3130 = vpop.f32.mrf.mxu0
    %3131 = vmatprep.mubr.bf16.mxu0 0
    %3132 = vmatmul.mubr.bf16.gmra.mxu0 %v2922
    %v3133 = vpop.f32.mrf.mxu0
    %v3134 = vadd.f32 %v2945, %v3133
    %v3135 = vpop.f32.mrf.mxu0
    %v3136 = vpop.f32.mrf.mxu0
    %v3137 = vadd.f32 %v2945, %v3136
    %v3138 = vpop.f32.mrf.mxu0
    %3139 = vmatprep.mubr.bf16.mxu0 0
    %3140 = vmatmul.mubr.bf16.gmra.mxu0 %v2923
    %v3141 = vpop.f32.mrf.mxu0
    %v3142 = vadd.f32 %v2945, %v3141
    %v3143 = vpop.f32.mrf.mxu0
    %v3144 = vpop.f32.mrf.mxu0
    %v3145 = vadd.f32 %v2945, %v3144
    %v3146 = vpop.f32.mrf.mxu0
    %3147 = vmatprep.mubr.bf16.mxu0 0
    %3148 = vmatmul.mubr.bf16.gmra.mxu0 %v2924
    %v3149 = vpop.f32.mrf.mxu0
    %v3150 = vadd.f32 %v2945, %v3149
    %v3151 = vpop.f32.mrf.mxu0
    %v3152 = vpop.f32.mrf.mxu0
    %v3153 = vadd.f32 %v2945, %v3152
    %v3154 = vpop.f32.mrf.mxu0
    %3155 = vmatprep.mubr.bf16.mxu0 0
    %3156 = vmatmul.mubr.bf16.gmra.mxu0 %v2925
    %v3157 = vpop.f32.mrf.mxu0
    %v3158 = vadd.f32 %v2945, %v3157
    %v3159 = vpop.f32.mrf.mxu0
    %v3160 = vpop.f32.mrf.mxu0
    %v3161 = vadd.f32 %v2945, %v3160
    %v3162 = vpop.f32.mrf.mxu0
    %3163 = vmatprep.mubr.bf16.mxu0 0
    %3164 = vmatmul.mubr.bf16.gmra.mxu0 %v2926
    %v3165 = vpop.f32.mrf.mxu0
    %v3166 = vadd.f32 %v2945, %v3165
    %v3167 = vpop.f32.mrf.mxu0
    %v3168 = vpop.f32.mrf.mxu0
    %v3169 = vadd.f32 %v2945, %v3168
    %v3170 = vpop.f32.mrf.mxu0
    %3171 = vmatprep.mubr.bf16.mxu0 0
    %3172 = vmatmul.mubr.bf16.gmra.mxu0 %v2927
    %v3173 = vpop.f32.mrf.mxu0
    %v3174 = vadd.f32 %v2945, %v3173
    %v3175 = vpop.f32.mrf.mxu0
    %v3176 = vpop.f32.mrf.mxu0
    %v3177 = vadd.f32 %v2945, %v3176
    %v3178 = vpop.f32.mrf.mxu0
    %3179 = vmatprep.mubr.bf16.mxu0 0
    %3180 = vmatmul.mubr.bf16.gmra.mxu0 %v2928
    %v3181 = vpop.f32.mrf.mxu0
    %v3182 = vadd.f32 %v2945, %v3181
    %v3183 = vpop.f32.mrf.mxu0
    %v3184 = vpop.f32.mrf.mxu0
    %v3185 = vadd.f32 %v2945, %v3184
    %v3186 = vpop.f32.mrf.mxu0
    %3187 = vmatprep.mubr.bf16.mxu0 0
    %3188 = vmatmul.mubr.bf16.gmra.mxu0 %v2929
    %v3189 = vpop.f32.mrf.mxu0
    %v3190 = vadd.f32 %v2945, %v3189
    %v3191 = vpop.f32.mrf.mxu0
    %v3192 = vpop.f32.mrf.mxu0
    %v3193 = vadd.f32 %v2945, %v3192
    %v3194 = vpop.f32.mrf.mxu0
    %3195 = vmatprep.mubr.bf16.mxu0 0
    %3196 = vmatmul.mubr.bf16.gmra.mxu0 %v2930
    %v3197 = vpop.f32.mrf.mxu0
    %v3198 = vadd.f32 %v2945, %v3197
    %v3199 = vpop.f32.mrf.mxu0
    %v3200 = vpop.f32.mrf.mxu0
    %v3201 = vadd.f32 %v2945, %v3200
    %v3202 = vpop.f32.mrf.mxu0
    %3203 = vmatprep.mubr.bf16.mxu0 0
    %3204 = vmatmul.mubr.bf16.gmra.mxu0 %v2931
    %v3205 = vpop.f32.mrf.mxu0
    %v3206 = vadd.f32 %v2945, %v3205
    %v3207 = vpop.f32.mrf.mxu0
    %v3208 = vpop.f32.mrf.mxu0
    %v3209 = vadd.f32 %v2945, %v3208
    %v3210 = vpop.f32.mrf.mxu0
    %3211 = vmatprep.mubr.bf16.mxu0 0
    %3212 = vmatmul.mubr.bf16.gmra.mxu0 %v2932
    %v3213 = vpop.f32.mrf.mxu0
    %v3214 = vadd.f32 %v2945, %v3213
    %v3215 = vpop.f32.mrf.mxu0
    %v3216 = vpop.f32.mrf.mxu0
    %v3217 = vadd.f32 %v2945, %v3216
    %v3218 = vpop.f32.mrf.mxu0
    %3219 = vmatprep.mubr.bf16.mxu0 0
    %3220 = vmatmul.mubr.bf16.gmra.mxu0 %v2933
    %v3221 = vpop.f32.mrf.mxu0
    %v3222 = vadd.f32 %v2945, %v3221
    %v3223 = vpop.f32.mrf.mxu0
    %v3224 = vpop.f32.mrf.mxu0
    %v3225 = vadd.f32 %v2945, %v3224
    %v3226 = vpop.f32.mrf.mxu0
    %3227 = vmatprep.mubr.bf16.mxu0 0
    %3228 = vmatmul.mubr.bf16.gmra.mxu0 %v2934
    %v3229 = vpop.f32.mrf.mxu0
    %v3230 = vadd.f32 %v2945, %v3229
    %v3231 = vpop.f32.mrf.mxu0
    %v3232 = vpop.f32.mrf.mxu0
    %v3233 = vadd.f32 %v2945, %v3232
    %v3234 = vpop.f32.mrf.mxu0
    %3235 = vmatprep.mubr.bf16.mxu0 0
    %3236 = vmatmul.mubr.bf16.gmra.mxu0 %v2935
    %v3237 = vpop.f32.mrf.mxu0
    %v3238 = vadd.f32 %v2945, %v3237
    %v3239 = vpop.f32.mrf.mxu0
    %v3240 = vpop.f32.mrf.mxu0
    %v3241 = vadd.f32 %v2945, %v3240
    %v3242 = vpop.f32.mrf.mxu0
    %3243 = vmatprep.mubr.bf16.mxu0 0
    %3244 = vmatmul.mubr.bf16.gmra.mxu0 %v2936
    %v3245 = vpop.f32.mrf.mxu0
    %v3246 = vadd.f32 %v2945, %v3245
    %v3247 = vpop.f32.mrf.mxu0
    %v3248 = vpop.f32.mrf.mxu0
    %v3249 = vadd.f32 %v2945, %v3248
    %v3250 = vpop.f32.mrf.mxu0
    %3251 = vmatprep.mubr.bf16.mxu0 0
    %3252 = vmatmul.mubr.bf16.gmra.mxu0 %v2937
    %v3253 = vpop.f32.mrf.mxu0
    %v3254 = vadd.f32 %v2945, %v3253
    %v3255 = vpop.f32.mrf.mxu0
    %v3256 = vpop.f32.mrf.mxu0
    %v3257 = vadd.f32 %v2945, %v3256
    %v3258 = vpop.f32.mrf.mxu0
    %3259 = vmatprep.mubr.bf16.mxu0 0
    %3260 = vmatmul.mubr.bf16.gmra.mxu0 %v2938
    %v3261 = vpop.f32.mrf.mxu0
    %v3262 = vadd.f32 %v2945, %v3261
    %v3263 = vpop.f32.mrf.mxu0
    %v3264 = vpop.f32.mrf.mxu0
    %v3265 = vadd.f32 %v2945, %v3264
    %v3266 = vpop.f32.mrf.mxu0
    %3267 = vmatprep.mubr.bf16.mxu0 0
    %3268 = vmatmul.mubr.bf16.gmra.mxu0 %v2939
    %v3269 = vpop.f32.mrf.mxu0
    %v3270 = vadd.f32 %v2945, %v3269
    %v3271 = vpop.f32.mrf.mxu0
    %v3272 = vpop.f32.mrf.mxu0
    %v3273 = vadd.f32 %v2945, %v3272
    %v3274 = vpop.f32.mrf.mxu0
    %3275 = vmatprep.mubr.bf16.mxu0 0
    %3276 = vmatmul.mubr.bf16.gmra.mxu0 %v2940
    %v3277 = vpop.f32.mrf.mxu0
    %v3278 = vadd.f32 %v2945, %v3277
    %v3279 = vpop.f32.mrf.mxu0
    %v3280 = vpop.f32.mrf.mxu0
    %v3281 = vadd.f32 %v2945, %v3280
    %v3282 = vpop.f32.mrf.mxu0
    %3283 = vdwg.mxu0
    %v3284 = vpack.c.bf16 %v3033, %v3030
    %v3285 = vpack.c.bf16 %v3041, %v3038
    %v3286 = vpack.c.bf16 %v3049, %v3046
    %v3287 = vpack.c.bf16 %v3057, %v3054
    %v3288 = vpack.c.bf16 %v3065, %v3062
    %v3289 = vpack.c.bf16 %v3073, %v3070
    %v3290 = vpack.c.bf16 %v3081, %v3078
    %v3291 = vpack.c.bf16 %v3089, %v3086
    %v3292 = vpack.c.bf16 %v3097, %v3094
    %v3293 = vpack.c.bf16 %v3105, %v3102
    %v3294 = vpack.c.bf16 %v3113, %v3110
    %v3295 = vpack.c.bf16 %v3121, %v3118
    %v3296 = vpack.c.bf16 %v3129, %v3126
    %v3297 = vpack.c.bf16 %v3137, %v3134
    %v3298 = vpack.c.bf16 %v3145, %v3142
    %v3299 = vpack.c.bf16 %v3153, %v3150
    %v3300 = vpack.c.bf16 %v3161, %v3158
    %v3301 = vpack.c.bf16 %v3169, %v3166
    %v3302 = vpack.c.bf16 %v3177, %v3174
    %v3303 = vpack.c.bf16 %v3185, %v3182
    %v3304 = vpack.c.bf16 %v3193, %v3190
    %v3305 = vpack.c.bf16 %v3201, %v3198
    %v3306 = vpack.c.bf16 %v3209, %v3206
    %v3307 = vpack.c.bf16 %v3217, %v3214
    %v3308 = vpack.c.bf16 %v3225, %v3222
    %v3309 = vpack.c.bf16 %v3233, %v3230
    %v3310 = vpack.c.bf16 %v3241, %v3238
    %v3311 = vpack.c.bf16 %v3249, %v3246
    %v3312 = vpack.c.bf16 %v3257, %v3254
    %v3313 = vpack.c.bf16 %v3265, %v3262
    %v3314 = vpack.c.bf16 %v3273, %v3270
    %v3315 = vpack.c.bf16 %v3281, %v3278
    %v3444 = vunpack.c.l.b16 %v224
    %v3445 = vunpack.c.h.b16 %v224
    %v3446 = vunpack.c.l.b16 %v225
    %v3447 = vunpack.c.h.b16 %v225
    %v3448 = vunpack.c.l.b16 %v226
    %v3449 = vunpack.c.h.b16 %v226
    %v3450 = vunpack.c.l.b16 %v227
    %v3451 = vunpack.c.h.b16 %v227
    %v3452 = vunpack.c.l.b16 %v228
    %v3453 = vunpack.c.h.b16 %v228
    %v3454 = vunpack.c.l.b16 %v229
    %v3455 = vunpack.c.h.b16 %v229
    %v3456 = vunpack.c.l.b16 %v230
    %v3457 = vunpack.c.h.b16 %v230
    %v3458 = vunpack.c.l.b16 %v231
    %v3459 = vunpack.c.h.b16 %v231
    %v3460 = vunpack.c.l.b16 %v232
    %v3461 = vunpack.c.h.b16 %v232
    %v3462 = vunpack.c.l.b16 %v233
    %v3463 = vunpack.c.h.b16 %v233
    %v3464 = vunpack.c.l.b16 %v234
    %v3465 = vunpack.c.h.b16 %v234
    %v3466 = vunpack.c.l.b16 %v235
    %v3467 = vunpack.c.h.b16 %v235
    %v3468 = vunpack.c.l.b16 %v236
    %v3469 = vunpack.c.h.b16 %v236
    %v3470 = vunpack.c.l.b16 %v237
    %v3471 = vunpack.c.h.b16 %v237
    %v3472 = vunpack.c.l.b16 %v238
    %v3473 = vunpack.c.h.b16 %v238
    %v3474 = vunpack.c.l.b16 %v239
    %v3475 = vunpack.c.h.b16 %v239
    %v3476 = vunpack.c.l.b16 %v240
    %v3477 = vunpack.c.h.b16 %v240
    %v3478 = vunpack.c.l.b16 %v241
    %v3479 = vunpack.c.h.b16 %v241
    %v3480 = vunpack.c.l.b16 %v242
    %v3481 = vunpack.c.h.b16 %v242
    %v3482 = vunpack.c.l.b16 %v243
    %v3483 = vunpack.c.h.b16 %v243
    %v3484 = vunpack.c.l.b16 %v244
    %v3485 = vunpack.c.h.b16 %v244
    %v3486 = vunpack.c.l.b16 %v245
    %v3487 = vunpack.c.h.b16 %v245
    %v3488 = vunpack.c.l.b16 %v246
    %v3489 = vunpack.c.h.b16 %v246
    %v3490 = vunpack.c.l.b16 %v247
    %v3491 = vunpack.c.h.b16 %v247
    %v3492 = vunpack.c.l.b16 %v248
    %v3493 = vunpack.c.h.b16 %v248
    %v3494 = vunpack.c.l.b16 %v249
    %v3495 = vunpack.c.h.b16 %v249
    %v3496 = vunpack.c.l.b16 %v250
    %v3497 = vunpack.c.h.b16 %v250
    %v3498 = vunpack.c.l.b16 %v251
    %v3499 = vunpack.c.h.b16 %v251
    %v3500 = vunpack.c.l.b16 %v252
    %v3501 = vunpack.c.h.b16 %v252
    %v3502 = vunpack.c.l.b16 %v253
    %v3503 = vunpack.c.h.b16 %v253
    %v3504 = vunpack.c.l.b16 %v254
    %v3505 = vunpack.c.h.b16 %v254
    %v3506 = vunpack.c.l.b16 %v255
    %v3507 = vunpack.c.h.b16 %v255
    %v3508 = vunpack.c.l.b16 %v256
    %v3509 = vunpack.c.h.b16 %v256
    %v3510 = vunpack.c.l.b16 %v257
    %v3511 = vunpack.c.h.b16 %v257
    %v3512 = vunpack.c.l.b16 %v258
    %v3513 = vunpack.c.h.b16 %v258
    %v3514 = vunpack.c.l.b16 %v259
    %v3515 = vunpack.c.h.b16 %v259
    %v3516 = vunpack.c.l.b16 %v260
    %v3517 = vunpack.c.h.b16 %v260
    %v3518 = vunpack.c.l.b16 %v261
    %v3519 = vunpack.c.h.b16 %v261
    %v3520 = vunpack.c.l.b16 %v262
    %v3521 = vunpack.c.h.b16 %v262
    %v3522 = vunpack.c.l.b16 %v263
    %v3523 = vunpack.c.h.b16 %v263
    %v3524 = vunpack.c.l.b16 %v264
    %v3525 = vunpack.c.h.b16 %v264
    %v3526 = vunpack.c.l.b16 %v265
    %v3527 = vunpack.c.h.b16 %v265
    %v3528 = vunpack.c.l.b16 %v266
    %v3529 = vunpack.c.h.b16 %v266
    %v3530 = vunpack.c.l.b16 %v267
    %v3531 = vunpack.c.h.b16 %v267
    %v3532 = vunpack.c.l.b16 %v268
    %v3533 = vunpack.c.h.b16 %v268
    %v3534 = vunpack.c.l.b16 %v269
    %v3535 = vunpack.c.h.b16 %v269
    %v3536 = vunpack.c.l.b16 %v270
    %v3537 = vunpack.c.h.b16 %v270
    %v3538 = vunpack.c.l.b16 %v271
    %v3539 = vunpack.c.h.b16 %v271
    %v3540 = vunpack.c.l.b16 %v272
    %v3541 = vunpack.c.h.b16 %v272
    %v3542 = vunpack.c.l.b16 %v273
    %v3543 = vunpack.c.h.b16 %v273
    %v3544 = vunpack.c.l.b16 %v274
    %v3545 = vunpack.c.h.b16 %v274
    %v3546 = vunpack.c.l.b16 %v275
    %v3547 = vunpack.c.h.b16 %v275
    %v3548 = vunpack.c.l.b16 %v276
    %v3549 = vunpack.c.h.b16 %v276
    %v3550 = vunpack.c.l.b16 %v277
    %v3551 = vunpack.c.h.b16 %v277
    %v3552 = vunpack.c.l.b16 %v278
    %v3553 = vunpack.c.h.b16 %v278
    %v3554 = vunpack.c.l.b16 %v279
    %v3555 = vunpack.c.h.b16 %v279
    %v3556 = vunpack.c.l.b16 %v280
    %v3557 = vunpack.c.h.b16 %v280
    %v3558 = vunpack.c.l.b16 %v281
    %v3559 = vunpack.c.h.b16 %v281
    %v3560 = vunpack.c.l.b16 %v282
    %v3561 = vunpack.c.h.b16 %v282
    %v3562 = vunpack.c.l.b16 %v283
    %v3563 = vunpack.c.h.b16 %v283
    %v3564 = vunpack.c.l.b16 %v284
    %v3565 = vunpack.c.h.b16 %v284
    %v3566 = vunpack.c.l.b16 %v285
    %v3567 = vunpack.c.h.b16 %v285
    %v3568 = vunpack.c.l.b16 %v286
    %v3569 = vunpack.c.h.b16 %v286
    %v3570 = vunpack.c.l.b16 %v287
    %v3571 = vunpack.c.h.b16 %v287
    %v3572 = vunpack.c.l.b16 %v288
    %v3573 = vunpack.c.h.b16 %v288
    %v3574 = vunpack.c.l.b16 %v289
    %v3575 = vunpack.c.h.b16 %v289
    %v3576 = vunpack.c.l.b16 %v290
    %v3577 = vunpack.c.h.b16 %v290
    %v3578 = vunpack.c.l.b16 %v291
    %v3579 = vunpack.c.h.b16 %v291
    %v3580 = vunpack.c.l.b16 %v292
    %v3581 = vunpack.c.h.b16 %v292
    %v3582 = vunpack.c.l.b16 %v293
    %v3583 = vunpack.c.h.b16 %v293
    %v3584 = vunpack.c.l.b16 %v294
    %v3585 = vunpack.c.h.b16 %v294
    %v3586 = vunpack.c.l.b16 %v295
    %v3587 = vunpack.c.h.b16 %v295
    %v3588 = vunpack.c.l.b16 %v296
    %v3589 = vunpack.c.h.b16 %v296
    %v3590 = vunpack.c.l.b16 %v297
    %v3591 = vunpack.c.h.b16 %v297
    %v3592 = vunpack.c.l.b16 %v298
    %v3593 = vunpack.c.h.b16 %v298
    %v3594 = vunpack.c.l.b16 %v299
    %v3595 = vunpack.c.h.b16 %v299
    %v3596 = vunpack.c.l.b16 %v300
    %v3597 = vunpack.c.h.b16 %v300
    %v3598 = vunpack.c.l.b16 %v301
    %v3599 = vunpack.c.h.b16 %v301
    %v3600 = vunpack.c.l.b16 %v302
    %v3601 = vunpack.c.h.b16 %v302
    %v3602 = vunpack.c.l.b16 %v303
    %v3603 = vunpack.c.h.b16 %v303
    %v3604 = vunpack.c.l.b16 %v304
    %v3605 = vunpack.c.h.b16 %v304
    %v3606 = vunpack.c.l.b16 %v305
    %v3607 = vunpack.c.h.b16 %v305
    %v3608 = vunpack.c.l.b16 %v306
    %v3609 = vunpack.c.h.b16 %v306
    %v3610 = vunpack.c.l.b16 %v307
    %v3611 = vunpack.c.h.b16 %v307
    %v3612 = vunpack.c.l.b16 %v308
    %v3613 = vunpack.c.h.b16 %v308
    %v3614 = vunpack.c.l.b16 %v309
    %v3615 = vunpack.c.h.b16 %v309
    %v3616 = vunpack.c.l.b16 %v310
    %v3617 = vunpack.c.h.b16 %v310
    %v3618 = vunpack.c.l.b16 %v311
    %v3619 = vunpack.c.h.b16 %v311
    %v3620 = vunpack.c.l.b16 %v312
    %v3621 = vunpack.c.h.b16 %v312
    %v3622 = vunpack.c.l.b16 %v313
    %v3623 = vunpack.c.h.b16 %v313
    %v3624 = vunpack.c.l.b16 %v314
    %v3625 = vunpack.c.h.b16 %v314
    %v3626 = vunpack.c.l.b16 %v315
    %v3627 = vunpack.c.h.b16 %v315
    %v3628 = vunpack.c.l.b16 %v316
    %v3629 = vunpack.c.h.b16 %v316
    %v3630 = vunpack.c.l.b16 %v317
    %v3631 = vunpack.c.h.b16 %v317
    %v3632 = vunpack.c.l.b16 %v318
    %v3633 = vunpack.c.h.b16 %v318
    %v3634 = vunpack.c.l.b16 %v319
    %v3635 = vunpack.c.h.b16 %v319
    %v3636 = vunpack.c.l.b16 %v320
    %v3637 = vunpack.c.h.b16 %v320
    %v3638 = vunpack.c.l.b16 %v321
    %v3639 = vunpack.c.h.b16 %v321
    %v3640 = vunpack.c.l.b16 %v322
    %v3641 = vunpack.c.h.b16 %v322
    %v3642 = vunpack.c.l.b16 %v323
    %v3643 = vunpack.c.h.b16 %v323
    %v3644 = vunpack.c.l.b16 %v324
    %v3645 = vunpack.c.h.b16 %v324
    %v3646 = vunpack.c.l.b16 %v325
    %v3647 = vunpack.c.h.b16 %v325
    %v3648 = vunpack.c.l.b16 %v326
    %v3649 = vunpack.c.h.b16 %v326
    %v3650 = vunpack.c.l.b16 %v327
    %v3651 = vunpack.c.h.b16 %v327
    %v3652 = vunpack.c.l.b16 %v328
    %v3653 = vunpack.c.h.b16 %v328
    %v3654 = vunpack.c.l.b16 %v329
    %v3655 = vunpack.c.h.b16 %v329
    %v3656 = vunpack.c.l.b16 %v330
    %v3657 = vunpack.c.h.b16 %v330
    %v3658 = vunpack.c.l.b16 %v331
    %v3659 = vunpack.c.h.b16 %v331
    %v3660 = vunpack.c.l.b16 %v332
    %v3661 = vunpack.c.h.b16 %v332
    %v3662 = vunpack.c.l.b16 %v333
    %v3663 = vunpack.c.h.b16 %v333
    %v3664 = vunpack.c.l.b16 %v334
    %v3665 = vunpack.c.h.b16 %v334
    %v3666 = vunpack.c.l.b16 %v335
    %v3667 = vunpack.c.h.b16 %v335
    %v3668 = vunpack.c.l.b16 %v336
    %v3669 = vunpack.c.h.b16 %v336
    %v3670 = vunpack.c.l.b16 %v337
    %v3671 = vunpack.c.h.b16 %v337
    %v3672 = vunpack.c.l.b16 %v338
    %v3673 = vunpack.c.h.b16 %v338
    %v3674 = vunpack.c.l.b16 %v339
    %v3675 = vunpack.c.h.b16 %v339
    %v3676 = vunpack.c.l.b16 %v340
    %v3677 = vunpack.c.h.b16 %v340
    %v3678 = vunpack.c.l.b16 %v341
    %v3679 = vunpack.c.h.b16 %v341
    %v3680 = vunpack.c.l.b16 %v342
    %v3681 = vunpack.c.h.b16 %v342
    %v3682 = vunpack.c.l.b16 %v343
    %v3683 = vunpack.c.h.b16 %v343
    %v3684 = vunpack.c.l.b16 %v344
    %v3685 = vunpack.c.h.b16 %v344
    %v3686 = vunpack.c.l.b16 %v345
    %v3687 = vunpack.c.h.b16 %v345
    %v3688 = vunpack.c.l.b16 %v346
    %v3689 = vunpack.c.h.b16 %v346
    %v3690 = vunpack.c.l.b16 %v347
    %v3691 = vunpack.c.h.b16 %v347
    %v3692 = vunpack.c.l.b16 %v348
    %v3693 = vunpack.c.h.b16 %v348
    %v3694 = vunpack.c.l.b16 %v349
    %v3695 = vunpack.c.h.b16 %v349
    %v3696 = vunpack.c.l.b16 %v350
    %v3697 = vunpack.c.h.b16 %v350
    %v3698 = vunpack.c.l.b16 %v351
    %v3699 = vunpack.c.h.b16 %v351
    %v3700 = vpack.c.b16 %v3448, %v3444
    %v3701 = vpack.c.b16 %v3449, %v3445
    %v3702 = vpack.c.b16 %v3450, %v3446
    %v3703 = vpack.c.b16 %v3451, %v3447
    %v3704 = vpack.c.b16 %v3456, %v3452
    %v3705 = vpack.c.b16 %v3457, %v3453
    %v3706 = vpack.c.b16 %v3458, %v3454
    %v3707 = vpack.c.b16 %v3459, %v3455
    %v3708 = vpack.c.b16 %v3464, %v3460
    %v3709 = vpack.c.b16 %v3465, %v3461
    %v3710 = vpack.c.b16 %v3466, %v3462
    %v3711 = vpack.c.b16 %v3467, %v3463
    %v3712 = vpack.c.b16 %v3472, %v3468
    %v3713 = vpack.c.b16 %v3473, %v3469
    %v3714 = vpack.c.b16 %v3474, %v3470
    %v3715 = vpack.c.b16 %v3475, %v3471
    %v3716 = vpack.c.b16 %v3480, %v3476
    %v3717 = vpack.c.b16 %v3481, %v3477
    %v3718 = vpack.c.b16 %v3482, %v3478
    %v3719 = vpack.c.b16 %v3483, %v3479
    %v3720 = vpack.c.b16 %v3488, %v3484
    %v3721 = vpack.c.b16 %v3489, %v3485
    %v3722 = vpack.c.b16 %v3490, %v3486
    %v3723 = vpack.c.b16 %v3491, %v3487
    %v3724 = vpack.c.b16 %v3496, %v3492
    %v3725 = vpack.c.b16 %v3497, %v3493
    %v3726 = vpack.c.b16 %v3498, %v3494
    %v3727 = vpack.c.b16 %v3499, %v3495
    %v3728 = vpack.c.b16 %v3504, %v3500
    %v3729 = vpack.c.b16 %v3505, %v3501
    %v3730 = vpack.c.b16 %v3506, %v3502
    %v3731 = vpack.c.b16 %v3507, %v3503
    %v3732 = vpack.c.b16 %v3512, %v3508
    %v3733 = vpack.c.b16 %v3513, %v3509
    %v3734 = vpack.c.b16 %v3514, %v3510
    %v3735 = vpack.c.b16 %v3515, %v3511
    %v3736 = vpack.c.b16 %v3520, %v3516
    %v3737 = vpack.c.b16 %v3521, %v3517
    %v3738 = vpack.c.b16 %v3522, %v3518
    %v3739 = vpack.c.b16 %v3523, %v3519
    %v3740 = vpack.c.b16 %v3528, %v3524
    %v3741 = vpack.c.b16 %v3529, %v3525
    %v3742 = vpack.c.b16 %v3530, %v3526
    %v3743 = vpack.c.b16 %v3531, %v3527
    %v3744 = vpack.c.b16 %v3536, %v3532
    %v3745 = vpack.c.b16 %v3537, %v3533
    %v3746 = vpack.c.b16 %v3538, %v3534
    %v3747 = vpack.c.b16 %v3539, %v3535
    %v3748 = vpack.c.b16 %v3544, %v3540
    %v3749 = vpack.c.b16 %v3545, %v3541
    %v3750 = vpack.c.b16 %v3546, %v3542
    %v3751 = vpack.c.b16 %v3547, %v3543
    %v3752 = vpack.c.b16 %v3552, %v3548
    %v3753 = vpack.c.b16 %v3553, %v3549
    %v3754 = vpack.c.b16 %v3554, %v3550
    %v3755 = vpack.c.b16 %v3555, %v3551
    %v3756 = vpack.c.b16 %v3560, %v3556
    %v3757 = vpack.c.b16 %v3561, %v3557
    %v3758 = vpack.c.b16 %v3562, %v3558
    %v3759 = vpack.c.b16 %v3563, %v3559
    %v3760 = vpack.c.b16 %v3568, %v3564
    %v3761 = vpack.c.b16 %v3569, %v3565
    %v3762 = vpack.c.b16 %v3570, %v3566
    %v3763 = vpack.c.b16 %v3571, %v3567
    %v3764 = vpack.c.b16 %v3576, %v3572
    %v3765 = vpack.c.b16 %v3577, %v3573
    %v3766 = vpack.c.b16 %v3578, %v3574
    %v3767 = vpack.c.b16 %v3579, %v3575
    %v3768 = vpack.c.b16 %v3584, %v3580
    %v3769 = vpack.c.b16 %v3585, %v3581
    %v3770 = vpack.c.b16 %v3586, %v3582
    %v3771 = vpack.c.b16 %v3587, %v3583
    %v3772 = vpack.c.b16 %v3592, %v3588
    %v3773 = vpack.c.b16 %v3593, %v3589
    %v3774 = vpack.c.b16 %v3594, %v3590
    %v3775 = vpack.c.b16 %v3595, %v3591
    %v3776 = vpack.c.b16 %v3600, %v3596
    %v3777 = vpack.c.b16 %v3601, %v3597
    %v3778 = vpack.c.b16 %v3602, %v3598
    %v3779 = vpack.c.b16 %v3603, %v3599
    %v3780 = vpack.c.b16 %v3608, %v3604
    %v3781 = vpack.c.b16 %v3609, %v3605
    %v3782 = vpack.c.b16 %v3610, %v3606
    %v3783 = vpack.c.b16 %v3611, %v3607
    %v3784 = vpack.c.b16 %v3616, %v3612
    %v3785 = vpack.c.b16 %v3617, %v3613
    %v3786 = vpack.c.b16 %v3618, %v3614
    %v3787 = vpack.c.b16 %v3619, %v3615
    %v3788 = vpack.c.b16 %v3624, %v3620
    %v3789 = vpack.c.b16 %v3625, %v3621
    %v3790 = vpack.c.b16 %v3626, %v3622
    %v3791 = vpack.c.b16 %v3627, %v3623
    %v3792 = vpack.c.b16 %v3632, %v3628
    %v3793 = vpack.c.b16 %v3633, %v3629
    %v3794 = vpack.c.b16 %v3634, %v3630
    %v3795 = vpack.c.b16 %v3635, %v3631
    %v3796 = vpack.c.b16 %v3640, %v3636
    %v3797 = vpack.c.b16 %v3641, %v3637
    %v3798 = vpack.c.b16 %v3642, %v3638
    %v3799 = vpack.c.b16 %v3643, %v3639
    %v3800 = vpack.c.b16 %v3648, %v3644
    %v3801 = vpack.c.b16 %v3649, %v3645
    %v3802 = vpack.c.b16 %v3650, %v3646
    %v3803 = vpack.c.b16 %v3651, %v3647
    %v3804 = vpack.c.b16 %v3656, %v3652
    %v3805 = vpack.c.b16 %v3657, %v3653
    %v3806 = vpack.c.b16 %v3658, %v3654
    %v3807 = vpack.c.b16 %v3659, %v3655
    %v3808 = vpack.c.b16 %v3664, %v3660
    %v3809 = vpack.c.b16 %v3665, %v3661
    %v3810 = vpack.c.b16 %v3666, %v3662
    %v3811 = vpack.c.b16 %v3667, %v3663
    %v3812 = vpack.c.b16 %v3672, %v3668
    %v3813 = vpack.c.b16 %v3673, %v3669
    %v3814 = vpack.c.b16 %v3674, %v3670
    %v3815 = vpack.c.b16 %v3675, %v3671
    %v3816 = vpack.c.b16 %v3680, %v3676
    %v3817 = vpack.c.b16 %v3681, %v3677
    %v3818 = vpack.c.b16 %v3682, %v3678
    %v3819 = vpack.c.b16 %v3683, %v3679
    %v3820 = vpack.c.b16 %v3688, %v3684
    %v3821 = vpack.c.b16 %v3689, %v3685
    %v3822 = vpack.c.b16 %v3690, %v3686
    %v3823 = vpack.c.b16 %v3691, %v3687
    %v3824 = vpack.c.b16 %v3696, %v3692
    %v3825 = vpack.c.b16 %v3697, %v3693
    %v3826 = vpack.c.b16 %v3698, %v3694
    %v3827 = vpack.c.b16 %v3699, %v3695
    %3956 = vmatprep.subr.bf16.mxu0 0
    %3957 = vmatpush1.bf16.msra.mxu0 %v3291
    %3958 = vmatprep.subr.bf16.mxu0 0
    %3959 = vmatpush1.bf16.msra.mxu0 %v3290
    %3960 = vmatprep.subr.bf16.mxu0 0
    %3961 = vmatpush1.bf16.msra.mxu0 %v3289
    %3962 = vmatprep.subr.bf16.mxu0 0
    %3963 = vmatpush1.bf16.msra.mxu0 %v3288
    %3964 = vmatprep.subr.bf16.mxu0 0
    %3965 = vmatpush1.bf16.msra.mxu0 %v3287
    %3966 = vmatprep.subr.bf16.mxu0 0
    %3967 = vmatpush1.bf16.msra.mxu0 %v3286
    %3968 = vmatprep.subr.bf16.mxu0 0
    %3969 = vmatpush1.bf16.msra.mxu0 %v3285
    %3970 = vmatprep.subr.bf16.mxu0 0
    %3971 = vmatpush1.bf16.msra.mxu0 %v3284
    %3972 = vmatprep.subr.bf16.mxu0 0
    %3973 = vmatpush2.bf16.msra.mxu0 %v3299
    %3974 = vmatprep.subr.bf16.mxu0 0
    %3975 = vmatpush2.bf16.msra.mxu0 %v3298
    %3976 = vmatprep.subr.bf16.mxu0 0
    %3977 = vmatpush2.bf16.msra.mxu0 %v3297
    %3978 = vmatprep.subr.bf16.mxu0 0
    %3979 = vmatpush2.bf16.msra.mxu0 %v3296
    %3980 = vmatprep.subr.bf16.mxu0 0
    %3981 = vmatpush2.bf16.msra.mxu0 %v3295
    %3982 = vmatprep.subr.bf16.mxu0 0
    %3983 = vmatpush2.bf16.msra.mxu0 %v3294
    %3984 = vmatprep.subr.bf16.mxu0 0
    %3985 = vmatpush2.bf16.msra.mxu0 %v3293
    %3986 = vmatprep.subr.bf16.mxu0 0
    %3987 = vmatpush2.bf16.msra.mxu0 %v3292
    %3988 = vmatprep.mubr.bf16.mxu0 %v3701
    %3989 = vmatmul.mubr.bf16.gmra.mxu0 %v3700
    %v3990 = vpop.f32.mrf.mxu0
    %v3991 = vadd.f32 0.0, %v3990
    %v3992 = vpop.f32.mrf.mxu0
    %v3993 = vpop.f32.mrf.mxu0
    %v3994 = vadd.f32 0.0, %v3993
    %v3995 = vpop.f32.mrf.mxu0
    %3996 = vmatprep.mubr.bf16.mxu0 %v3705
    %3997 = vmatmul.mubr.bf16.gmra.mxu0 %v3704
    %v3998 = vpop.f32.mrf.mxu0
    %v3999 = vadd.f32 0.0, %v3998
    %v4000 = vpop.f32.mrf.mxu0
    %v4001 = vpop.f32.mrf.mxu0
    %v4002 = vadd.f32 0.0, %v4001
    %v4003 = vpop.f32.mrf.mxu0
    %4004 = vmatprep.mubr.bf16.mxu0 %v3709
    %4005 = vmatmul.mubr.bf16.gmra.mxu0 %v3708
    %v4006 = vpop.f32.mrf.mxu0
    %v4007 = vadd.f32 0.0, %v4006
    %v4008 = vpop.f32.mrf.mxu0
    %v4009 = vpop.f32.mrf.mxu0
    %v4010 = vadd.f32 0.0, %v4009
    %v4011 = vpop.f32.mrf.mxu0
    %4012 = vmatprep.mubr.bf16.mxu0 %v3713
    %4013 = vmatmul.mubr.bf16.gmra.mxu0 %v3712
    %v4014 = vpop.f32.mrf.mxu0
    %v4015 = vadd.f32 0.0, %v4014
    %v4016 = vpop.f32.mrf.mxu0
    %v4017 = vpop.f32.mrf.mxu0
    %v4018 = vadd.f32 0.0, %v4017
    %v4019 = vpop.f32.mrf.mxu0
    %4020 = vmatprep.mubr.bf16.mxu0 %v3717
    %4021 = vmatmul.mubr.bf16.gmra.mxu0 %v3716
    %v4022 = vpop.f32.mrf.mxu0
    %v4023 = vadd.f32 0.0, %v4022
    %v4024 = vpop.f32.mrf.mxu0
    %v4025 = vpop.f32.mrf.mxu0
    %v4026 = vadd.f32 0.0, %v4025
    %v4027 = vpop.f32.mrf.mxu0
    %4028 = vmatprep.mubr.bf16.mxu0 %v3721
    %4029 = vmatmul.mubr.bf16.gmra.mxu0 %v3720
    %v4030 = vpop.f32.mrf.mxu0
    %v4031 = vadd.f32 0.0, %v4030
    %v4032 = vpop.f32.mrf.mxu0
    %v4033 = vpop.f32.mrf.mxu0
    %v4034 = vadd.f32 0.0, %v4033
    %v4035 = vpop.f32.mrf.mxu0
    %4036 = vmatprep.mubr.bf16.mxu0 %v3725
    %4037 = vmatmul.mubr.bf16.gmra.mxu0 %v3724
    %v4038 = vpop.f32.mrf.mxu0
    %v4039 = vadd.f32 0.0, %v4038
    %v4040 = vpop.f32.mrf.mxu0
    %v4041 = vpop.f32.mrf.mxu0
    %v4042 = vadd.f32 0.0, %v4041
    %v4043 = vpop.f32.mrf.mxu0
    %4044 = vmatprep.mubr.bf16.mxu0 %v3729
    %4045 = vmatmul.mubr.bf16.gmra.mxu0 %v3728
    %v4046 = vpop.f32.mrf.mxu0
    %v4047 = vadd.f32 0.0, %v4046
    %v4048 = vpop.f32.mrf.mxu0
    %v4049 = vpop.f32.mrf.mxu0
    %v4050 = vadd.f32 0.0, %v4049
    %v4051 = vpop.f32.mrf.mxu0
    %4052 = vmatprep.mubr.bf16.mxu0 %v3733
    %4053 = vmatmul.mubr.bf16.gmra.mxu0 %v3732
    %v4054 = vpop.f32.mrf.mxu0
    %v4055 = vadd.f32 0.0, %v4054
    %v4056 = vpop.f32.mrf.mxu0
    %v4057 = vpop.f32.mrf.mxu0
    %v4058 = vadd.f32 0.0, %v4057
    %v4059 = vpop.f32.mrf.mxu0
    %4060 = vmatprep.mubr.bf16.mxu0 %v3737
    %4061 = vmatmul.mubr.bf16.gmra.mxu0 %v3736
    %v4062 = vpop.f32.mrf.mxu0
    %v4063 = vadd.f32 0.0, %v4062
    %v4064 = vpop.f32.mrf.mxu0
    %v4065 = vpop.f32.mrf.mxu0
    %v4066 = vadd.f32 0.0, %v4065
    %v4067 = vpop.f32.mrf.mxu0
    %4068 = vmatprep.mubr.bf16.mxu0 %v3741
    %4069 = vmatmul.mubr.bf16.gmra.mxu0 %v3740
    %v4070 = vpop.f32.mrf.mxu0
    %v4071 = vadd.f32 0.0, %v4070
    %v4072 = vpop.f32.mrf.mxu0
    %v4073 = vpop.f32.mrf.mxu0
    %v4074 = vadd.f32 0.0, %v4073
    %v4075 = vpop.f32.mrf.mxu0
    %4076 = vmatprep.mubr.bf16.mxu0 %v3745
    %4077 = vmatmul.mubr.bf16.gmra.mxu0 %v3744
    %v4078 = vpop.f32.mrf.mxu0
    %v4079 = vadd.f32 0.0, %v4078
    %v4080 = vpop.f32.mrf.mxu0
    %v4081 = vpop.f32.mrf.mxu0
    %v4082 = vadd.f32 0.0, %v4081
    %v4083 = vpop.f32.mrf.mxu0
    %4084 = vmatprep.mubr.bf16.mxu0 %v3749
    %4085 = vmatmul.mubr.bf16.gmra.mxu0 %v3748
    %v4086 = vpop.f32.mrf.mxu0
    %v4087 = vadd.f32 0.0, %v4086
    %v4088 = vpop.f32.mrf.mxu0
    %v4089 = vpop.f32.mrf.mxu0
    %v4090 = vadd.f32 0.0, %v4089
    %v4091 = vpop.f32.mrf.mxu0
    %4092 = vmatprep.mubr.bf16.mxu0 %v3753
    %4093 = vmatmul.mubr.bf16.gmra.mxu0 %v3752
    %v4094 = vpop.f32.mrf.mxu0
    %v4095 = vadd.f32 0.0, %v4094
    %v4096 = vpop.f32.mrf.mxu0
    %v4097 = vpop.f32.mrf.mxu0
    %v4098 = vadd.f32 0.0, %v4097
    %v4099 = vpop.f32.mrf.mxu0
    %4100 = vmatprep.mubr.bf16.mxu0 %v3757
    %4101 = vmatmul.mubr.bf16.gmra.mxu0 %v3756
    %v4102 = vpop.f32.mrf.mxu0
    %v4103 = vadd.f32 0.0, %v4102
    %v4104 = vpop.f32.mrf.mxu0
    %v4105 = vpop.f32.mrf.mxu0
    %v4106 = vadd.f32 0.0, %v4105
    %v4107 = vpop.f32.mrf.mxu0
    %4108 = vmatprep.mubr.bf16.mxu0 %v3761
    %4109 = vmatmul.mubr.bf16.gmra.mxu0 %v3760
    %v4110 = vpop.f32.mrf.mxu0
    %v4111 = vadd.f32 0.0, %v4110
    %v4112 = vpop.f32.mrf.mxu0
    %v4113 = vpop.f32.mrf.mxu0
    %v4114 = vadd.f32 0.0, %v4113
    %v4115 = vpop.f32.mrf.mxu0
    %4116 = vmatprep.mubr.bf16.mxu0 %v3765
    %4117 = vmatmul.mubr.bf16.gmra.mxu0 %v3764
    %v4118 = vpop.f32.mrf.mxu0
    %v4119 = vadd.f32 0.0, %v4118
    %v4120 = vpop.f32.mrf.mxu0
    %v4121 = vpop.f32.mrf.mxu0
    %v4122 = vadd.f32 0.0, %v4121
    %v4123 = vpop.f32.mrf.mxu0
    %4124 = vmatprep.mubr.bf16.mxu0 %v3769
    %4125 = vmatmul.mubr.bf16.gmra.mxu0 %v3768
    %v4126 = vpop.f32.mrf.mxu0
    %v4127 = vadd.f32 0.0, %v4126
    %v4128 = vpop.f32.mrf.mxu0
    %v4129 = vpop.f32.mrf.mxu0
    %v4130 = vadd.f32 0.0, %v4129
    %v4131 = vpop.f32.mrf.mxu0
    %4132 = vmatprep.mubr.bf16.mxu0 %v3773
    %4133 = vmatmul.mubr.bf16.gmra.mxu0 %v3772
    %v4134 = vpop.f32.mrf.mxu0
    %v4135 = vadd.f32 0.0, %v4134
    %v4136 = vpop.f32.mrf.mxu0
    %v4137 = vpop.f32.mrf.mxu0
    %v4138 = vadd.f32 0.0, %v4137
    %v4139 = vpop.f32.mrf.mxu0
    %4140 = vmatprep.mubr.bf16.mxu0 %v3777
    %4141 = vmatmul.mubr.bf16.gmra.mxu0 %v3776
    %v4142 = vpop.f32.mrf.mxu0
    %v4143 = vadd.f32 0.0, %v4142
    %v4144 = vpop.f32.mrf.mxu0
    %v4145 = vpop.f32.mrf.mxu0
    %v4146 = vadd.f32 0.0, %v4145
    %v4147 = vpop.f32.mrf.mxu0
    %4148 = vmatprep.mubr.bf16.mxu0 %v3781
    %4149 = vmatmul.mubr.bf16.gmra.mxu0 %v3780
    %v4150 = vpop.f32.mrf.mxu0
    %v4151 = vadd.f32 0.0, %v4150
    %v4152 = vpop.f32.mrf.mxu0
    %v4153 = vpop.f32.mrf.mxu0
    %v4154 = vadd.f32 0.0, %v4153
    %v4155 = vpop.f32.mrf.mxu0
    %4156 = vmatprep.mubr.bf16.mxu0 %v3785
    %4157 = vmatmul.mubr.bf16.gmra.mxu0 %v3784
    %v4158 = vpop.f32.mrf.mxu0
    %v4159 = vadd.f32 0.0, %v4158
    %v4160 = vpop.f32.mrf.mxu0
    %v4161 = vpop.f32.mrf.mxu0
    %v4162 = vadd.f32 0.0, %v4161
    %v4163 = vpop.f32.mrf.mxu0
    %4164 = vmatprep.mubr.bf16.mxu0 %v3789
    %4165 = vmatmul.mubr.bf16.gmra.mxu0 %v3788
    %v4166 = vpop.f32.mrf.mxu0
    %v4167 = vadd.f32 0.0, %v4166
    %v4168 = vpop.f32.mrf.mxu0
    %v4169 = vpop.f32.mrf.mxu0
    %v4170 = vadd.f32 0.0, %v4169
    %v4171 = vpop.f32.mrf.mxu0
    %4172 = vmatprep.mubr.bf16.mxu0 %v3793
    %4173 = vmatmul.mubr.bf16.gmra.mxu0 %v3792
    %v4174 = vpop.f32.mrf.mxu0
    %v4175 = vadd.f32 0.0, %v4174
    %v4176 = vpop.f32.mrf.mxu0
    %v4177 = vpop.f32.mrf.mxu0
    %v4178 = vadd.f32 0.0, %v4177
    %v4179 = vpop.f32.mrf.mxu0
    %4180 = vmatprep.mubr.bf16.mxu0 %v3797
    %4181 = vmatmul.mubr.bf16.gmra.mxu0 %v3796
    %v4182 = vpop.f32.mrf.mxu0
    %v4183 = vadd.f32 0.0, %v4182
    %v4184 = vpop.f32.mrf.mxu0
    %v4185 = vpop.f32.mrf.mxu0
    %v4186 = vadd.f32 0.0, %v4185
    %v4187 = vpop.f32.mrf.mxu0
    %4188 = vmatprep.mubr.bf16.mxu0 %v3801
    %4189 = vmatmul.mubr.bf16.gmra.mxu0 %v3800
    %v4190 = vpop.f32.mrf.mxu0
    %v4191 = vadd.f32 0.0, %v4190
    %v4192 = vpop.f32.mrf.mxu0
    %v4193 = vpop.f32.mrf.mxu0
    %v4194 = vadd.f32 0.0, %v4193
    %v4195 = vpop.f32.mrf.mxu0
    %4196 = vmatprep.mubr.bf16.mxu0 %v3805
    %4197 = vmatmul.mubr.bf16.gmra.mxu0 %v3804
    %v4198 = vpop.f32.mrf.mxu0
    %v4199 = vadd.f32 0.0, %v4198
    %v4200 = vpop.f32.mrf.mxu0
    %v4201 = vpop.f32.mrf.mxu0
    %v4202 = vadd.f32 0.0, %v4201
    %v4203 = vpop.f32.mrf.mxu0
    %4204 = vmatprep.mubr.bf16.mxu0 %v3809
    %4205 = vmatmul.mubr.bf16.gmra.mxu0 %v3808
    %v4206 = vpop.f32.mrf.mxu0
    %v4207 = vadd.f32 0.0, %v4206
    %v4208 = vpop.f32.mrf.mxu0
    %v4209 = vpop.f32.mrf.mxu0
    %v4210 = vadd.f32 0.0, %v4209
    %v4211 = vpop.f32.mrf.mxu0
    %4212 = vmatprep.mubr.bf16.mxu0 %v3813
    %4213 = vmatmul.mubr.bf16.gmra.mxu0 %v3812
    %v4214 = vpop.f32.mrf.mxu0
    %v4215 = vadd.f32 0.0, %v4214
    %v4216 = vpop.f32.mrf.mxu0
    %v4217 = vpop.f32.mrf.mxu0
    %v4218 = vadd.f32 0.0, %v4217
    %v4219 = vpop.f32.mrf.mxu0
    %4220 = vmatprep.mubr.bf16.mxu0 %v3817
    %4221 = vmatmul.mubr.bf16.gmra.mxu0 %v3816
    %v4222 = vpop.f32.mrf.mxu0
    %v4223 = vadd.f32 0.0, %v4222
    %v4224 = vpop.f32.mrf.mxu0
    %v4225 = vpop.f32.mrf.mxu0
    %v4226 = vadd.f32 0.0, %v4225
    %v4227 = vpop.f32.mrf.mxu0
    %4228 = vmatprep.mubr.bf16.mxu0 %v3821
    %4229 = vmatmul.mubr.bf16.gmra.mxu0 %v3820
    %v4230 = vpop.f32.mrf.mxu0
    %v4231 = vadd.f32 0.0, %v4230
    %v4232 = vpop.f32.mrf.mxu0
    %v4233 = vpop.f32.mrf.mxu0
    %v4234 = vadd.f32 0.0, %v4233
    %v4235 = vpop.f32.mrf.mxu0
    %4236 = vmatprep.mubr.bf16.mxu0 %v3825
    %4237 = vmatmul.mubr.bf16.gmra.mxu0 %v3824
    %v4238 = vpop.f32.mrf.mxu0
    %v4239 = vadd.f32 0.0, %v4238
    %v4240 = vpop.f32.mrf.mxu0
    %v4241 = vpop.f32.mrf.mxu0
    %v4242 = vadd.f32 0.0, %v4241
    %v4243 = vpop.f32.mrf.mxu0
    %4244 = vdwg.mxu0
    %4245 = vmatprep.subr.bf16.mxu0 0
    %4246 = vmatpush1.bf16.msra.mxu0 %v3307
    %4247 = vmatprep.subr.bf16.mxu0 0
    %4248 = vmatpush1.bf16.msra.mxu0 %v3306
    %4249 = vmatprep.subr.bf16.mxu0 0
    %4250 = vmatpush1.bf16.msra.mxu0 %v3305
    %4251 = vmatprep.subr.bf16.mxu0 0
    %4252 = vmatpush1.bf16.msra.mxu0 %v3304
    %4253 = vmatprep.subr.bf16.mxu0 0
    %4254 = vmatpush1.bf16.msra.mxu0 %v3303
    %4255 = vmatprep.subr.bf16.mxu0 0
    %4256 = vmatpush1.bf16.msra.mxu0 %v3302
    %4257 = vmatprep.subr.bf16.mxu0 0
    %4258 = vmatpush1.bf16.msra.mxu0 %v3301
    %4259 = vmatprep.subr.bf16.mxu0 0
    %4260 = vmatpush1.bf16.msra.mxu0 %v3300
    %4261 = vmatprep.subr.bf16.mxu0 0
    %4262 = vmatpush2.bf16.msra.mxu0 %v3315
    %4263 = vmatprep.subr.bf16.mxu0 0
    %4264 = vmatpush2.bf16.msra.mxu0 %v3314
    %4265 = vmatprep.subr.bf16.mxu0 0
    %4266 = vmatpush2.bf16.msra.mxu0 %v3313
    %4267 = vmatprep.subr.bf16.mxu0 0
    %4268 = vmatpush2.bf16.msra.mxu0 %v3312
    %4269 = vmatprep.subr.bf16.mxu0 0
    %4270 = vmatpush2.bf16.msra.mxu0 %v3311
    %4271 = vmatprep.subr.bf16.mxu0 0
    %4272 = vmatpush2.bf16.msra.mxu0 %v3310
    %4273 = vmatprep.subr.bf16.mxu0 0
    %4274 = vmatpush2.bf16.msra.mxu0 %v3309
    %4275 = vmatprep.subr.bf16.mxu0 0
    %4276 = vmatpush2.bf16.msra.mxu0 %v3308
    %4277 = vmatprep.mubr.bf16.mxu0 %v3703
    %4278 = vmatmul.mubr.bf16.gmra.mxu0 %v3702
    %v4279 = vpop.f32.mrf.mxu0
    %v4280 = vadd.f32 %v3991, %v4279
    %v4281 = vpop.f32.mrf.mxu0
    %v4282 = vpop.f32.mrf.mxu0
    %v4283 = vadd.f32 %v3994, %v4282
    %v4284 = vpop.f32.mrf.mxu0
    %4285 = vmatprep.mubr.bf16.mxu0 %v3707
    %4286 = vmatmul.mubr.bf16.gmra.mxu0 %v3706
    %v4287 = vpop.f32.mrf.mxu0
    %v4288 = vadd.f32 %v3999, %v4287
    %v4289 = vpop.f32.mrf.mxu0
    %v4290 = vpop.f32.mrf.mxu0
    %v4291 = vadd.f32 %v4002, %v4290
    %v4292 = vpop.f32.mrf.mxu0
    %4293 = vmatprep.mubr.bf16.mxu0 %v3711
    %4294 = vmatmul.mubr.bf16.gmra.mxu0 %v3710
    %v4295 = vpop.f32.mrf.mxu0
    %v4296 = vadd.f32 %v4007, %v4295
    %v4297 = vpop.f32.mrf.mxu0
    %v4298 = vpop.f32.mrf.mxu0
    %v4299 = vadd.f32 %v4010, %v4298
    %v4300 = vpop.f32.mrf.mxu0
    %4301 = vmatprep.mubr.bf16.mxu0 %v3715
    %4302 = vmatmul.mubr.bf16.gmra.mxu0 %v3714
    %v4303 = vpop.f32.mrf.mxu0
    %v4304 = vadd.f32 %v4015, %v4303
    %v4305 = vpop.f32.mrf.mxu0
    %v4306 = vpop.f32.mrf.mxu0
    %v4307 = vadd.f32 %v4018, %v4306
    %v4308 = vpop.f32.mrf.mxu0
    %4309 = vmatprep.mubr.bf16.mxu0 %v3719
    %4310 = vmatmul.mubr.bf16.gmra.mxu0 %v3718
    %v4311 = vpop.f32.mrf.mxu0
    %v4312 = vadd.f32 %v4023, %v4311
    %v4313 = vpop.f32.mrf.mxu0
    %v4314 = vpop.f32.mrf.mxu0
    %v4315 = vadd.f32 %v4026, %v4314
    %v4316 = vpop.f32.mrf.mxu0
    %4317 = vmatprep.mubr.bf16.mxu0 %v3723
    %4318 = vmatmul.mubr.bf16.gmra.mxu0 %v3722
    %v4319 = vpop.f32.mrf.mxu0
    %v4320 = vadd.f32 %v4031, %v4319
    %v4321 = vpop.f32.mrf.mxu0
    %v4322 = vpop.f32.mrf.mxu0
    %v4323 = vadd.f32 %v4034, %v4322
    %v4324 = vpop.f32.mrf.mxu0
    %4325 = vmatprep.mubr.bf16.mxu0 %v3727
    %4326 = vmatmul.mubr.bf16.gmra.mxu0 %v3726
    %v4327 = vpop.f32.mrf.mxu0
    %v4328 = vadd.f32 %v4039, %v4327
    %v4329 = vpop.f32.mrf.mxu0
    %v4330 = vpop.f32.mrf.mxu0
    %v4331 = vadd.f32 %v4042, %v4330
    %v4332 = vpop.f32.mrf.mxu0
    %4333 = vmatprep.mubr.bf16.mxu0 %v3731
    %4334 = vmatmul.mubr.bf16.gmra.mxu0 %v3730
    %v4335 = vpop.f32.mrf.mxu0
    %v4336 = vadd.f32 %v4047, %v4335
    %v4337 = vpop.f32.mrf.mxu0
    %v4338 = vpop.f32.mrf.mxu0
    %v4339 = vadd.f32 %v4050, %v4338
    %v4340 = vpop.f32.mrf.mxu0
    %4341 = vmatprep.mubr.bf16.mxu0 %v3735
    %4342 = vmatmul.mubr.bf16.gmra.mxu0 %v3734
    %v4343 = vpop.f32.mrf.mxu0
    %v4344 = vadd.f32 %v4055, %v4343
    %v4345 = vpop.f32.mrf.mxu0
    %v4346 = vpop.f32.mrf.mxu0
    %v4347 = vadd.f32 %v4058, %v4346
    %v4348 = vpop.f32.mrf.mxu0
    %4349 = vmatprep.mubr.bf16.mxu0 %v3739
    %4350 = vmatmul.mubr.bf16.gmra.mxu0 %v3738
    %v4351 = vpop.f32.mrf.mxu0
    %v4352 = vadd.f32 %v4063, %v4351
    %v4353 = vpop.f32.mrf.mxu0
    %v4354 = vpop.f32.mrf.mxu0
    %v4355 = vadd.f32 %v4066, %v4354
    %v4356 = vpop.f32.mrf.mxu0
    %4357 = vmatprep.mubr.bf16.mxu0 %v3743
    %4358 = vmatmul.mubr.bf16.gmra.mxu0 %v3742
    %v4359 = vpop.f32.mrf.mxu0
    %v4360 = vadd.f32 %v4071, %v4359
    %v4361 = vpop.f32.mrf.mxu0
    %v4362 = vpop.f32.mrf.mxu0
    %v4363 = vadd.f32 %v4074, %v4362
    %v4364 = vpop.f32.mrf.mxu0
    %4365 = vmatprep.mubr.bf16.mxu0 %v3747
    %4366 = vmatmul.mubr.bf16.gmra.mxu0 %v3746
    %v4367 = vpop.f32.mrf.mxu0
    %v4368 = vadd.f32 %v4079, %v4367
    %v4369 = vpop.f32.mrf.mxu0
    %v4370 = vpop.f32.mrf.mxu0
    %v4371 = vadd.f32 %v4082, %v4370
    %v4372 = vpop.f32.mrf.mxu0
    %4373 = vmatprep.mubr.bf16.mxu0 %v3751
    %4374 = vmatmul.mubr.bf16.gmra.mxu0 %v3750
    %v4375 = vpop.f32.mrf.mxu0
    %v4376 = vadd.f32 %v4087, %v4375
    %v4377 = vpop.f32.mrf.mxu0
    %v4378 = vpop.f32.mrf.mxu0
    %v4379 = vadd.f32 %v4090, %v4378
    %v4380 = vpop.f32.mrf.mxu0
    %4381 = vmatprep.mubr.bf16.mxu0 %v3755
    %4382 = vmatmul.mubr.bf16.gmra.mxu0 %v3754
    %v4383 = vpop.f32.mrf.mxu0
    %v4384 = vadd.f32 %v4095, %v4383
    %v4385 = vpop.f32.mrf.mxu0
    %v4386 = vpop.f32.mrf.mxu0
    %v4387 = vadd.f32 %v4098, %v4386
    %v4388 = vpop.f32.mrf.mxu0
    %4389 = vmatprep.mubr.bf16.mxu0 %v3759
    %4390 = vmatmul.mubr.bf16.gmra.mxu0 %v3758
    %v4391 = vpop.f32.mrf.mxu0
    %v4392 = vadd.f32 %v4103, %v4391
    %v4393 = vpop.f32.mrf.mxu0
    %v4394 = vpop.f32.mrf.mxu0
    %v4395 = vadd.f32 %v4106, %v4394
    %v4396 = vpop.f32.mrf.mxu0
    %4397 = vmatprep.mubr.bf16.mxu0 %v3763
    %4398 = vmatmul.mubr.bf16.gmra.mxu0 %v3762
    %v4399 = vpop.f32.mrf.mxu0
    %v4400 = vadd.f32 %v4111, %v4399
    %v4401 = vpop.f32.mrf.mxu0
    %v4402 = vpop.f32.mrf.mxu0
    %v4403 = vadd.f32 %v4114, %v4402
    %v4404 = vpop.f32.mrf.mxu0
    %4405 = vmatprep.mubr.bf16.mxu0 %v3767
    %4406 = vmatmul.mubr.bf16.gmra.mxu0 %v3766
    %v4407 = vpop.f32.mrf.mxu0
    %v4408 = vadd.f32 %v4119, %v4407
    %v4409 = vpop.f32.mrf.mxu0
    %v4410 = vpop.f32.mrf.mxu0
    %v4411 = vadd.f32 %v4122, %v4410
    %v4412 = vpop.f32.mrf.mxu0
    %4413 = vmatprep.mubr.bf16.mxu0 %v3771
    %4414 = vmatmul.mubr.bf16.gmra.mxu0 %v3770
    %v4415 = vpop.f32.mrf.mxu0
    %v4416 = vadd.f32 %v4127, %v4415
    %v4417 = vpop.f32.mrf.mxu0
    %v4418 = vpop.f32.mrf.mxu0
    %v4419 = vadd.f32 %v4130, %v4418
    %v4420 = vpop.f32.mrf.mxu0
    %4421 = vmatprep.mubr.bf16.mxu0 %v3775
    %4422 = vmatmul.mubr.bf16.gmra.mxu0 %v3774
    %v4423 = vpop.f32.mrf.mxu0
    %v4424 = vadd.f32 %v4135, %v4423
    %v4425 = vpop.f32.mrf.mxu0
    %v4426 = vpop.f32.mrf.mxu0
    %v4427 = vadd.f32 %v4138, %v4426
    %v4428 = vpop.f32.mrf.mxu0
    %4429 = vmatprep.mubr.bf16.mxu0 %v3779
    %4430 = vmatmul.mubr.bf16.gmra.mxu0 %v3778
    %v4431 = vpop.f32.mrf.mxu0
    %v4432 = vadd.f32 %v4143, %v4431
    %v4433 = vpop.f32.mrf.mxu0
    %v4434 = vpop.f32.mrf.mxu0
    %v4435 = vadd.f32 %v4146, %v4434
    %v4436 = vpop.f32.mrf.mxu0
    %4437 = vmatprep.mubr.bf16.mxu0 %v3783
    %4438 = vmatmul.mubr.bf16.gmra.mxu0 %v3782
    %v4439 = vpop.f32.mrf.mxu0
    %v4440 = vadd.f32 %v4151, %v4439
    %v4441 = vpop.f32.mrf.mxu0
    %v4442 = vpop.f32.mrf.mxu0
    %v4443 = vadd.f32 %v4154, %v4442
    %v4444 = vpop.f32.mrf.mxu0
    %4445 = vmatprep.mubr.bf16.mxu0 %v3787
    %4446 = vmatmul.mubr.bf16.gmra.mxu0 %v3786
    %v4447 = vpop.f32.mrf.mxu0
    %v4448 = vadd.f32 %v4159, %v4447
    %v4449 = vpop.f32.mrf.mxu0
    %v4450 = vpop.f32.mrf.mxu0
    %v4451 = vadd.f32 %v4162, %v4450
    %v4452 = vpop.f32.mrf.mxu0
    %4453 = vmatprep.mubr.bf16.mxu0 %v3791
    %4454 = vmatmul.mubr.bf16.gmra.mxu0 %v3790
    %v4455 = vpop.f32.mrf.mxu0
    %v4456 = vadd.f32 %v4167, %v4455
    %v4457 = vpop.f32.mrf.mxu0
    %v4458 = vpop.f32.mrf.mxu0
    %v4459 = vadd.f32 %v4170, %v4458
    %v4460 = vpop.f32.mrf.mxu0
    %4461 = vmatprep.mubr.bf16.mxu0 %v3795
    %4462 = vmatmul.mubr.bf16.gmra.mxu0 %v3794
    %v4463 = vpop.f32.mrf.mxu0
    %v4464 = vadd.f32 %v4175, %v4463
    %v4465 = vpop.f32.mrf.mxu0
    %v4466 = vpop.f32.mrf.mxu0
    %v4467 = vadd.f32 %v4178, %v4466
    %v4468 = vpop.f32.mrf.mxu0
    %4469 = vmatprep.mubr.bf16.mxu0 %v3799
    %4470 = vmatmul.mubr.bf16.gmra.mxu0 %v3798
    %v4471 = vpop.f32.mrf.mxu0
    %v4472 = vadd.f32 %v4183, %v4471
    %v4473 = vpop.f32.mrf.mxu0
    %v4474 = vpop.f32.mrf.mxu0
    %v4475 = vadd.f32 %v4186, %v4474
    %v4476 = vpop.f32.mrf.mxu0
    %4477 = vmatprep.mubr.bf16.mxu0 %v3803
    %4478 = vmatmul.mubr.bf16.gmra.mxu0 %v3802
    %v4479 = vpop.f32.mrf.mxu0
    %v4480 = vadd.f32 %v4191, %v4479
    %v4481 = vpop.f32.mrf.mxu0
    %v4482 = vpop.f32.mrf.mxu0
    %v4483 = vadd.f32 %v4194, %v4482
    %v4484 = vpop.f32.mrf.mxu0
    %4485 = vmatprep.mubr.bf16.mxu0 %v3807
    %4486 = vmatmul.mubr.bf16.gmra.mxu0 %v3806
    %v4487 = vpop.f32.mrf.mxu0
    %v4488 = vadd.f32 %v4199, %v4487
    %v4489 = vpop.f32.mrf.mxu0
    %v4490 = vpop.f32.mrf.mxu0
    %v4491 = vadd.f32 %v4202, %v4490
    %v4492 = vpop.f32.mrf.mxu0
    %4493 = vmatprep.mubr.bf16.mxu0 %v3811
    %4494 = vmatmul.mubr.bf16.gmra.mxu0 %v3810
    %v4495 = vpop.f32.mrf.mxu0
    %v4496 = vadd.f32 %v4207, %v4495
    %v4497 = vpop.f32.mrf.mxu0
    %v4498 = vpop.f32.mrf.mxu0
    %v4499 = vadd.f32 %v4210, %v4498
    %v4500 = vpop.f32.mrf.mxu0
    %4501 = vmatprep.mubr.bf16.mxu0 %v3815
    %4502 = vmatmul.mubr.bf16.gmra.mxu0 %v3814
    %v4503 = vpop.f32.mrf.mxu0
    %v4504 = vadd.f32 %v4215, %v4503
    %v4505 = vpop.f32.mrf.mxu0
    %v4506 = vpop.f32.mrf.mxu0
    %v4507 = vadd.f32 %v4218, %v4506
    %v4508 = vpop.f32.mrf.mxu0
    %4509 = vmatprep.mubr.bf16.mxu0 %v3819
    %4510 = vmatmul.mubr.bf16.gmra.mxu0 %v3818
    %v4511 = vpop.f32.mrf.mxu0
    %v4512 = vadd.f32 %v4223, %v4511
    %v4513 = vpop.f32.mrf.mxu0
    %v4514 = vpop.f32.mrf.mxu0
    %v4515 = vadd.f32 %v4226, %v4514
    %v4516 = vpop.f32.mrf.mxu0
    %4517 = vmatprep.mubr.bf16.mxu0 %v3823
    %4518 = vmatmul.mubr.bf16.gmra.mxu0 %v3822
    %v4519 = vpop.f32.mrf.mxu0
    %v4520 = vadd.f32 %v4231, %v4519
    %v4521 = vpop.f32.mrf.mxu0
    %v4522 = vpop.f32.mrf.mxu0
    %v4523 = vadd.f32 %v4234, %v4522
    %v4524 = vpop.f32.mrf.mxu0
    %4525 = vmatprep.mubr.bf16.mxu0 %v3827
    %4526 = vmatmul.mubr.bf16.gmra.mxu0 %v3826
    %v4527 = vpop.f32.mrf.mxu0
    %v4528 = vadd.f32 %v4239, %v4527
    %v4529 = vpop.f32.mrf.mxu0
    %v4530 = vpop.f32.mrf.mxu0
    %v4531 = vadd.f32 %v4242, %v4530
    %v4532 = vpop.f32.mrf.mxu0
    %4533 = vdwg.mxu0
    %v4534 = vpack.c.bf16 %v4283, %v4280
    %v4535 = vpack.c.bf16 %v4291, %v4288
    %v4536 = vpack.c.bf16 %v4299, %v4296
    %v4537 = vpack.c.bf16 %v4307, %v4304
    %v4538 = vpack.c.bf16 %v4315, %v4312
    %v4539 = vpack.c.bf16 %v4323, %v4320
    %v4540 = vpack.c.bf16 %v4331, %v4328
    %v4541 = vpack.c.bf16 %v4339, %v4336
    %v4542 = vpack.c.bf16 %v4347, %v4344
    %v4543 = vpack.c.bf16 %v4355, %v4352
    %v4544 = vpack.c.bf16 %v4363, %v4360
    %v4545 = vpack.c.bf16 %v4371, %v4368
    %v4546 = vpack.c.bf16 %v4379, %v4376
    %v4547 = vpack.c.bf16 %v4387, %v4384
    %v4548 = vpack.c.bf16 %v4395, %v4392
    %v4549 = vpack.c.bf16 %v4403, %v4400
    %v4550 = vpack.c.bf16 %v4411, %v4408
    %v4551 = vpack.c.bf16 %v4419, %v4416
    %v4552 = vpack.c.bf16 %v4427, %v4424
    %v4553 = vpack.c.bf16 %v4435, %v4432
    %v4554 = vpack.c.bf16 %v4443, %v4440
    %v4555 = vpack.c.bf16 %v4451, %v4448
    %v4556 = vpack.c.bf16 %v4459, %v4456
    %v4557 = vpack.c.bf16 %v4467, %v4464
    %v4558 = vpack.c.bf16 %v4475, %v4472
    %v4559 = vpack.c.bf16 %v4483, %v4480
    %v4560 = vpack.c.bf16 %v4491, %v4488
    %v4561 = vpack.c.bf16 %v4499, %v4496
    %v4562 = vpack.c.bf16 %v4507, %v4504
    %v4563 = vpack.c.bf16 %v4515, %v4512
    %v4564 = vpack.c.bf16 %v4523, %v4520
    %v4565 = vpack.c.bf16 %v4531, %v4528
    %4566 = vmatprep.subr.bf16.mxu0 0
    %4567 = vmatpush1.bf16.msra.mxu0 %v1937
    %4568 = vmatprep.subr.bf16.mxu0 0
    %4569 = vmatpush1.bf16.msra.mxu0 %v1936
    %4570 = vmatprep.subr.bf16.mxu0 0
    %4571 = vmatpush1.bf16.msra.mxu0 %v1935
    %4572 = vmatprep.subr.bf16.mxu0 0
    %4573 = vmatpush1.bf16.msra.mxu0 %v1934
    %4574 = vmatprep.subr.bf16.mxu0 0
    %4575 = vmatpush1.bf16.msra.mxu0 %v1933
    %4576 = vmatprep.subr.bf16.mxu0 0
    %4577 = vmatpush1.bf16.msra.mxu0 %v1932
    %4578 = vmatprep.subr.bf16.mxu0 0
    %4579 = vmatpush1.bf16.msra.mxu0 %v1931
    %4580 = vmatprep.subr.bf16.mxu0 0
    %4581 = vmatpush1.bf16.msra.mxu0 %v1930
    %4582 = vmatprep.subr.bf16.mxu0 0
    %4583 = vmatpush2.bf16.msra.mxu0 0
    %4584 = vmatprep.subr.bf16.mxu0 0
    %4585 = vmatpush2.bf16.msra.mxu0 0
    %4586 = vmatprep.subr.bf16.mxu0 0
    %4587 = vmatpush2.bf16.msra.mxu0 0
    %4588 = vmatprep.subr.bf16.mxu0 0
    %4589 = vmatpush2.bf16.msra.mxu0 0
    %4590 = vmatprep.subr.bf16.mxu0 0
    %4591 = vmatpush2.bf16.msra.mxu0 0
    %4592 = vmatprep.subr.bf16.mxu0 0
    %4593 = vmatpush2.bf16.msra.mxu0 0
    %4594 = vmatprep.subr.bf16.mxu0 0
    %4595 = vmatpush2.bf16.msra.mxu0 0
    %4596 = vmatprep.subr.bf16.mxu0 0
    %4597 = vmatpush2.bf16.msra.mxu0 0
    %4598 = vmatprep.mubr.bf16.mxu0 0
    %4599 = vmatmul.mubr.bf16.gmra.mxu0 %v4534
    %v4600 = vpop.f32.mrf.mxu0
    %v4601 = vadd.f32 %v1896, %v4600
    %v4602 = vpop.f32.mrf.mxu0
    %v4603 = vpop.f32.mrf.mxu0
    %v4604 = vadd.f32 %v1896, %v4603
    %v4605 = vpop.f32.mrf.mxu0
    %4606 = vmatprep.mubr.bf16.mxu0 0
    %4607 = vmatmul.mubr.bf16.gmra.mxu0 %v4535
    %v4608 = vpop.f32.mrf.mxu0
    %v4609 = vadd.f32 %v1896, %v4608
    %v4610 = vpop.f32.mrf.mxu0
    %v4611 = vpop.f32.mrf.mxu0
    %v4612 = vadd.f32 %v1896, %v4611
    %v4613 = vpop.f32.mrf.mxu0
    %4614 = vmatprep.mubr.bf16.mxu0 0
    %4615 = vmatmul.mubr.bf16.gmra.mxu0 %v4536
    %v4616 = vpop.f32.mrf.mxu0
    %v4617 = vadd.f32 %v1896, %v4616
    %v4618 = vpop.f32.mrf.mxu0
    %v4619 = vpop.f32.mrf.mxu0
    %v4620 = vadd.f32 %v1896, %v4619
    %v4621 = vpop.f32.mrf.mxu0
    %4622 = vmatprep.mubr.bf16.mxu0 0
    %4623 = vmatmul.mubr.bf16.gmra.mxu0 %v4537
    %v4624 = vpop.f32.mrf.mxu0
    %v4625 = vadd.f32 %v1896, %v4624
    %v4626 = vpop.f32.mrf.mxu0
    %v4627 = vpop.f32.mrf.mxu0
    %v4628 = vadd.f32 %v1896, %v4627
    %v4629 = vpop.f32.mrf.mxu0
    %4630 = vmatprep.mubr.bf16.mxu0 0
    %4631 = vmatmul.mubr.bf16.gmra.mxu0 %v4538
    %v4632 = vpop.f32.mrf.mxu0
    %v4633 = vadd.f32 %v1896, %v4632
    %v4634 = vpop.f32.mrf.mxu0
    %v4635 = vpop.f32.mrf.mxu0
    %v4636 = vadd.f32 %v1896, %v4635
    %v4637 = vpop.f32.mrf.mxu0
    %4638 = vmatprep.mubr.bf16.mxu0 0
    %4639 = vmatmul.mubr.bf16.gmra.mxu0 %v4539
    %v4640 = vpop.f32.mrf.mxu0
    %v4641 = vadd.f32 %v1896, %v4640
    %v4642 = vpop.f32.mrf.mxu0
    %v4643 = vpop.f32.mrf.mxu0
    %v4644 = vadd.f32 %v1896, %v4643
    %v4645 = vpop.f32.mrf.mxu0
    %4646 = vmatprep.mubr.bf16.mxu0 0
    %4647 = vmatmul.mubr.bf16.gmra.mxu0 %v4540
    %v4648 = vpop.f32.mrf.mxu0
    %v4649 = vadd.f32 %v1896, %v4648
    %v4650 = vpop.f32.mrf.mxu0
    %v4651 = vpop.f32.mrf.mxu0
    %v4652 = vadd.f32 %v1896, %v4651
    %v4653 = vpop.f32.mrf.mxu0
    %4654 = vmatprep.mubr.bf16.mxu0 0
    %4655 = vmatmul.mubr.bf16.gmra.mxu0 %v4541
    %v4656 = vpop.f32.mrf.mxu0
    %v4657 = vadd.f32 %v1896, %v4656
    %v4658 = vpop.f32.mrf.mxu0
    %v4659 = vpop.f32.mrf.mxu0
    %v4660 = vadd.f32 %v1896, %v4659
    %v4661 = vpop.f32.mrf.mxu0
    %4662 = vmatprep.mubr.bf16.mxu0 0
    %4663 = vmatmul.mubr.bf16.gmra.mxu0 %v4542
    %v4664 = vpop.f32.mrf.mxu0
    %v4665 = vadd.f32 %v1896, %v4664
    %v4666 = vpop.f32.mrf.mxu0
    %v4667 = vpop.f32.mrf.mxu0
    %v4668 = vadd.f32 %v1896, %v4667
    %v4669 = vpop.f32.mrf.mxu0
    %4670 = vmatprep.mubr.bf16.mxu0 0
    %4671 = vmatmul.mubr.bf16.gmra.mxu0 %v4543
    %v4672 = vpop.f32.mrf.mxu0
    %v4673 = vadd.f32 %v1896, %v4672
    %v4674 = vpop.f32.mrf.mxu0
    %v4675 = vpop.f32.mrf.mxu0
    %v4676 = vadd.f32 %v1896, %v4675
    %v4677 = vpop.f32.mrf.mxu0
    %4678 = vmatprep.mubr.bf16.mxu0 0
    %4679 = vmatmul.mubr.bf16.gmra.mxu0 %v4544
    %v4680 = vpop.f32.mrf.mxu0
    %v4681 = vadd.f32 %v1896, %v4680
    %v4682 = vpop.f32.mrf.mxu0
    %v4683 = vpop.f32.mrf.mxu0
    %v4684 = vadd.f32 %v1896, %v4683
    %v4685 = vpop.f32.mrf.mxu0
    %4686 = vmatprep.mubr.bf16.mxu0 0
    %4687 = vmatmul.mubr.bf16.gmra.mxu0 %v4545
    %v4688 = vpop.f32.mrf.mxu0
    %v4689 = vadd.f32 %v1896, %v4688
    %v4690 = vpop.f32.mrf.mxu0
    %v4691 = vpop.f32.mrf.mxu0
    %v4692 = vadd.f32 %v1896, %v4691
    %v4693 = vpop.f32.mrf.mxu0
    %4694 = vmatprep.mubr.bf16.mxu0 0
    %4695 = vmatmul.mubr.bf16.gmra.mxu0 %v4546
    %v4696 = vpop.f32.mrf.mxu0
    %v4697 = vadd.f32 %v1896, %v4696
    %v4698 = vpop.f32.mrf.mxu0
    %v4699 = vpop.f32.mrf.mxu0
    %v4700 = vadd.f32 %v1896, %v4699
    %v4701 = vpop.f32.mrf.mxu0
    %4702 = vmatprep.mubr.bf16.mxu0 0
    %4703 = vmatmul.mubr.bf16.gmra.mxu0 %v4547
    %v4704 = vpop.f32.mrf.mxu0
    %v4705 = vadd.f32 %v1896, %v4704
    %v4706 = vpop.f32.mrf.mxu0
    %v4707 = vpop.f32.mrf.mxu0
    %v4708 = vadd.f32 %v1896, %v4707
    %v4709 = vpop.f32.mrf.mxu0
    %4710 = vmatprep.mubr.bf16.mxu0 0
    %4711 = vmatmul.mubr.bf16.gmra.mxu0 %v4548
    %v4712 = vpop.f32.mrf.mxu0
    %v4713 = vadd.f32 %v1896, %v4712
    %v4714 = vpop.f32.mrf.mxu0
    %v4715 = vpop.f32.mrf.mxu0
    %v4716 = vadd.f32 %v1896, %v4715
    %v4717 = vpop.f32.mrf.mxu0
    %4718 = vmatprep.mubr.bf16.mxu0 0
    %4719 = vmatmul.mubr.bf16.gmra.mxu0 %v4549
    %v4720 = vpop.f32.mrf.mxu0
    %v4721 = vadd.f32 %v1896, %v4720
    %v4722 = vpop.f32.mrf.mxu0
    %v4723 = vpop.f32.mrf.mxu0
    %v4724 = vadd.f32 %v1896, %v4723
    %v4725 = vpop.f32.mrf.mxu0
    %4726 = vmatprep.mubr.bf16.mxu0 0
    %4727 = vmatmul.mubr.bf16.gmra.mxu0 %v4550
    %v4728 = vpop.f32.mrf.mxu0
    %v4729 = vadd.f32 %v1896, %v4728
    %v4730 = vpop.f32.mrf.mxu0
    %v4731 = vpop.f32.mrf.mxu0
    %v4732 = vadd.f32 %v1896, %v4731
    %v4733 = vpop.f32.mrf.mxu0
    %4734 = vmatprep.mubr.bf16.mxu0 0
    %4735 = vmatmul.mubr.bf16.gmra.mxu0 %v4551
    %v4736 = vpop.f32.mrf.mxu0
    %v4737 = vadd.f32 %v1896, %v4736
    %v4738 = vpop.f32.mrf.mxu0
    %v4739 = vpop.f32.mrf.mxu0
    %v4740 = vadd.f32 %v1896, %v4739
    %v4741 = vpop.f32.mrf.mxu0
    %4742 = vmatprep.mubr.bf16.mxu0 0
    %4743 = vmatmul.mubr.bf16.gmra.mxu0 %v4552
    %v4744 = vpop.f32.mrf.mxu0
    %v4745 = vadd.f32 %v1896, %v4744
    %v4746 = vpop.f32.mrf.mxu0
    %v4747 = vpop.f32.mrf.mxu0
    %v4748 = vadd.f32 %v1896, %v4747
    %v4749 = vpop.f32.mrf.mxu0
    %4750 = vmatprep.mubr.bf16.mxu0 0
    %4751 = vmatmul.mubr.bf16.gmra.mxu0 %v4553
    %v4752 = vpop.f32.mrf.mxu0
    %v4753 = vadd.f32 %v1896, %v4752
    %v4754 = vpop.f32.mrf.mxu0
    %v4755 = vpop.f32.mrf.mxu0
    %v4756 = vadd.f32 %v1896, %v4755
    %v4757 = vpop.f32.mrf.mxu0
    %4758 = vmatprep.mubr.bf16.mxu0 0
    %4759 = vmatmul.mubr.bf16.gmra.mxu0 %v4554
    %v4760 = vpop.f32.mrf.mxu0
    %v4761 = vadd.f32 %v1896, %v4760
    %v4762 = vpop.f32.mrf.mxu0
    %v4763 = vpop.f32.mrf.mxu0
    %v4764 = vadd.f32 %v1896, %v4763
    %v4765 = vpop.f32.mrf.mxu0
    %4766 = vmatprep.mubr.bf16.mxu0 0
    %4767 = vmatmul.mubr.bf16.gmra.mxu0 %v4555
    %v4768 = vpop.f32.mrf.mxu0
    %v4769 = vadd.f32 %v1896, %v4768
    %v4770 = vpop.f32.mrf.mxu0
    %v4771 = vpop.f32.mrf.mxu0
    %v4772 = vadd.f32 %v1896, %v4771
    %v4773 = vpop.f32.mrf.mxu0
    %4774 = vmatprep.mubr.bf16.mxu0 0
    %4775 = vmatmul.mubr.bf16.gmra.mxu0 %v4556
    %v4776 = vpop.f32.mrf.mxu0
    %v4777 = vadd.f32 %v1896, %v4776
    %v4778 = vpop.f32.mrf.mxu0
    %v4779 = vpop.f32.mrf.mxu0
    %v4780 = vadd.f32 %v1896, %v4779
    %v4781 = vpop.f32.mrf.mxu0
    %4782 = vmatprep.mubr.bf16.mxu0 0
    %4783 = vmatmul.mubr.bf16.gmra.mxu0 %v4557
    %v4784 = vpop.f32.mrf.mxu0
    %v4785 = vadd.f32 %v1896, %v4784
    %v4786 = vpop.f32.mrf.mxu0
    %v4787 = vpop.f32.mrf.mxu0
    %v4788 = vadd.f32 %v1896, %v4787
    %v4789 = vpop.f32.mrf.mxu0
    %4790 = vmatprep.mubr.bf16.mxu0 0
    %4791 = vmatmul.mubr.bf16.gmra.mxu0 %v4558
    %v4792 = vpop.f32.mrf.mxu0
    %v4793 = vadd.f32 %v1896, %v4792
    %v4794 = vpop.f32.mrf.mxu0
    %v4795 = vpop.f32.mrf.mxu0
    %v4796 = vadd.f32 %v1896, %v4795
    %v4797 = vpop.f32.mrf.mxu0
    %4798 = vmatprep.mubr.bf16.mxu0 0
    %4799 = vmatmul.mubr.bf16.gmra.mxu0 %v4559
    %v4800 = vpop.f32.mrf.mxu0
    %v4801 = vadd.f32 %v1896, %v4800
    %v4802 = vpop.f32.mrf.mxu0
    %v4803 = vpop.f32.mrf.mxu0
    %v4804 = vadd.f32 %v1896, %v4803
    %v4805 = vpop.f32.mrf.mxu0
    %4806 = vmatprep.mubr.bf16.mxu0 0
    %4807 = vmatmul.mubr.bf16.gmra.mxu0 %v4560
    %v4808 = vpop.f32.mrf.mxu0
    %v4809 = vadd.f32 %v1896, %v4808
    %v4810 = vpop.f32.mrf.mxu0
    %v4811 = vpop.f32.mrf.mxu0
    %v4812 = vadd.f32 %v1896, %v4811
    %v4813 = vpop.f32.mrf.mxu0
    %4814 = vmatprep.mubr.bf16.mxu0 0
    %4815 = vmatmul.mubr.bf16.gmra.mxu0 %v4561
    %v4816 = vpop.f32.mrf.mxu0
    %v4817 = vadd.f32 %v1896, %v4816
    %v4818 = vpop.f32.mrf.mxu0
    %v4819 = vpop.f32.mrf.mxu0
    %v4820 = vadd.f32 %v1896, %v4819
    %v4821 = vpop.f32.mrf.mxu0
    %4822 = vmatprep.mubr.bf16.mxu0 0
    %4823 = vmatmul.mubr.bf16.gmra.mxu0 %v4562
    %v4824 = vpop.f32.mrf.mxu0
    %v4825 = vadd.f32 %v1896, %v4824
    %v4826 = vpop.f32.mrf.mxu0
    %v4827 = vpop.f32.mrf.mxu0
    %v4828 = vadd.f32 %v1896, %v4827
    %v4829 = vpop.f32.mrf.mxu0
    %4830 = vmatprep.mubr.bf16.mxu0 0
    %4831 = vmatmul.mubr.bf16.gmra.mxu0 %v4563
    %v4832 = vpop.f32.mrf.mxu0
    %v4833 = vadd.f32 %v1896, %v4832
    %v4834 = vpop.f32.mrf.mxu0
    %v4835 = vpop.f32.mrf.mxu0
    %v4836 = vadd.f32 %v1896, %v4835
    %v4837 = vpop.f32.mrf.mxu0
    %4838 = vmatprep.mubr.bf16.mxu0 0
    %4839 = vmatmul.mubr.bf16.gmra.mxu0 %v4564
    %v4840 = vpop.f32.mrf.mxu0
    %v4841 = vadd.f32 %v1896, %v4840
    %v4842 = vpop.f32.mrf.mxu0
    %v4843 = vpop.f32.mrf.mxu0
    %v4844 = vadd.f32 %v1896, %v4843
    %v4845 = vpop.f32.mrf.mxu0
    %4846 = vmatprep.mubr.bf16.mxu0 0
    %4847 = vmatmul.mubr.bf16.gmra.mxu0 %v4565
    %v4848 = vpop.f32.mrf.mxu0
    %v4849 = vadd.f32 %v1896, %v4848
    %v4850 = vpop.f32.mrf.mxu0
    %v4851 = vpop.f32.mrf.mxu0
    %v4852 = vadd.f32 %v1896, %v4851
    %v4853 = vpop.f32.mrf.mxu0
    %4854 = vdwg.mxu0
    %v4855 = vmax.f32 %v4601, 0.0
    %v4856 = vmax.f32 %v4604, 0.0
    %v4857 = vmax.f32 %v4609, 0.0
    %v4858 = vmax.f32 %v4612, 0.0
    %v4859 = vmax.f32 %v4617, 0.0
    %v4860 = vmax.f32 %v4620, 0.0
    %v4861 = vmax.f32 %v4625, 0.0
    %v4862 = vmax.f32 %v4628, 0.0
    %v4863 = vmax.f32 %v4633, 0.0
    %v4864 = vmax.f32 %v4636, 0.0
    %v4865 = vmax.f32 %v4641, 0.0
    %v4866 = vmax.f32 %v4644, 0.0
    %v4867 = vmax.f32 %v4649, 0.0
    %v4868 = vmax.f32 %v4652, 0.0
    %v4869 = vmax.f32 %v4657, 0.0
    %v4870 = vmax.f32 %v4660, 0.0
    %v4871 = vmax.f32 %v4665, 0.0
    %v4872 = vmax.f32 %v4668, 0.0
    %v4873 = vmax.f32 %v4673, 0.0
    %v4874 = vmax.f32 %v4676, 0.0
    %v4875 = vmax.f32 %v4681, 0.0
    %v4876 = vmax.f32 %v4684, 0.0
    %v4877 = vmax.f32 %v4689, 0.0
    %v4878 = vmax.f32 %v4692, 0.0
    %v4879 = vmax.f32 %v4697, 0.0
    %v4880 = vmax.f32 %v4700, 0.0
    %v4881 = vmax.f32 %v4705, 0.0
    %v4882 = vmax.f32 %v4708, 0.0
    %v4883 = vmax.f32 %v4713, 0.0
    %v4884 = vmax.f32 %v4716, 0.0
    %v4885 = vmax.f32 %v4721, 0.0
    %v4886 = vmax.f32 %v4724, 0.0
    %v4887 = vmax.f32 %v4729, 0.0
    %v4888 = vmax.f32 %v4732, 0.0
    %v4889 = vmax.f32 %v4737, 0.0
    %v4890 = vmax.f32 %v4740, 0.0
    %v4891 = vmax.f32 %v4745, 0.0
    %v4892 = vmax.f32 %v4748, 0.0
    %v4893 = vmax.f32 %v4753, 0.0
    %v4894 = vmax.f32 %v4756, 0.0
    %v4895 = vmax.f32 %v4761, 0.0
    %v4896 = vmax.f32 %v4764, 0.0
    %v4897 = vmax.f32 %v4769, 0.0
    %v4898 = vmax.f32 %v4772, 0.0
    %v4899 = vmax.f32 %v4777, 0.0
    %v4900 = vmax.f32 %v4780, 0.0
    %v4901 = vmax.f32 %v4785, 0.0
    %v4902 = vmax.f32 %v4788, 0.0
    %v4903 = vmax.f32 %v4793, 0.0
    %v4904 = vmax.f32 %v4796, 0.0
    %v4905 = vmax.f32 %v4801, 0.0
    %v4906 = vmax.f32 %v4804, 0.0
    %v4907 = vmax.f32 %v4809, 0.0
    %v4908 = vmax.f32 %v4812, 0.0
    %v4909 = vmax.f32 %v4817, 0.0
    %v4910 = vmax.f32 %v4820, 0.0
    %v4911 = vmax.f32 %v4825, 0.0
    %v4912 = vmax.f32 %v4828, 0.0
    %v4913 = vmax.f32 %v4833, 0.0
    %v4914 = vmax.f32 %v4836, 0.0
    %v4915 = vmax.f32 %v4841, 0.0
    %v4916 = vmax.f32 %v4844, 0.0
    %v4917 = vmax.f32 %v4849, 0.0
    %v4918 = vmax.f32 %v4852, 0.0
    %v4919 = vpack.c.bf16 %v4856, %v4855
    %v4920 = vpack.c.bf16 %v4858, %v4857
    %v4921 = vpack.c.bf16 %v4860, %v4859
    %v4922 = vpack.c.bf16 %v4862, %v4861
    %v4923 = vpack.c.bf16 %v4864, %v4863
    %v4924 = vpack.c.bf16 %v4866, %v4865
    %v4925 = vpack.c.bf16 %v4868, %v4867
    %v4926 = vpack.c.bf16 %v4870, %v4869
    %v4927 = vpack.c.bf16 %v4872, %v4871
    %v4928 = vpack.c.bf16 %v4874, %v4873
    %v4929 = vpack.c.bf16 %v4876, %v4875
    %v4930 = vpack.c.bf16 %v4878, %v4877
    %v4931 = vpack.c.bf16 %v4880, %v4879
    %v4932 = vpack.c.bf16 %v4882, %v4881
    %v4933 = vpack.c.bf16 %v4884, %v4883
    %v4934 = vpack.c.bf16 %v4886, %v4885
    %v4935 = vpack.c.bf16 %v4888, %v4887
    %v4936 = vpack.c.bf16 %v4890, %v4889
    %v4937 = vpack.c.bf16 %v4892, %v4891
    %v4938 = vpack.c.bf16 %v4894, %v4893
    %v4939 = vpack.c.bf16 %v4896, %v4895
    %v4940 = vpack.c.bf16 %v4898, %v4897
    %v4941 = vpack.c.bf16 %v4900, %v4899
    %v4942 = vpack.c.bf16 %v4902, %v4901
    %v4943 = vpack.c.bf16 %v4904, %v4903
    %v4944 = vpack.c.bf16 %v4906, %v4905
    %v4945 = vpack.c.bf16 %v4908, %v4907
    %v4946 = vpack.c.bf16 %v4910, %v4909
    %v4947 = vpack.c.bf16 %v4912, %v4911
    %v4948 = vpack.c.bf16 %v4914, %v4913
    %v4949 = vpack.c.bf16 %v4916, %v4915
    %v4950 = vpack.c.bf16 %v4918, %v4917
    %4951 = vmatprep.subr.bf16.mxu0 0
    %4952 = vmatpush1.bf16.msra.mxu0 %v4926
    %4953 = vmatprep.subr.bf16.mxu0 0
    %4954 = vmatpush1.bf16.msra.mxu0 %v4925
    %4955 = vmatprep.subr.bf16.mxu0 0
    %4956 = vmatpush1.bf16.msra.mxu0 %v4924
    %4957 = vmatprep.subr.bf16.mxu0 0
    %4958 = vmatpush1.bf16.msra.mxu0 %v4923
    %4959 = vmatprep.subr.bf16.mxu0 0
    %4960 = vmatpush1.bf16.msra.mxu0 %v4922
    %4961 = vmatprep.subr.bf16.mxu0 0
    %4962 = vmatpush1.bf16.msra.mxu0 %v4921
    %4963 = vmatprep.subr.bf16.mxu0 0
    %4964 = vmatpush1.bf16.msra.mxu0 %v4920
    %4965 = vmatprep.subr.bf16.mxu0 0
    %4966 = vmatpush1.bf16.msra.mxu0 %v4919
    %4967 = vmatprep.subr.bf16.mxu0 0
    %4968 = vmatpush2.bf16.msra.mxu0 %v4934
    %4969 = vmatprep.subr.bf16.mxu0 0
    %4970 = vmatpush2.bf16.msra.mxu0 %v4933
    %4971 = vmatprep.subr.bf16.mxu0 0
    %4972 = vmatpush2.bf16.msra.mxu0 %v4932
    %4973 = vmatprep.subr.bf16.mxu0 0
    %4974 = vmatpush2.bf16.msra.mxu0 %v4931
    %4975 = vmatprep.subr.bf16.mxu0 0
    %4976 = vmatpush2.bf16.msra.mxu0 %v4930
    %4977 = vmatprep.subr.bf16.mxu0 0
    %4978 = vmatpush2.bf16.msra.mxu0 %v4929
    %4979 = vmatprep.subr.bf16.mxu0 0
    %4980 = vmatpush2.bf16.msra.mxu0 %v4928
    %4981 = vmatprep.subr.bf16.mxu0 0
    %4982 = vmatpush2.bf16.msra.mxu0 %v4927
    %4983 = vmatprep.mubr.bf16.mxu0 %v3701
    %4984 = vmatmul.mubr.bf16.gmra.mxu0 %v3700
    %v4985 = vpop.f32.mrf.mxu0
    %v4986 = vadd.f32 0.0, %v4985
    %v4987 = vpop.f32.mrf.mxu0
    %v4988 = vpop.f32.mrf.mxu0
    %v4989 = vadd.f32 0.0, %v4988
    %v4990 = vpop.f32.mrf.mxu0
    %4991 = vmatprep.mubr.bf16.mxu0 %v3705
    %4992 = vmatmul.mubr.bf16.gmra.mxu0 %v3704
    %v4993 = vpop.f32.mrf.mxu0
    %v4994 = vadd.f32 0.0, %v4993
    %v4995 = vpop.f32.mrf.mxu0
    %v4996 = vpop.f32.mrf.mxu0
    %v4997 = vadd.f32 0.0, %v4996
    %v4998 = vpop.f32.mrf.mxu0
    %4999 = vmatprep.mubr.bf16.mxu0 %v3709
    %5000 = vmatmul.mubr.bf16.gmra.mxu0 %v3708
    %v5001 = vpop.f32.mrf.mxu0
    %v5002 = vadd.f32 0.0, %v5001
    %v5003 = vpop.f32.mrf.mxu0
    %v5004 = vpop.f32.mrf.mxu0
    %v5005 = vadd.f32 0.0, %v5004
    %v5006 = vpop.f32.mrf.mxu0
    %5007 = vmatprep.mubr.bf16.mxu0 %v3713
    %5008 = vmatmul.mubr.bf16.gmra.mxu0 %v3712
    %v5009 = vpop.f32.mrf.mxu0
    %v5010 = vadd.f32 0.0, %v5009
    %v5011 = vpop.f32.mrf.mxu0
    %v5012 = vpop.f32.mrf.mxu0
    %v5013 = vadd.f32 0.0, %v5012
    %v5014 = vpop.f32.mrf.mxu0
    %5015 = vmatprep.mubr.bf16.mxu0 %v3717
    %5016 = vmatmul.mubr.bf16.gmra.mxu0 %v3716
    %v5017 = vpop.f32.mrf.mxu0
    %v5018 = vadd.f32 0.0, %v5017
    %v5019 = vpop.f32.mrf.mxu0
    %v5020 = vpop.f32.mrf.mxu0
    %v5021 = vadd.f32 0.0, %v5020
    %v5022 = vpop.f32.mrf.mxu0
    %5023 = vmatprep.mubr.bf16.mxu0 %v3721
    %5024 = vmatmul.mubr.bf16.gmra.mxu0 %v3720
    %v5025 = vpop.f32.mrf.mxu0
    %v5026 = vadd.f32 0.0, %v5025
    %v5027 = vpop.f32.mrf.mxu0
    %v5028 = vpop.f32.mrf.mxu0
    %v5029 = vadd.f32 0.0, %v5028
    %v5030 = vpop.f32.mrf.mxu0
    %5031 = vmatprep.mubr.bf16.mxu0 %v3725
    %5032 = vmatmul.mubr.bf16.gmra.mxu0 %v3724
    %v5033 = vpop.f32.mrf.mxu0
    %v5034 = vadd.f32 0.0, %v5033
    %v5035 = vpop.f32.mrf.mxu0
    %v5036 = vpop.f32.mrf.mxu0
    %v5037 = vadd.f32 0.0, %v5036
    %v5038 = vpop.f32.mrf.mxu0
    %5039 = vmatprep.mubr.bf16.mxu0 %v3729
    %5040 = vmatmul.mubr.bf16.gmra.mxu0 %v3728
    %v5041 = vpop.f32.mrf.mxu0
    %v5042 = vadd.f32 0.0, %v5041
    %v5043 = vpop.f32.mrf.mxu0
    %v5044 = vpop.f32.mrf.mxu0
    %v5045 = vadd.f32 0.0, %v5044
    %v5046 = vpop.f32.mrf.mxu0
    %5047 = vmatprep.mubr.bf16.mxu0 %v3733
    %5048 = vmatmul.mubr.bf16.gmra.mxu0 %v3732
    %v5049 = vpop.f32.mrf.mxu0
    %v5050 = vadd.f32 0.0, %v5049
    %v5051 = vpop.f32.mrf.mxu0
    %v5052 = vpop.f32.mrf.mxu0
    %v5053 = vadd.f32 0.0, %v5052
    %v5054 = vpop.f32.mrf.mxu0
    %5055 = vmatprep.mubr.bf16.mxu0 %v3737
    %5056 = vmatmul.mubr.bf16.gmra.mxu0 %v3736
    %v5057 = vpop.f32.mrf.mxu0
    %v5058 = vadd.f32 0.0, %v5057
    %v5059 = vpop.f32.mrf.mxu0
    %v5060 = vpop.f32.mrf.mxu0
    %v5061 = vadd.f32 0.0, %v5060
    %v5062 = vpop.f32.mrf.mxu0
    %5063 = vmatprep.mubr.bf16.mxu0 %v3741
    %5064 = vmatmul.mubr.bf16.gmra.mxu0 %v3740
    %v5065 = vpop.f32.mrf.mxu0
    %v5066 = vadd.f32 0.0, %v5065
    %v5067 = vpop.f32.mrf.mxu0
    %v5068 = vpop.f32.mrf.mxu0
    %v5069 = vadd.f32 0.0, %v5068
    %v5070 = vpop.f32.mrf.mxu0
    %5071 = vmatprep.mubr.bf16.mxu0 %v3745
    %5072 = vmatmul.mubr.bf16.gmra.mxu0 %v3744
    %v5073 = vpop.f32.mrf.mxu0
    %v5074 = vadd.f32 0.0, %v5073
    %v5075 = vpop.f32.mrf.mxu0
    %v5076 = vpop.f32.mrf.mxu0
    %v5077 = vadd.f32 0.0, %v5076
    %v5078 = vpop.f32.mrf.mxu0
    %5079 = vmatprep.mubr.bf16.mxu0 %v3749
    %5080 = vmatmul.mubr.bf16.gmra.mxu0 %v3748
    %v5081 = vpop.f32.mrf.mxu0
    %v5082 = vadd.f32 0.0, %v5081
    %v5083 = vpop.f32.mrf.mxu0
    %v5084 = vpop.f32.mrf.mxu0
    %v5085 = vadd.f32 0.0, %v5084
    %v5086 = vpop.f32.mrf.mxu0
    %5087 = vmatprep.mubr.bf16.mxu0 %v3753
    %5088 = vmatmul.mubr.bf16.gmra.mxu0 %v3752
    %v5089 = vpop.f32.mrf.mxu0
    %v5090 = vadd.f32 0.0, %v5089
    %v5091 = vpop.f32.mrf.mxu0
    %v5092 = vpop.f32.mrf.mxu0
    %v5093 = vadd.f32 0.0, %v5092
    %v5094 = vpop.f32.mrf.mxu0
    %5095 = vmatprep.mubr.bf16.mxu0 %v3757
    %5096 = vmatmul.mubr.bf16.gmra.mxu0 %v3756
    %v5097 = vpop.f32.mrf.mxu0
    %v5098 = vadd.f32 0.0, %v5097
    %v5099 = vpop.f32.mrf.mxu0
    %v5100 = vpop.f32.mrf.mxu0
    %v5101 = vadd.f32 0.0, %v5100
    %v5102 = vpop.f32.mrf.mxu0
    %5103 = vmatprep.mubr.bf16.mxu0 %v3761
    %5104 = vmatmul.mubr.bf16.gmra.mxu0 %v3760
    %v5105 = vpop.f32.mrf.mxu0
    %v5106 = vadd.f32 0.0, %v5105
    %v5107 = vpop.f32.mrf.mxu0
    %v5108 = vpop.f32.mrf.mxu0
    %v5109 = vadd.f32 0.0, %v5108
    %v5110 = vpop.f32.mrf.mxu0
    %5111 = vmatprep.mubr.bf16.mxu0 %v3765
    %5112 = vmatmul.mubr.bf16.gmra.mxu0 %v3764
    %v5113 = vpop.f32.mrf.mxu0
    %v5114 = vadd.f32 0.0, %v5113
    %v5115 = vpop.f32.mrf.mxu0
    %v5116 = vpop.f32.mrf.mxu0
    %v5117 = vadd.f32 0.0, %v5116
    %v5118 = vpop.f32.mrf.mxu0
    %5119 = vmatprep.mubr.bf16.mxu0 %v3769
    %5120 = vmatmul.mubr.bf16.gmra.mxu0 %v3768
    %v5121 = vpop.f32.mrf.mxu0
    %v5122 = vadd.f32 0.0, %v5121
    %v5123 = vpop.f32.mrf.mxu0
    %v5124 = vpop.f32.mrf.mxu0
    %v5125 = vadd.f32 0.0, %v5124
    %v5126 = vpop.f32.mrf.mxu0
    %5127 = vmatprep.mubr.bf16.mxu0 %v3773
    %5128 = vmatmul.mubr.bf16.gmra.mxu0 %v3772
    %v5129 = vpop.f32.mrf.mxu0
    %v5130 = vadd.f32 0.0, %v5129
    %v5131 = vpop.f32.mrf.mxu0
    %v5132 = vpop.f32.mrf.mxu0
    %v5133 = vadd.f32 0.0, %v5132
    %v5134 = vpop.f32.mrf.mxu0
    %5135 = vmatprep.mubr.bf16.mxu0 %v3777
    %5136 = vmatmul.mubr.bf16.gmra.mxu0 %v3776
    %v5137 = vpop.f32.mrf.mxu0
    %v5138 = vadd.f32 0.0, %v5137
    %v5139 = vpop.f32.mrf.mxu0
    %v5140 = vpop.f32.mrf.mxu0
    %v5141 = vadd.f32 0.0, %v5140
    %v5142 = vpop.f32.mrf.mxu0
    %5143 = vmatprep.mubr.bf16.mxu0 %v3781
    %5144 = vmatmul.mubr.bf16.gmra.mxu0 %v3780
    %v5145 = vpop.f32.mrf.mxu0
    %v5146 = vadd.f32 0.0, %v5145
    %v5147 = vpop.f32.mrf.mxu0
    %v5148 = vpop.f32.mrf.mxu0
    %v5149 = vadd.f32 0.0, %v5148
    %v5150 = vpop.f32.mrf.mxu0
    %5151 = vmatprep.mubr.bf16.mxu0 %v3785
    %5152 = vmatmul.mubr.bf16.gmra.mxu0 %v3784
    %v5153 = vpop.f32.mrf.mxu0
    %v5154 = vadd.f32 0.0, %v5153
    %v5155 = vpop.f32.mrf.mxu0
    %v5156 = vpop.f32.mrf.mxu0
    %v5157 = vadd.f32 0.0, %v5156
    %v5158 = vpop.f32.mrf.mxu0
    %5159 = vmatprep.mubr.bf16.mxu0 %v3789
    %5160 = vmatmul.mubr.bf16.gmra.mxu0 %v3788
    %v5161 = vpop.f32.mrf.mxu0
    %v5162 = vadd.f32 0.0, %v5161
    %v5163 = vpop.f32.mrf.mxu0
    %v5164 = vpop.f32.mrf.mxu0
    %v5165 = vadd.f32 0.0, %v5164
    %v5166 = vpop.f32.mrf.mxu0
    %5167 = vmatprep.mubr.bf16.mxu0 %v3793
    %5168 = vmatmul.mubr.bf16.gmra.mxu0 %v3792
    %v5169 = vpop.f32.mrf.mxu0
    %v5170 = vadd.f32 0.0, %v5169
    %v5171 = vpop.f32.mrf.mxu0
    %v5172 = vpop.f32.mrf.mxu0
    %v5173 = vadd.f32 0.0, %v5172
    %v5174 = vpop.f32.mrf.mxu0
    %5175 = vmatprep.mubr.bf16.mxu0 %v3797
    %5176 = vmatmul.mubr.bf16.gmra.mxu0 %v3796
    %v5177 = vpop.f32.mrf.mxu0
    %v5178 = vadd.f32 0.0, %v5177
    %v5179 = vpop.f32.mrf.mxu0
    %v5180 = vpop.f32.mrf.mxu0
    %v5181 = vadd.f32 0.0, %v5180
    %v5182 = vpop.f32.mrf.mxu0
    %5183 = vmatprep.mubr.bf16.mxu0 %v3801
    %5184 = vmatmul.mubr.bf16.gmra.mxu0 %v3800
    %v5185 = vpop.f32.mrf.mxu0
    %v5186 = vadd.f32 0.0, %v5185
    %v5187 = vpop.f32.mrf.mxu0
    %v5188 = vpop.f32.mrf.mxu0
    %v5189 = vadd.f32 0.0, %v5188
    %v5190 = vpop.f32.mrf.mxu0
    %5191 = vmatprep.mubr.bf16.mxu0 %v3805
    %5192 = vmatmul.mubr.bf16.gmra.mxu0 %v3804
    %v5193 = vpop.f32.mrf.mxu0
    %v5194 = vadd.f32 0.0, %v5193
    %v5195 = vpop.f32.mrf.mxu0
    %v5196 = vpop.f32.mrf.mxu0
    %v5197 = vadd.f32 0.0, %v5196
    %v5198 = vpop.f32.mrf.mxu0
    %5199 = vmatprep.mubr.bf16.mxu0 %v3809
    %5200 = vmatmul.mubr.bf16.gmra.mxu0 %v3808
    %v5201 = vpop.f32.mrf.mxu0
    %v5202 = vadd.f32 0.0, %v5201
    %v5203 = vpop.f32.mrf.mxu0
    %v5204 = vpop.f32.mrf.mxu0
    %v5205 = vadd.f32 0.0, %v5204
    %v5206 = vpop.f32.mrf.mxu0
    %5207 = vmatprep.mubr.bf16.mxu0 %v3813
    %5208 = vmatmul.mubr.bf16.gmra.mxu0 %v3812
    %v5209 = vpop.f32.mrf.mxu0
    %v5210 = vadd.f32 0.0, %v5209
    %v5211 = vpop.f32.mrf.mxu0
    %v5212 = vpop.f32.mrf.mxu0
    %v5213 = vadd.f32 0.0, %v5212
    %v5214 = vpop.f32.mrf.mxu0
    %5215 = vmatprep.mubr.bf16.mxu0 %v3817
    %5216 = vmatmul.mubr.bf16.gmra.mxu0 %v3816
    %v5217 = vpop.f32.mrf.mxu0
    %v5218 = vadd.f32 0.0, %v5217
    %v5219 = vpop.f32.mrf.mxu0
    %v5220 = vpop.f32.mrf.mxu0
    %v5221 = vadd.f32 0.0, %v5220
    %v5222 = vpop.f32.mrf.mxu0
    %5223 = vmatprep.mubr.bf16.mxu0 %v3821
    %5224 = vmatmul.mubr.bf16.gmra.mxu0 %v3820
    %v5225 = vpop.f32.mrf.mxu0
    %v5226 = vadd.f32 0.0, %v5225
    %v5227 = vpop.f32.mrf.mxu0
    %v5228 = vpop.f32.mrf.mxu0
    %v5229 = vadd.f32 0.0, %v5228
    %v5230 = vpop.f32.mrf.mxu0
    %5231 = vmatprep.mubr.bf16.mxu0 %v3825
    %5232 = vmatmul.mubr.bf16.gmra.mxu0 %v3824
    %v5233 = vpop.f32.mrf.mxu0
    %v5234 = vadd.f32 0.0, %v5233
    %v5235 = vpop.f32.mrf.mxu0
    %v5236 = vpop.f32.mrf.mxu0
    %v5237 = vadd.f32 0.0, %v5236
    %v5238 = vpop.f32.mrf.mxu0
    %5239 = vdwg.mxu0
    %5240 = vmatprep.subr.bf16.mxu0 0
    %5241 = vmatpush1.bf16.msra.mxu0 %v4942
    %5242 = vmatprep.subr.bf16.mxu0 0
    %5243 = vmatpush1.bf16.msra.mxu0 %v4941
    %5244 = vmatprep.subr.bf16.mxu0 0
    %5245 = vmatpush1.bf16.msra.mxu0 %v4940
    %5246 = vmatprep.subr.bf16.mxu0 0
    %5247 = vmatpush1.bf16.msra.mxu0 %v4939
    %5248 = vmatprep.subr.bf16.mxu0 0
    %5249 = vmatpush1.bf16.msra.mxu0 %v4938
    %5250 = vmatprep.subr.bf16.mxu0 0
    %5251 = vmatpush1.bf16.msra.mxu0 %v4937
    %5252 = vmatprep.subr.bf16.mxu0 0
    %5253 = vmatpush1.bf16.msra.mxu0 %v4936
    %5254 = vmatprep.subr.bf16.mxu0 0
    %5255 = vmatpush1.bf16.msra.mxu0 %v4935
    %5256 = vmatprep.subr.bf16.mxu0 0
    %5257 = vmatpush2.bf16.msra.mxu0 %v4950
    %5258 = vmatprep.subr.bf16.mxu0 0
    %5259 = vmatpush2.bf16.msra.mxu0 %v4949
    %5260 = vmatprep.subr.bf16.mxu0 0
    %5261 = vmatpush2.bf16.msra.mxu0 %v4948
    %5262 = vmatprep.subr.bf16.mxu0 0
    %5263 = vmatpush2.bf16.msra.mxu0 %v4947
    %5264 = vmatprep.subr.bf16.mxu0 0
    %5265 = vmatpush2.bf16.msra.mxu0 %v4946
    %5266 = vmatprep.subr.bf16.mxu0 0
    %5267 = vmatpush2.bf16.msra.mxu0 %v4945
    %5268 = vmatprep.subr.bf16.mxu0 0
    %5269 = vmatpush2.bf16.msra.mxu0 %v4944
    %5270 = vmatprep.subr.bf16.mxu0 0
    %5271 = vmatpush2.bf16.msra.mxu0 %v4943
    %5272 = vmatprep.mubr.bf16.mxu0 %v3703
    %5273 = vmatmul.mubr.bf16.gmra.mxu0 %v3702
    %v5274 = vpop.f32.mrf.mxu0
    %v5275 = vadd.f32 %v4986, %v5274
    %v5276 = vpop.f32.mrf.mxu0
    %v5277 = vpop.f32.mrf.mxu0
    %v5278 = vadd.f32 %v4989, %v5277
    %v5279 = vpop.f32.mrf.mxu0
    %5280 = vmatprep.mubr.bf16.mxu0 %v3707
    %5281 = vmatmul.mubr.bf16.gmra.mxu0 %v3706
    %v5282 = vpop.f32.mrf.mxu0
    %v5283 = vadd.f32 %v4994, %v5282
    %v5284 = vpop.f32.mrf.mxu0
    %v5285 = vpop.f32.mrf.mxu0
    %v5286 = vadd.f32 %v4997, %v5285
    %v5287 = vpop.f32.mrf.mxu0
    %5288 = vmatprep.mubr.bf16.mxu0 %v3711
    %5289 = vmatmul.mubr.bf16.gmra.mxu0 %v3710
    %v5290 = vpop.f32.mrf.mxu0
    %v5291 = vadd.f32 %v5002, %v5290
    %v5292 = vpop.f32.mrf.mxu0
    %v5293 = vpop.f32.mrf.mxu0
    %v5294 = vadd.f32 %v5005, %v5293
    %v5295 = vpop.f32.mrf.mxu0
    %5296 = vmatprep.mubr.bf16.mxu0 %v3715
    %5297 = vmatmul.mubr.bf16.gmra.mxu0 %v3714
    %v5298 = vpop.f32.mrf.mxu0
    %v5299 = vadd.f32 %v5010, %v5298
    %v5300 = vpop.f32.mrf.mxu0
    %v5301 = vpop.f32.mrf.mxu0
    %v5302 = vadd.f32 %v5013, %v5301
    %v5303 = vpop.f32.mrf.mxu0
    %5304 = vmatprep.mubr.bf16.mxu0 %v3719
    %5305 = vmatmul.mubr.bf16.gmra.mxu0 %v3718
    %v5306 = vpop.f32.mrf.mxu0
    %v5307 = vadd.f32 %v5018, %v5306
    %v5308 = vpop.f32.mrf.mxu0
    %v5309 = vpop.f32.mrf.mxu0
    %v5310 = vadd.f32 %v5021, %v5309
    %v5311 = vpop.f32.mrf.mxu0
    %5312 = vmatprep.mubr.bf16.mxu0 %v3723
    %5313 = vmatmul.mubr.bf16.gmra.mxu0 %v3722
    %v5314 = vpop.f32.mrf.mxu0
    %v5315 = vadd.f32 %v5026, %v5314
    %v5316 = vpop.f32.mrf.mxu0
    %v5317 = vpop.f32.mrf.mxu0
    %v5318 = vadd.f32 %v5029, %v5317
    %v5319 = vpop.f32.mrf.mxu0
    %5320 = vmatprep.mubr.bf16.mxu0 %v3727
    %5321 = vmatmul.mubr.bf16.gmra.mxu0 %v3726
    %v5322 = vpop.f32.mrf.mxu0
    %v5323 = vadd.f32 %v5034, %v5322
    %v5324 = vpop.f32.mrf.mxu0
    %v5325 = vpop.f32.mrf.mxu0
    %v5326 = vadd.f32 %v5037, %v5325
    %v5327 = vpop.f32.mrf.mxu0
    %5328 = vmatprep.mubr.bf16.mxu0 %v3731
    %5329 = vmatmul.mubr.bf16.gmra.mxu0 %v3730
    %v5330 = vpop.f32.mrf.mxu0
    %v5331 = vadd.f32 %v5042, %v5330
    %v5332 = vpop.f32.mrf.mxu0
    %v5333 = vpop.f32.mrf.mxu0
    %v5334 = vadd.f32 %v5045, %v5333
    %v5335 = vpop.f32.mrf.mxu0
    %5336 = vmatprep.mubr.bf16.mxu0 %v3735
    %5337 = vmatmul.mubr.bf16.gmra.mxu0 %v3734
    %v5338 = vpop.f32.mrf.mxu0
    %v5339 = vadd.f32 %v5050, %v5338
    %v5340 = vpop.f32.mrf.mxu0
    %v5341 = vpop.f32.mrf.mxu0
    %v5342 = vadd.f32 %v5053, %v5341
    %v5343 = vpop.f32.mrf.mxu0
    %5344 = vmatprep.mubr.bf16.mxu0 %v3739
    %5345 = vmatmul.mubr.bf16.gmra.mxu0 %v3738
    %v5346 = vpop.f32.mrf.mxu0
    %v5347 = vadd.f32 %v5058, %v5346
    %v5348 = vpop.f32.mrf.mxu0
    %v5349 = vpop.f32.mrf.mxu0
    %v5350 = vadd.f32 %v5061, %v5349
    %v5351 = vpop.f32.mrf.mxu0
    %5352 = vmatprep.mubr.bf16.mxu0 %v3743
    %5353 = vmatmul.mubr.bf16.gmra.mxu0 %v3742
    %v5354 = vpop.f32.mrf.mxu0
    %v5355 = vadd.f32 %v5066, %v5354
    %v5356 = vpop.f32.mrf.mxu0
    %v5357 = vpop.f32.mrf.mxu0
    %v5358 = vadd.f32 %v5069, %v5357
    %v5359 = vpop.f32.mrf.mxu0
    %5360 = vmatprep.mubr.bf16.mxu0 %v3747
    %5361 = vmatmul.mubr.bf16.gmra.mxu0 %v3746
    %v5362 = vpop.f32.mrf.mxu0
    %v5363 = vadd.f32 %v5074, %v5362
    %v5364 = vpop.f32.mrf.mxu0
    %v5365 = vpop.f32.mrf.mxu0
    %v5366 = vadd.f32 %v5077, %v5365
    %v5367 = vpop.f32.mrf.mxu0
    %5368 = vmatprep.mubr.bf16.mxu0 %v3751
    %5369 = vmatmul.mubr.bf16.gmra.mxu0 %v3750
    %v5370 = vpop.f32.mrf.mxu0
    %v5371 = vadd.f32 %v5082, %v5370
    %v5372 = vpop.f32.mrf.mxu0
    %v5373 = vpop.f32.mrf.mxu0
    %v5374 = vadd.f32 %v5085, %v5373
    %v5375 = vpop.f32.mrf.mxu0
    %5376 = vmatprep.mubr.bf16.mxu0 %v3755
    %5377 = vmatmul.mubr.bf16.gmra.mxu0 %v3754
    %v5378 = vpop.f32.mrf.mxu0
    %v5379 = vadd.f32 %v5090, %v5378
    %v5380 = vpop.f32.mrf.mxu0
    %v5381 = vpop.f32.mrf.mxu0
    %v5382 = vadd.f32 %v5093, %v5381
    %v5383 = vpop.f32.mrf.mxu0
    %5384 = vmatprep.mubr.bf16.mxu0 %v3759
    %5385 = vmatmul.mubr.bf16.gmra.mxu0 %v3758
    %v5386 = vpop.f32.mrf.mxu0
    %v5387 = vadd.f32 %v5098, %v5386
    %v5388 = vpop.f32.mrf.mxu0
    %v5389 = vpop.f32.mrf.mxu0
    %v5390 = vadd.f32 %v5101, %v5389
    %v5391 = vpop.f32.mrf.mxu0
    %5392 = vmatprep.mubr.bf16.mxu0 %v3763
    %5393 = vmatmul.mubr.bf16.gmra.mxu0 %v3762
    %v5394 = vpop.f32.mrf.mxu0
    %v5395 = vadd.f32 %v5106, %v5394
    %v5396 = vpop.f32.mrf.mxu0
    %v5397 = vpop.f32.mrf.mxu0
    %v5398 = vadd.f32 %v5109, %v5397
    %v5399 = vpop.f32.mrf.mxu0
    %5400 = vmatprep.mubr.bf16.mxu0 %v3767
    %5401 = vmatmul.mubr.bf16.gmra.mxu0 %v3766
    %v5402 = vpop.f32.mrf.mxu0
    %v5403 = vadd.f32 %v5114, %v5402
    %v5404 = vpop.f32.mrf.mxu0
    %v5405 = vpop.f32.mrf.mxu0
    %v5406 = vadd.f32 %v5117, %v5405
    %v5407 = vpop.f32.mrf.mxu0
    %5408 = vmatprep.mubr.bf16.mxu0 %v3771
    %5409 = vmatmul.mubr.bf16.gmra.mxu0 %v3770
    %v5410 = vpop.f32.mrf.mxu0
    %v5411 = vadd.f32 %v5122, %v5410
    %v5412 = vpop.f32.mrf.mxu0
    %v5413 = vpop.f32.mrf.mxu0
    %v5414 = vadd.f32 %v5125, %v5413
    %v5415 = vpop.f32.mrf.mxu0
    %5416 = vmatprep.mubr.bf16.mxu0 %v3775
    %5417 = vmatmul.mubr.bf16.gmra.mxu0 %v3774
    %v5418 = vpop.f32.mrf.mxu0
    %v5419 = vadd.f32 %v5130, %v5418
    %v5420 = vpop.f32.mrf.mxu0
    %v5421 = vpop.f32.mrf.mxu0
    %v5422 = vadd.f32 %v5133, %v5421
    %v5423 = vpop.f32.mrf.mxu0
    %5424 = vmatprep.mubr.bf16.mxu0 %v3779
    %5425 = vmatmul.mubr.bf16.gmra.mxu0 %v3778
    %v5426 = vpop.f32.mrf.mxu0
    %v5427 = vadd.f32 %v5138, %v5426
    %v5428 = vpop.f32.mrf.mxu0
    %v5429 = vpop.f32.mrf.mxu0
    %v5430 = vadd.f32 %v5141, %v5429
    %v5431 = vpop.f32.mrf.mxu0
    %5432 = vmatprep.mubr.bf16.mxu0 %v3783
    %5433 = vmatmul.mubr.bf16.gmra.mxu0 %v3782
    %v5434 = vpop.f32.mrf.mxu0
    %v5435 = vadd.f32 %v5146, %v5434
    %v5436 = vpop.f32.mrf.mxu0
    %v5437 = vpop.f32.mrf.mxu0
    %v5438 = vadd.f32 %v5149, %v5437
    %v5439 = vpop.f32.mrf.mxu0
    %5440 = vmatprep.mubr.bf16.mxu0 %v3787
    %5441 = vmatmul.mubr.bf16.gmra.mxu0 %v3786
    %v5442 = vpop.f32.mrf.mxu0
    %v5443 = vadd.f32 %v5154, %v5442
    %v5444 = vpop.f32.mrf.mxu0
    %v5445 = vpop.f32.mrf.mxu0
    %v5446 = vadd.f32 %v5157, %v5445
    %v5447 = vpop.f32.mrf.mxu0
    %5448 = vmatprep.mubr.bf16.mxu0 %v3791
    %5449 = vmatmul.mubr.bf16.gmra.mxu0 %v3790
    %v5450 = vpop.f32.mrf.mxu0
    %v5451 = vadd.f32 %v5162, %v5450
    %v5452 = vpop.f32.mrf.mxu0
    %v5453 = vpop.f32.mrf.mxu0
    %v5454 = vadd.f32 %v5165, %v5453
    %v5455 = vpop.f32.mrf.mxu0
    %5456 = vmatprep.mubr.bf16.mxu0 %v3795
    %5457 = vmatmul.mubr.bf16.gmra.mxu0 %v3794
    %v5458 = vpop.f32.mrf.mxu0
    %v5459 = vadd.f32 %v5170, %v5458
    %v5460 = vpop.f32.mrf.mxu0
    %v5461 = vpop.f32.mrf.mxu0
    %v5462 = vadd.f32 %v5173, %v5461
    %v5463 = vpop.f32.mrf.mxu0
    %5464 = vmatprep.mubr.bf16.mxu0 %v3799
    %5465 = vmatmul.mubr.bf16.gmra.mxu0 %v3798
    %v5466 = vpop.f32.mrf.mxu0
    %v5467 = vadd.f32 %v5178, %v5466
    %v5468 = vpop.f32.mrf.mxu0
    %v5469 = vpop.f32.mrf.mxu0
    %v5470 = vadd.f32 %v5181, %v5469
    %v5471 = vpop.f32.mrf.mxu0
    %5472 = vmatprep.mubr.bf16.mxu0 %v3803
    %5473 = vmatmul.mubr.bf16.gmra.mxu0 %v3802
    %v5474 = vpop.f32.mrf.mxu0
    %v5475 = vadd.f32 %v5186, %v5474
    %v5476 = vpop.f32.mrf.mxu0
    %v5477 = vpop.f32.mrf.mxu0
    %v5478 = vadd.f32 %v5189, %v5477
    %v5479 = vpop.f32.mrf.mxu0
    %5480 = vmatprep.mubr.bf16.mxu0 %v3807
    %5481 = vmatmul.mubr.bf16.gmra.mxu0 %v3806
    %v5482 = vpop.f32.mrf.mxu0
    %v5483 = vadd.f32 %v5194, %v5482
    %v5484 = vpop.f32.mrf.mxu0
    %v5485 = vpop.f32.mrf.mxu0
    %v5486 = vadd.f32 %v5197, %v5485
    %v5487 = vpop.f32.mrf.mxu0
    %5488 = vmatprep.mubr.bf16.mxu0 %v3811
    %5489 = vmatmul.mubr.bf16.gmra.mxu0 %v3810
    %v5490 = vpop.f32.mrf.mxu0
    %v5491 = vadd.f32 %v5202, %v5490
    %v5492 = vpop.f32.mrf.mxu0
    %v5493 = vpop.f32.mrf.mxu0
    %v5494 = vadd.f32 %v5205, %v5493
    %v5495 = vpop.f32.mrf.mxu0
    %5496 = vmatprep.mubr.bf16.mxu0 %v3815
    %5497 = vmatmul.mubr.bf16.gmra.mxu0 %v3814
    %v5498 = vpop.f32.mrf.mxu0
    %v5499 = vadd.f32 %v5210, %v5498
    %v5500 = vpop.f32.mrf.mxu0
    %v5501 = vpop.f32.mrf.mxu0
    %v5502 = vadd.f32 %v5213, %v5501
    %v5503 = vpop.f32.mrf.mxu0
    %5504 = vmatprep.mubr.bf16.mxu0 %v3819
    %5505 = vmatmul.mubr.bf16.gmra.mxu0 %v3818
    %v5506 = vpop.f32.mrf.mxu0
    %v5507 = vadd.f32 %v5218, %v5506
    %v5508 = vpop.f32.mrf.mxu0
    %v5509 = vpop.f32.mrf.mxu0
    %v5510 = vadd.f32 %v5221, %v5509
    %v5511 = vpop.f32.mrf.mxu0
    %5512 = vmatprep.mubr.bf16.mxu0 %v3823
    %5513 = vmatmul.mubr.bf16.gmra.mxu0 %v3822
    %v5514 = vpop.f32.mrf.mxu0
    %v5515 = vadd.f32 %v5226, %v5514
    %v5516 = vpop.f32.mrf.mxu0
    %v5517 = vpop.f32.mrf.mxu0
    %v5518 = vadd.f32 %v5229, %v5517
    %v5519 = vpop.f32.mrf.mxu0
    %5520 = vmatprep.mubr.bf16.mxu0 %v3827
    %5521 = vmatmul.mubr.bf16.gmra.mxu0 %v3826
    %v5522 = vpop.f32.mrf.mxu0
    %v5523 = vadd.f32 %v5234, %v5522
    %v5524 = vpop.f32.mrf.mxu0
    %v5525 = vpop.f32.mrf.mxu0
    %v5526 = vadd.f32 %v5237, %v5525
    %v5527 = vpop.f32.mrf.mxu0
    %5528 = vdwg.mxu0
    %v5529 = vpack.c.bf16 %v5278, %v5275
    %v5530 = vpack.c.bf16 %v5286, %v5283
    %v5531 = vpack.c.bf16 %v5294, %v5291
    %v5532 = vpack.c.bf16 %v5302, %v5299
    %v5533 = vpack.c.bf16 %v5310, %v5307
    %v5534 = vpack.c.bf16 %v5318, %v5315
    %v5535 = vpack.c.bf16 %v5326, %v5323
    %v5536 = vpack.c.bf16 %v5334, %v5331
    %v5537 = vpack.c.bf16 %v5342, %v5339
    %v5538 = vpack.c.bf16 %v5350, %v5347
    %v5539 = vpack.c.bf16 %v5358, %v5355
    %v5540 = vpack.c.bf16 %v5366, %v5363
    %v5541 = vpack.c.bf16 %v5374, %v5371
    %v5542 = vpack.c.bf16 %v5382, %v5379
    %v5543 = vpack.c.bf16 %v5390, %v5387
    %v5544 = vpack.c.bf16 %v5398, %v5395
    %v5545 = vpack.c.bf16 %v5406, %v5403
    %v5546 = vpack.c.bf16 %v5414, %v5411
    %v5547 = vpack.c.bf16 %v5422, %v5419
    %v5548 = vpack.c.bf16 %v5430, %v5427
    %v5549 = vpack.c.bf16 %v5438, %v5435
    %v5550 = vpack.c.bf16 %v5446, %v5443
    %v5551 = vpack.c.bf16 %v5454, %v5451
    %v5552 = vpack.c.bf16 %v5462, %v5459
    %v5553 = vpack.c.bf16 %v5470, %v5467
    %v5554 = vpack.c.bf16 %v5478, %v5475
    %v5555 = vpack.c.bf16 %v5486, %v5483
    %v5556 = vpack.c.bf16 %v5494, %v5491
    %v5557 = vpack.c.bf16 %v5502, %v5499
    %v5558 = vpack.c.bf16 %v5510, %v5507
    %v5559 = vpack.c.bf16 %v5518, %v5515
    %v5560 = vpack.c.bf16 %v5526, %v5523
    %5561 = vmatprep.subr.bf16.mxu0 0
    %5562 = vmatpush1.bf16.msra.mxu0 %v2986
    %5563 = vmatprep.subr.bf16.mxu0 0
    %5564 = vmatpush1.bf16.msra.mxu0 %v2985
    %5565 = vmatprep.subr.bf16.mxu0 0
    %5566 = vmatpush1.bf16.msra.mxu0 %v2984
    %5567 = vmatprep.subr.bf16.mxu0 0
    %5568 = vmatpush1.bf16.msra.mxu0 %v2983
    %5569 = vmatprep.subr.bf16.mxu0 0
    %5570 = vmatpush1.bf16.msra.mxu0 %v2982
    %5571 = vmatprep.subr.bf16.mxu0 0
    %5572 = vmatpush1.bf16.msra.mxu0 %v2981
    %5573 = vmatprep.subr.bf16.mxu0 0
    %5574 = vmatpush1.bf16.msra.mxu0 %v2980
    %5575 = vmatprep.subr.bf16.mxu0 0
    %5576 = vmatpush1.bf16.msra.mxu0 %v2979
    %5577 = vmatprep.subr.bf16.mxu0 0
    %5578 = vmatpush2.bf16.msra.mxu0 0
    %5579 = vmatprep.subr.bf16.mxu0 0
    %5580 = vmatpush2.bf16.msra.mxu0 0
    %5581 = vmatprep.subr.bf16.mxu0 0
    %5582 = vmatpush2.bf16.msra.mxu0 0
    %5583 = vmatprep.subr.bf16.mxu0 0
    %5584 = vmatpush2.bf16.msra.mxu0 0
    %5585 = vmatprep.subr.bf16.mxu0 0
    %5586 = vmatpush2.bf16.msra.mxu0 0
    %5587 = vmatprep.subr.bf16.mxu0 0
    %5588 = vmatpush2.bf16.msra.mxu0 0
    %5589 = vmatprep.subr.bf16.mxu0 0
    %5590 = vmatpush2.bf16.msra.mxu0 0
    %5591 = vmatprep.subr.bf16.mxu0 0
    %5592 = vmatpush2.bf16.msra.mxu0 0
    %5593 = vmatprep.mubr.bf16.mxu0 0
    %5594 = vmatmul.mubr.bf16.gmra.mxu0 %v5529
    %v5595 = vpop.f32.mrf.mxu0
    %v5596 = vadd.f32 %v2945, %v5595
    %v5597 = vpop.f32.mrf.mxu0
    %v5598 = vpop.f32.mrf.mxu0
    %v5599 = vadd.f32 %v2945, %v5598
    %v5600 = vpop.f32.mrf.mxu0
    %5601 = vmatprep.mubr.bf16.mxu0 0
    %5602 = vmatmul.mubr.bf16.gmra.mxu0 %v5530
    %v5603 = vpop.f32.mrf.mxu0
    %v5604 = vadd.f32 %v2945, %v5603
    %v5605 = vpop.f32.mrf.mxu0
    %v5606 = vpop.f32.mrf.mxu0
    %v5607 = vadd.f32 %v2945, %v5606
    %v5608 = vpop.f32.mrf.mxu0
    %5609 = vmatprep.mubr.bf16.mxu0 0
    %5610 = vmatmul.mubr.bf16.gmra.mxu0 %v5531
    %v5611 = vpop.f32.mrf.mxu0
    %v5612 = vadd.f32 %v2945, %v5611
    %v5613 = vpop.f32.mrf.mxu0
    %v5614 = vpop.f32.mrf.mxu0
    %v5615 = vadd.f32 %v2945, %v5614
    %v5616 = vpop.f32.mrf.mxu0
    %5617 = vmatprep.mubr.bf16.mxu0 0
    %5618 = vmatmul.mubr.bf16.gmra.mxu0 %v5532
    %v5619 = vpop.f32.mrf.mxu0
    %v5620 = vadd.f32 %v2945, %v5619
    %v5621 = vpop.f32.mrf.mxu0
    %v5622 = vpop.f32.mrf.mxu0
    %v5623 = vadd.f32 %v2945, %v5622
    %v5624 = vpop.f32.mrf.mxu0
    %5625 = vmatprep.mubr.bf16.mxu0 0
    %5626 = vmatmul.mubr.bf16.gmra.mxu0 %v5533
    %v5627 = vpop.f32.mrf.mxu0
    %v5628 = vadd.f32 %v2945, %v5627
    %v5629 = vpop.f32.mrf.mxu0
    %v5630 = vpop.f32.mrf.mxu0
    %v5631 = vadd.f32 %v2945, %v5630
    %v5632 = vpop.f32.mrf.mxu0
    %5633 = vmatprep.mubr.bf16.mxu0 0
    %5634 = vmatmul.mubr.bf16.gmra.mxu0 %v5534
    %v5635 = vpop.f32.mrf.mxu0
    %v5636 = vadd.f32 %v2945, %v5635
    %v5637 = vpop.f32.mrf.mxu0
    %v5638 = vpop.f32.mrf.mxu0
    %v5639 = vadd.f32 %v2945, %v5638
    %v5640 = vpop.f32.mrf.mxu0
    %5641 = vmatprep.mubr.bf16.mxu0 0
    %5642 = vmatmul.mubr.bf16.gmra.mxu0 %v5535
    %v5643 = vpop.f32.mrf.mxu0
    %v5644 = vadd.f32 %v2945, %v5643
    %v5645 = vpop.f32.mrf.mxu0
    %v5646 = vpop.f32.mrf.mxu0
    %v5647 = vadd.f32 %v2945, %v5646
    %v5648 = vpop.f32.mrf.mxu0
    %5649 = vmatprep.mubr.bf16.mxu0 0
    %5650 = vmatmul.mubr.bf16.gmra.mxu0 %v5536
    %v5651 = vpop.f32.mrf.mxu0
    %v5652 = vadd.f32 %v2945, %v5651
    %v5653 = vpop.f32.mrf.mxu0
    %v5654 = vpop.f32.mrf.mxu0
    %v5655 = vadd.f32 %v2945, %v5654
    %v5656 = vpop.f32.mrf.mxu0
    %5657 = vmatprep.mubr.bf16.mxu0 0
    %5658 = vmatmul.mubr.bf16.gmra.mxu0 %v5537
    %v5659 = vpop.f32.mrf.mxu0
    %v5660 = vadd.f32 %v2945, %v5659
    %v5661 = vpop.f32.mrf.mxu0
    %v5662 = vpop.f32.mrf.mxu0
    %v5663 = vadd.f32 %v2945, %v5662
    %v5664 = vpop.f32.mrf.mxu0
    %5665 = vmatprep.mubr.bf16.mxu0 0
    %5666 = vmatmul.mubr.bf16.gmra.mxu0 %v5538
    %v5667 = vpop.f32.mrf.mxu0
    %v5668 = vadd.f32 %v2945, %v5667
    %v5669 = vpop.f32.mrf.mxu0
    %v5670 = vpop.f32.mrf.mxu0
    %v5671 = vadd.f32 %v2945, %v5670
    %v5672 = vpop.f32.mrf.mxu0
    %5673 = vmatprep.mubr.bf16.mxu0 0
    %5674 = vmatmul.mubr.bf16.gmra.mxu0 %v5539
    %v5675 = vpop.f32.mrf.mxu0
    %v5676 = vadd.f32 %v2945, %v5675
    %v5677 = vpop.f32.mrf.mxu0
    %v5678 = vpop.f32.mrf.mxu0
    %v5679 = vadd.f32 %v2945, %v5678
    %v5680 = vpop.f32.mrf.mxu0
    %5681 = vmatprep.mubr.bf16.mxu0 0
    %5682 = vmatmul.mubr.bf16.gmra.mxu0 %v5540
    %v5683 = vpop.f32.mrf.mxu0
    %v5684 = vadd.f32 %v2945, %v5683
    %v5685 = vpop.f32.mrf.mxu0
    %v5686 = vpop.f32.mrf.mxu0
    %v5687 = vadd.f32 %v2945, %v5686
    %v5688 = vpop.f32.mrf.mxu0
    %5689 = vmatprep.mubr.bf16.mxu0 0
    %5690 = vmatmul.mubr.bf16.gmra.mxu0 %v5541
    %v5691 = vpop.f32.mrf.mxu0
    %v5692 = vadd.f32 %v2945, %v5691
    %v5693 = vpop.f32.mrf.mxu0
    %v5694 = vpop.f32.mrf.mxu0
    %v5695 = vadd.f32 %v2945, %v5694
    %v5696 = vpop.f32.mrf.mxu0
    %5697 = vmatprep.mubr.bf16.mxu0 0
    %5698 = vmatmul.mubr.bf16.gmra.mxu0 %v5542
    %v5699 = vpop.f32.mrf.mxu0
    %v5700 = vadd.f32 %v2945, %v5699
    %v5701 = vpop.f32.mrf.mxu0
    %v5702 = vpop.f32.mrf.mxu0
    %v5703 = vadd.f32 %v2945, %v5702
    %v5704 = vpop.f32.mrf.mxu0
    %5705 = vmatprep.mubr.bf16.mxu0 0
    %5706 = vmatmul.mubr.bf16.gmra.mxu0 %v5543
    %v5707 = vpop.f32.mrf.mxu0
    %v5708 = vadd.f32 %v2945, %v5707
    %v5709 = vpop.f32.mrf.mxu0
    %v5710 = vpop.f32.mrf.mxu0
    %v5711 = vadd.f32 %v2945, %v5710
    %v5712 = vpop.f32.mrf.mxu0
    %5713 = vmatprep.mubr.bf16.mxu0 0
    %5714 = vmatmul.mubr.bf16.gmra.mxu0 %v5544
    %v5715 = vpop.f32.mrf.mxu0
    %v5716 = vadd.f32 %v2945, %v5715
    %v5717 = vpop.f32.mrf.mxu0
    %v5718 = vpop.f32.mrf.mxu0
    %v5719 = vadd.f32 %v2945, %v5718
    %v5720 = vpop.f32.mrf.mxu0
    %5721 = vmatprep.mubr.bf16.mxu0 0
    %5722 = vmatmul.mubr.bf16.gmra.mxu0 %v5545
    %v5723 = vpop.f32.mrf.mxu0
    %v5724 = vadd.f32 %v2945, %v5723
    %v5725 = vpop.f32.mrf.mxu0
    %v5726 = vpop.f32.mrf.mxu0
    %v5727 = vadd.f32 %v2945, %v5726
    %v5728 = vpop.f32.mrf.mxu0
    %5729 = vmatprep.mubr.bf16.mxu0 0
    %5730 = vmatmul.mubr.bf16.gmra.mxu0 %v5546
    %v5731 = vpop.f32.mrf.mxu0
    %v5732 = vadd.f32 %v2945, %v5731
    %v5733 = vpop.f32.mrf.mxu0
    %v5734 = vpop.f32.mrf.mxu0
    %v5735 = vadd.f32 %v2945, %v5734
    %v5736 = vpop.f32.mrf.mxu0
    %5737 = vmatprep.mubr.bf16.mxu0 0
    %5738 = vmatmul.mubr.bf16.gmra.mxu0 %v5547
    %v5739 = vpop.f32.mrf.mxu0
    %v5740 = vadd.f32 %v2945, %v5739
    %v5741 = vpop.f32.mrf.mxu0
    %v5742 = vpop.f32.mrf.mxu0
    %v5743 = vadd.f32 %v2945, %v5742
    %v5744 = vpop.f32.mrf.mxu0
    %5745 = vmatprep.mubr.bf16.mxu0 0
    %5746 = vmatmul.mubr.bf16.gmra.mxu0 %v5548
    %v5747 = vpop.f32.mrf.mxu0
    %v5748 = vadd.f32 %v2945, %v5747
    %v5749 = vpop.f32.mrf.mxu0
    %v5750 = vpop.f32.mrf.mxu0
    %v5751 = vadd.f32 %v2945, %v5750
    %v5752 = vpop.f32.mrf.mxu0
    %5753 = vmatprep.mubr.bf16.mxu0 0
    %5754 = vmatmul.mubr.bf16.gmra.mxu0 %v5549
    %v5755 = vpop.f32.mrf.mxu0
    %v5756 = vadd.f32 %v2945, %v5755
    %v5757 = vpop.f32.mrf.mxu0
    %v5758 = vpop.f32.mrf.mxu0
    %v5759 = vadd.f32 %v2945, %v5758
    %v5760 = vpop.f32.mrf.mxu0
    %5761 = vmatprep.mubr.bf16.mxu0 0
    %5762 = vmatmul.mubr.bf16.gmra.mxu0 %v5550
    %v5763 = vpop.f32.mrf.mxu0
    %v5764 = vadd.f32 %v2945, %v5763
    %v5765 = vpop.f32.mrf.mxu0
    %v5766 = vpop.f32.mrf.mxu0
    %v5767 = vadd.f32 %v2945, %v5766
    %v5768 = vpop.f32.mrf.mxu0
    %5769 = vmatprep.mubr.bf16.mxu0 0
    %5770 = vmatmul.mubr.bf16.gmra.mxu0 %v5551
    %v5771 = vpop.f32.mrf.mxu0
    %v5772 = vadd.f32 %v2945, %v5771
    %v5773 = vpop.f32.mrf.mxu0
    %v5774 = vpop.f32.mrf.mxu0
    %v5775 = vadd.f32 %v2945, %v5774
    %v5776 = vpop.f32.mrf.mxu0
    %5777 = vmatprep.mubr.bf16.mxu0 0
    %5778 = vmatmul.mubr.bf16.gmra.mxu0 %v5552
    %v5779 = vpop.f32.mrf.mxu0
    %v5780 = vadd.f32 %v2945, %v5779
    %v5781 = vpop.f32.mrf.mxu0
    %v5782 = vpop.f32.mrf.mxu0
    %v5783 = vadd.f32 %v2945, %v5782
    %v5784 = vpop.f32.mrf.mxu0
    %5785 = vmatprep.mubr.bf16.mxu0 0
    %5786 = vmatmul.mubr.bf16.gmra.mxu0 %v5553
    %v5787 = vpop.f32.mrf.mxu0
    %v5788 = vadd.f32 %v2945, %v5787
    %v5789 = vpop.f32.mrf.mxu0
    %v5790 = vpop.f32.mrf.mxu0
    %v5791 = vadd.f32 %v2945, %v5790
    %v5792 = vpop.f32.mrf.mxu0
    %5793 = vmatprep.mubr.bf16.mxu0 0
    %5794 = vmatmul.mubr.bf16.gmra.mxu0 %v5554
    %v5795 = vpop.f32.mrf.mxu0
    %v5796 = vadd.f32 %v2945, %v5795
    %v5797 = vpop.f32.mrf.mxu0
    %v5798 = vpop.f32.mrf.mxu0
    %v5799 = vadd.f32 %v2945, %v5798
    %v5800 = vpop.f32.mrf.mxu0
    %5801 = vmatprep.mubr.bf16.mxu0 0
    %5802 = vmatmul.mubr.bf16.gmra.mxu0 %v5555
    %v5803 = vpop.f32.mrf.mxu0
    %v5804 = vadd.f32 %v2945, %v5803
    %v5805 = vpop.f32.mrf.mxu0
    %v5806 = vpop.f32.mrf.mxu0
    %v5807 = vadd.f32 %v2945, %v5806
    %v5808 = vpop.f32.mrf.mxu0
    %5809 = vmatprep.mubr.bf16.mxu0 0
    %5810 = vmatmul.mubr.bf16.gmra.mxu0 %v5556
    %v5811 = vpop.f32.mrf.mxu0
    %v5812 = vadd.f32 %v2945, %v5811
    %v5813 = vpop.f32.mrf.mxu0
    %v5814 = vpop.f32.mrf.mxu0
    %v5815 = vadd.f32 %v2945, %v5814
    %v5816 = vpop.f32.mrf.mxu0
    %5817 = vmatprep.mubr.bf16.mxu0 0
    %5818 = vmatmul.mubr.bf16.gmra.mxu0 %v5557
    %v5819 = vpop.f32.mrf.mxu0
    %v5820 = vadd.f32 %v2945, %v5819
    %v5821 = vpop.f32.mrf.mxu0
    %v5822 = vpop.f32.mrf.mxu0
    %v5823 = vadd.f32 %v2945, %v5822
    %v5824 = vpop.f32.mrf.mxu0
    %5825 = vmatprep.mubr.bf16.mxu0 0
    %5826 = vmatmul.mubr.bf16.gmra.mxu0 %v5558
    %v5827 = vpop.f32.mrf.mxu0
    %v5828 = vadd.f32 %v2945, %v5827
    %v5829 = vpop.f32.mrf.mxu0
    %v5830 = vpop.f32.mrf.mxu0
    %v5831 = vadd.f32 %v2945, %v5830
    %v5832 = vpop.f32.mrf.mxu0
    %5833 = vmatprep.mubr.bf16.mxu0 0
    %5834 = vmatmul.mubr.bf16.gmra.mxu0 %v5559
    %v5835 = vpop.f32.mrf.mxu0
    %v5836 = vadd.f32 %v2945, %v5835
    %v5837 = vpop.f32.mrf.mxu0
    %v5838 = vpop.f32.mrf.mxu0
    %v5839 = vadd.f32 %v2945, %v5838
    %v5840 = vpop.f32.mrf.mxu0
    %5841 = vmatprep.mubr.bf16.mxu0 0
    %5842 = vmatmul.mubr.bf16.gmra.mxu0 %v5560
    %v5843 = vpop.f32.mrf.mxu0
    %v5844 = vadd.f32 %v2945, %v5843
    %v5845 = vpop.f32.mrf.mxu0
    %v5846 = vpop.f32.mrf.mxu0
    %v5847 = vadd.f32 %v2945, %v5846
    %v5848 = vpop.f32.mrf.mxu0
    %5849 = vdwg.mxu0
    %v5850 = vlaneseq
    %v5851 = vand.u32 %v5850, 127
    %vm5852 = vcmp.lt.s32.totalorder %v5851, 8
    %v5853 = vsel %vm5852, %v5596, -1e+30
    %v5854 = vsel %vm5852, %v5599, -1e+30
    %v5855 = vsel %vm5852, %v5604, -1e+30
    %v5856 = vsel %vm5852, %v5607, -1e+30
    %v5857 = vsel %vm5852, %v5612, -1e+30
    %v5858 = vsel %vm5852, %v5615, -1e+30
    %v5859 = vsel %vm5852, %v5620, -1e+30
    %v5860 = vsel %vm5852, %v5623, -1e+30
    %v5861 = vsel %vm5852, %v5628, -1e+30
    %v5862 = vsel %vm5852, %v5631, -1e+30
    %v5863 = vsel %vm5852, %v5636, -1e+30
    %v5864 = vsel %vm5852, %v5639, -1e+30
    %v5865 = vsel %vm5852, %v5644, -1e+30
    %v5866 = vsel %vm5852, %v5647, -1e+30
    %v5867 = vsel %vm5852, %v5652, -1e+30
    %v5868 = vsel %vm5852, %v5655, -1e+30
    %v5869 = vsel %vm5852, %v5660, -1e+30
    %v5870 = vsel %vm5852, %v5663, -1e+30
    %v5871 = vsel %vm5852, %v5668, -1e+30
    %v5872 = vsel %vm5852, %v5671, -1e+30
    %v5873 = vsel %vm5852, %v5676, -1e+30
    %v5874 = vsel %vm5852, %v5679, -1e+30
    %v5875 = vsel %vm5852, %v5684, -1e+30
    %v5876 = vsel %vm5852, %v5687, -1e+30
    %v5877 = vsel %vm5852, %v5692, -1e+30
    %v5878 = vsel %vm5852, %v5695, -1e+30
    %v5879 = vsel %vm5852, %v5700, -1e+30
    %v5880 = vsel %vm5852, %v5703, -1e+30
    %v5881 = vsel %vm5852, %v5708, -1e+30
    %v5882 = vsel %vm5852, %v5711, -1e+30
    %v5883 = vsel %vm5852, %v5716, -1e+30
    %v5884 = vsel %vm5852, %v5719, -1e+30
    %v5885 = vsel %vm5852, %v5724, -1e+30
    %v5886 = vsel %vm5852, %v5727, -1e+30
    %v5887 = vsel %vm5852, %v5732, -1e+30
    %v5888 = vsel %vm5852, %v5735, -1e+30
    %v5889 = vsel %vm5852, %v5740, -1e+30
    %v5890 = vsel %vm5852, %v5743, -1e+30
    %v5891 = vsel %vm5852, %v5748, -1e+30
    %v5892 = vsel %vm5852, %v5751, -1e+30
    %v5893 = vsel %vm5852, %v5756, -1e+30
    %v5894 = vsel %vm5852, %v5759, -1e+30
    %v5895 = vsel %vm5852, %v5764, -1e+30
    %v5896 = vsel %vm5852, %v5767, -1e+30
    %v5897 = vsel %vm5852, %v5772, -1e+30
    %v5898 = vsel %vm5852, %v5775, -1e+30
    %v5899 = vsel %vm5852, %v5780, -1e+30
    %v5900 = vsel %vm5852, %v5783, -1e+30
    %v5901 = vsel %vm5852, %v5788, -1e+30
    %v5902 = vsel %vm5852, %v5791, -1e+30
    %v5903 = vsel %vm5852, %v5796, -1e+30
    %v5904 = vsel %vm5852, %v5799, -1e+30
    %v5905 = vsel %vm5852, %v5804, -1e+30
    %v5906 = vsel %vm5852, %v5807, -1e+30
    %v5907 = vsel %vm5852, %v5812, -1e+30
    %v5908 = vsel %vm5852, %v5815, -1e+30
    %v5909 = vsel %vm5852, %v5820, -1e+30
    %v5910 = vsel %vm5852, %v5823, -1e+30
    %v5911 = vsel %vm5852, %v5828, -1e+30
    %v5912 = vsel %vm5852, %v5831, -1e+30
    %v5913 = vsel %vm5852, %v5836, -1e+30
    %v5914 = vsel %vm5852, %v5839, -1e+30
    %v5915 = vsel %vm5852, %v5844, -1e+30
    %v5916 = vsel %vm5852, %v5847, -1e+30
    %5917 = vmax.xlane.f32.xlu0 %v5853
    %v5918 = vpop.xlane.xlu0 %5917
    %5919 = vmax.xlane.f32.xlu0 %v5854
    %v5920 = vpop.xlane.xlu0 %5919
    %5921 = vmax.xlane.f32.xlu0 %v5855
    %v5922 = vpop.xlane.xlu0 %5921
    %5923 = vmax.xlane.f32.xlu0 %v5856
    %v5924 = vpop.xlane.xlu0 %5923
    %5925 = vmax.xlane.f32.xlu0 %v5857
    %v5926 = vpop.xlane.xlu0 %5925
    %5927 = vmax.xlane.f32.xlu0 %v5858
    %v5928 = vpop.xlane.xlu0 %5927
    %5929 = vmax.xlane.f32.xlu0 %v5859
    %v5930 = vpop.xlane.xlu0 %5929
    %5931 = vmax.xlane.f32.xlu0 %v5860
    %v5932 = vpop.xlane.xlu0 %5931
    %5933 = vmax.xlane.f32.xlu0 %v5861
    %v5934 = vpop.xlane.xlu0 %5933
    %5935 = vmax.xlane.f32.xlu0 %v5862
    %v5936 = vpop.xlane.xlu0 %5935
    %5937 = vmax.xlane.f32.xlu0 %v5863
    %v5938 = vpop.xlane.xlu0 %5937
    %5939 = vmax.xlane.f32.xlu0 %v5864
    %v5940 = vpop.xlane.xlu0 %5939
    %5941 = vmax.xlane.f32.xlu0 %v5865
    %v5942 = vpop.xlane.xlu0 %5941
    %5943 = vmax.xlane.f32.xlu0 %v5866
    %v5944 = vpop.xlane.xlu0 %5943
    %5945 = vmax.xlane.f32.xlu0 %v5867
    %v5946 = vpop.xlane.xlu0 %5945
    %5947 = vmax.xlane.f32.xlu0 %v5868
    %v5948 = vpop.xlane.xlu0 %5947
    %5949 = vmax.xlane.f32.xlu0 %v5869
    %v5950 = vpop.xlane.xlu0 %5949
    %5951 = vmax.xlane.f32.xlu0 %v5870
    %v5952 = vpop.xlane.xlu0 %5951
    %5953 = vmax.xlane.f32.xlu0 %v5871
    %v5954 = vpop.xlane.xlu0 %5953
    %5955 = vmax.xlane.f32.xlu0 %v5872
    %v5956 = vpop.xlane.xlu0 %5955
    %5957 = vmax.xlane.f32.xlu0 %v5873
    %v5958 = vpop.xlane.xlu0 %5957
    %5959 = vmax.xlane.f32.xlu0 %v5874
    %v5960 = vpop.xlane.xlu0 %5959
    %5961 = vmax.xlane.f32.xlu0 %v5875
    %v5962 = vpop.xlane.xlu0 %5961
    %5963 = vmax.xlane.f32.xlu0 %v5876
    %v5964 = vpop.xlane.xlu0 %5963
    %5965 = vmax.xlane.f32.xlu0 %v5877
    %v5966 = vpop.xlane.xlu0 %5965
    %5967 = vmax.xlane.f32.xlu0 %v5878
    %v5968 = vpop.xlane.xlu0 %5967
    %5969 = vmax.xlane.f32.xlu0 %v5879
    %v5970 = vpop.xlane.xlu0 %5969
    %5971 = vmax.xlane.f32.xlu0 %v5880
    %v5972 = vpop.xlane.xlu0 %5971
    %5973 = vmax.xlane.f32.xlu0 %v5881
    %v5974 = vpop.xlane.xlu0 %5973
    %5975 = vmax.xlane.f32.xlu0 %v5882
    %v5976 = vpop.xlane.xlu0 %5975
    %5977 = vmax.xlane.f32.xlu0 %v5883
    %v5978 = vpop.xlane.xlu0 %5977
    %5979 = vmax.xlane.f32.xlu0 %v5884
    %v5980 = vpop.xlane.xlu0 %5979
    %5981 = vmax.xlane.f32.xlu0 %v5885
    %v5982 = vpop.xlane.xlu0 %5981
    %5983 = vmax.xlane.f32.xlu0 %v5886
    %v5984 = vpop.xlane.xlu0 %5983
    %5985 = vmax.xlane.f32.xlu0 %v5887
    %v5986 = vpop.xlane.xlu0 %5985
    %5987 = vmax.xlane.f32.xlu0 %v5888
    %v5988 = vpop.xlane.xlu0 %5987
    %5989 = vmax.xlane.f32.xlu0 %v5889
    %v5990 = vpop.xlane.xlu0 %5989
    %5991 = vmax.xlane.f32.xlu0 %v5890
    %v5992 = vpop.xlane.xlu0 %5991
    %5993 = vmax.xlane.f32.xlu0 %v5891
    %v5994 = vpop.xlane.xlu0 %5993
    %5995 = vmax.xlane.f32.xlu0 %v5892
    %v5996 = vpop.xlane.xlu0 %5995
    %5997 = vmax.xlane.f32.xlu0 %v5893
    %v5998 = vpop.xlane.xlu0 %5997
    %5999 = vmax.xlane.f32.xlu0 %v5894
    %v6000 = vpop.xlane.xlu0 %5999
    %6001 = vmax.xlane.f32.xlu0 %v5895
    %v6002 = vpop.xlane.xlu0 %6001
    %6003 = vmax.xlane.f32.xlu0 %v5896
    %v6004 = vpop.xlane.xlu0 %6003
    %6005 = vmax.xlane.f32.xlu0 %v5897
    %v6006 = vpop.xlane.xlu0 %6005
    %6007 = vmax.xlane.f32.xlu0 %v5898
    %v6008 = vpop.xlane.xlu0 %6007
    %6009 = vmax.xlane.f32.xlu0 %v5899
    %v6010 = vpop.xlane.xlu0 %6009
    %6011 = vmax.xlane.f32.xlu0 %v5900
    %v6012 = vpop.xlane.xlu0 %6011
    %6013 = vmax.xlane.f32.xlu0 %v5901
    %v6014 = vpop.xlane.xlu0 %6013
    %6015 = vmax.xlane.f32.xlu0 %v5902
    %v6016 = vpop.xlane.xlu0 %6015
    %6017 = vmax.xlane.f32.xlu0 %v5903
    %v6018 = vpop.xlane.xlu0 %6017
    %6019 = vmax.xlane.f32.xlu0 %v5904
    %v6020 = vpop.xlane.xlu0 %6019
    %6021 = vmax.xlane.f32.xlu0 %v5905
    %v6022 = vpop.xlane.xlu0 %6021
    %6023 = vmax.xlane.f32.xlu0 %v5906
    %v6024 = vpop.xlane.xlu0 %6023
    %6025 = vmax.xlane.f32.xlu0 %v5907
    %v6026 = vpop.xlane.xlu0 %6025
    %6027 = vmax.xlane.f32.xlu0 %v5908
    %v6028 = vpop.xlane.xlu0 %6027
    %6029 = vmax.xlane.f32.xlu0 %v5909
    %v6030 = vpop.xlane.xlu0 %6029
    %6031 = vmax.xlane.f32.xlu0 %v5910
    %v6032 = vpop.xlane.xlu0 %6031
    %6033 = vmax.xlane.f32.xlu0 %v5911
    %v6034 = vpop.xlane.xlu0 %6033
    %6035 = vmax.xlane.f32.xlu0 %v5912
    %v6036 = vpop.xlane.xlu0 %6035
    %6037 = vmax.xlane.f32.xlu0 %v5913
    %v6038 = vpop.xlane.xlu0 %6037
    %6039 = vmax.xlane.f32.xlu0 %v5914
    %v6040 = vpop.xlane.xlu0 %6039
    %6041 = vmax.xlane.f32.xlu0 %v5915
    %v6042 = vpop.xlane.xlu0 %6041
    %6043 = vmax.xlane.f32.xlu0 %v5916
    %v6044 = vpop.xlane.xlu0 %6043
    %v6045 = vsub.f32 %v5853, %v5918
    %v6046 = vsub.f32 %v5854, %v5920
    %v6047 = vsub.f32 %v5855, %v5922
    %v6048 = vsub.f32 %v5856, %v5924
    %v6049 = vsub.f32 %v5857, %v5926
    %v6050 = vsub.f32 %v5858, %v5928
    %v6051 = vsub.f32 %v5859, %v5930
    %v6052 = vsub.f32 %v5860, %v5932
    %v6053 = vsub.f32 %v5861, %v5934
    %v6054 = vsub.f32 %v5862, %v5936
    %v6055 = vsub.f32 %v5863, %v5938
    %v6056 = vsub.f32 %v5864, %v5940
    %v6057 = vsub.f32 %v5865, %v5942
    %v6058 = vsub.f32 %v5866, %v5944
    %v6059 = vsub.f32 %v5867, %v5946
    %v6060 = vsub.f32 %v5868, %v5948
    %v6061 = vsub.f32 %v5869, %v5950
    %v6062 = vsub.f32 %v5870, %v5952
    %v6063 = vsub.f32 %v5871, %v5954
    %v6064 = vsub.f32 %v5872, %v5956
    %v6065 = vsub.f32 %v5873, %v5958
    %v6066 = vsub.f32 %v5874, %v5960
    %v6067 = vsub.f32 %v5875, %v5962
    %v6068 = vsub.f32 %v5876, %v5964
    %v6069 = vsub.f32 %v5877, %v5966
    %v6070 = vsub.f32 %v5878, %v5968
    %v6071 = vsub.f32 %v5879, %v5970
    %v6072 = vsub.f32 %v5880, %v5972
    %v6073 = vsub.f32 %v5881, %v5974
    %v6074 = vsub.f32 %v5882, %v5976
    %v6075 = vsub.f32 %v5883, %v5978
    %v6076 = vsub.f32 %v5884, %v5980
    %v6077 = vsub.f32 %v5885, %v5982
    %v6078 = vsub.f32 %v5886, %v5984
    %v6079 = vsub.f32 %v5887, %v5986
    %v6080 = vsub.f32 %v5888, %v5988
    %v6081 = vsub.f32 %v5889, %v5990
    %v6082 = vsub.f32 %v5890, %v5992
    %v6083 = vsub.f32 %v5891, %v5994
    %v6084 = vsub.f32 %v5892, %v5996
    %v6085 = vsub.f32 %v5893, %v5998
    %v6086 = vsub.f32 %v5894, %v6000
    %v6087 = vsub.f32 %v5895, %v6002
    %v6088 = vsub.f32 %v5896, %v6004
    %v6089 = vsub.f32 %v5897, %v6006
    %v6090 = vsub.f32 %v5898, %v6008
    %v6091 = vsub.f32 %v5899, %v6010
    %v6092 = vsub.f32 %v5900, %v6012
    %v6093 = vsub.f32 %v5901, %v6014
    %v6094 = vsub.f32 %v5902, %v6016
    %v6095 = vsub.f32 %v5903, %v6018
    %v6096 = vsub.f32 %v5904, %v6020
    %v6097 = vsub.f32 %v5905, %v6022
    %v6098 = vsub.f32 %v5906, %v6024
    %v6099 = vsub.f32 %v5907, %v6026
    %v6100 = vsub.f32 %v5908, %v6028
    %v6101 = vsub.f32 %v5909, %v6030
    %v6102 = vsub.f32 %v5910, %v6032
    %v6103 = vsub.f32 %v5911, %v6034
    %v6104 = vsub.f32 %v5912, %v6036
    %v6105 = vsub.f32 %v5913, %v6038
    %v6106 = vsub.f32 %v5914, %v6040
    %v6107 = vsub.f32 %v5915, %v6042
    %v6108 = vsub.f32 %v5916, %v6044
    %v6109 = vmul.f32 %v6045, 1.442695
    %v6110 = vpow.pop %v6109
    %v6111 = vmul.f32 %v6046, 1.442695
    %v6112 = vpow.pop %v6111
    %v6113 = vmul.f32 %v6047, 1.442695
    %v6114 = vpow.pop %v6113
    %v6115 = vmul.f32 %v6048, 1.442695
    %v6116 = vpow.pop %v6115
    %v6117 = vmul.f32 %v6049, 1.442695
    %v6118 = vpow.pop %v6117
    %v6119 = vmul.f32 %v6050, 1.442695
    %v6120 = vpow.pop %v6119
    %v6121 = vmul.f32 %v6051, 1.442695
    %v6122 = vpow.pop %v6121
    %v6123 = vmul.f32 %v6052, 1.442695
    %v6124 = vpow.pop %v6123
    %v6125 = vmul.f32 %v6053, 1.442695
    %v6126 = vpow.pop %v6125
    %v6127 = vmul.f32 %v6054, 1.442695
    %v6128 = vpow.pop %v6127
    %v6129 = vmul.f32 %v6055, 1.442695
    %v6130 = vpow.pop %v6129
    %v6131 = vmul.f32 %v6056, 1.442695
    %v6132 = vpow.pop %v6131
    %v6133 = vmul.f32 %v6057, 1.442695
    %v6134 = vpow.pop %v6133
    %v6135 = vmul.f32 %v6058, 1.442695
    %v6136 = vpow.pop %v6135
    %v6137 = vmul.f32 %v6059, 1.442695
    %v6138 = vpow.pop %v6137
    %v6139 = vmul.f32 %v6060, 1.442695
    %v6140 = vpow.pop %v6139
    %v6141 = vmul.f32 %v6061, 1.442695
    %v6142 = vpow.pop %v6141
    %v6143 = vmul.f32 %v6062, 1.442695
    %v6144 = vpow.pop %v6143
    %v6145 = vmul.f32 %v6063, 1.442695
    %v6146 = vpow.pop %v6145
    %v6147 = vmul.f32 %v6064, 1.442695
    %v6148 = vpow.pop %v6147
    %v6149 = vmul.f32 %v6065, 1.442695
    %v6150 = vpow.pop %v6149
    %v6151 = vmul.f32 %v6066, 1.442695
    %v6152 = vpow.pop %v6151
    %v6153 = vmul.f32 %v6067, 1.442695
    %v6154 = vpow.pop %v6153
    %v6155 = vmul.f32 %v6068, 1.442695
    %v6156 = vpow.pop %v6155
    %v6157 = vmul.f32 %v6069, 1.442695
    %v6158 = vpow.pop %v6157
    %v6159 = vmul.f32 %v6070, 1.442695
    %v6160 = vpow.pop %v6159
    %v6161 = vmul.f32 %v6071, 1.442695
    %v6162 = vpow.pop %v6161
    %v6163 = vmul.f32 %v6072, 1.442695
    %v6164 = vpow.pop %v6163
    %v6165 = vmul.f32 %v6073, 1.442695
    %v6166 = vpow.pop %v6165
    %v6167 = vmul.f32 %v6074, 1.442695
    %v6168 = vpow.pop %v6167
    %v6169 = vmul.f32 %v6075, 1.442695
    %v6170 = vpow.pop %v6169
    %v6171 = vmul.f32 %v6076, 1.442695
    %v6172 = vpow.pop %v6171
    %v6173 = vmul.f32 %v6077, 1.442695
    %v6174 = vpow.pop %v6173
    %v6175 = vmul.f32 %v6078, 1.442695
    %v6176 = vpow.pop %v6175
    %v6177 = vmul.f32 %v6079, 1.442695
    %v6178 = vpow.pop %v6177
    %v6179 = vmul.f32 %v6080, 1.442695
    %v6180 = vpow.pop %v6179
    %v6181 = vmul.f32 %v6081, 1.442695
    %v6182 = vpow.pop %v6181
    %v6183 = vmul.f32 %v6082, 1.442695
    %v6184 = vpow.pop %v6183
    %v6185 = vmul.f32 %v6083, 1.442695
    %v6186 = vpow.pop %v6185
    %v6187 = vmul.f32 %v6084, 1.442695
    %v6188 = vpow.pop %v6187
    %v6189 = vmul.f32 %v6085, 1.442695
    %v6190 = vpow.pop %v6189
    %v6191 = vmul.f32 %v6086, 1.442695
    %v6192 = vpow.pop %v6191
    %v6193 = vmul.f32 %v6087, 1.442695
    %v6194 = vpow.pop %v6193
    %v6195 = vmul.f32 %v6088, 1.442695
    %v6196 = vpow.pop %v6195
    %v6197 = vmul.f32 %v6089, 1.442695
    %v6198 = vpow.pop %v6197
    %v6199 = vmul.f32 %v6090, 1.442695
    %v6200 = vpow.pop %v6199
    %v6201 = vmul.f32 %v6091, 1.442695
    %v6202 = vpow.pop %v6201
    %v6203 = vmul.f32 %v6092, 1.442695
    %v6204 = vpow.pop %v6203
    %v6205 = vmul.f32 %v6093, 1.442695
    %v6206 = vpow.pop %v6205
    %v6207 = vmul.f32 %v6094, 1.442695
    %v6208 = vpow.pop %v6207
    %v6209 = vmul.f32 %v6095, 1.442695
    %v6210 = vpow.pop %v6209
    %v6211 = vmul.f32 %v6096, 1.442695
    %v6212 = vpow.pop %v6211
    %v6213 = vmul.f32 %v6097, 1.442695
    %v6214 = vpow.pop %v6213
    %v6215 = vmul.f32 %v6098, 1.442695
    %v6216 = vpow.pop %v6215
    %v6217 = vmul.f32 %v6099, 1.442695
    %v6218 = vpow.pop %v6217
    %v6219 = vmul.f32 %v6100, 1.442695
    %v6220 = vpow.pop %v6219
    %v6221 = vmul.f32 %v6101, 1.442695
    %v6222 = vpow.pop %v6221
    %v6223 = vmul.f32 %v6102, 1.442695
    %v6224 = vpow.pop %v6223
    %v6225 = vmul.f32 %v6103, 1.442695
    %v6226 = vpow.pop %v6225
    %v6227 = vmul.f32 %v6104, 1.442695
    %v6228 = vpow.pop %v6227
    %v6229 = vmul.f32 %v6105, 1.442695
    %v6230 = vpow.pop %v6229
    %v6231 = vmul.f32 %v6106, 1.442695
    %v6232 = vpow.pop %v6231
    %v6233 = vmul.f32 %v6107, 1.442695
    %v6234 = vpow.pop %v6233
    %v6235 = vmul.f32 %v6108, 1.442695
    %v6236 = vpow.pop %v6235
    %6237 = vadd.xlane.f32.xlu0 %v6110
    %v6238 = vpop.xlane.xlu0 %6237
    %6239 = vadd.xlane.f32.xlu0 %v6112
    %v6240 = vpop.xlane.xlu0 %6239
    %6241 = vadd.xlane.f32.xlu0 %v6114
    %v6242 = vpop.xlane.xlu0 %6241
    %6243 = vadd.xlane.f32.xlu0 %v6116
    %v6244 = vpop.xlane.xlu0 %6243
    %6245 = vadd.xlane.f32.xlu0 %v6118
    %v6246 = vpop.xlane.xlu0 %6245
    %6247 = vadd.xlane.f32.xlu0 %v6120
    %v6248 = vpop.xlane.xlu0 %6247
    %6249 = vadd.xlane.f32.xlu0 %v6122
    %v6250 = vpop.xlane.xlu0 %6249
    %6251 = vadd.xlane.f32.xlu0 %v6124
    %v6252 = vpop.xlane.xlu0 %6251
    %6253 = vadd.xlane.f32.xlu0 %v6126
    %v6254 = vpop.xlane.xlu0 %6253
    %6255 = vadd.xlane.f32.xlu0 %v6128
    %v6256 = vpop.xlane.xlu0 %6255
    %6257 = vadd.xlane.f32.xlu0 %v6130
    %v6258 = vpop.xlane.xlu0 %6257
    %6259 = vadd.xlane.f32.xlu0 %v6132
    %v6260 = vpop.xlane.xlu0 %6259
    %6261 = vadd.xlane.f32.xlu0 %v6134
    %v6262 = vpop.xlane.xlu0 %6261
    %6263 = vadd.xlane.f32.xlu0 %v6136
    %v6264 = vpop.xlane.xlu0 %6263
    %6265 = vadd.xlane.f32.xlu0 %v6138
    %v6266 = vpop.xlane.xlu0 %6265
    %6267 = vadd.xlane.f32.xlu0 %v6140
    %v6268 = vpop.xlane.xlu0 %6267
    %6269 = vadd.xlane.f32.xlu0 %v6142
    %v6270 = vpop.xlane.xlu0 %6269
    %6271 = vadd.xlane.f32.xlu0 %v6144
    %v6272 = vpop.xlane.xlu0 %6271
    %6273 = vadd.xlane.f32.xlu0 %v6146
    %v6274 = vpop.xlane.xlu0 %6273
    %6275 = vadd.xlane.f32.xlu0 %v6148
    %v6276 = vpop.xlane.xlu0 %6275
    %6277 = vadd.xlane.f32.xlu0 %v6150
    %v6278 = vpop.xlane.xlu0 %6277
    %6279 = vadd.xlane.f32.xlu0 %v6152
    %v6280 = vpop.xlane.xlu0 %6279
    %6281 = vadd.xlane.f32.xlu0 %v6154
    %v6282 = vpop.xlane.xlu0 %6281
    %6283 = vadd.xlane.f32.xlu0 %v6156
    %v6284 = vpop.xlane.xlu0 %6283
    %6285 = vadd.xlane.f32.xlu0 %v6158
    %v6286 = vpop.xlane.xlu0 %6285
    %6287 = vadd.xlane.f32.xlu0 %v6160
    %v6288 = vpop.xlane.xlu0 %6287
    %6289 = vadd.xlane.f32.xlu0 %v6162
    %v6290 = vpop.xlane.xlu0 %6289
    %6291 = vadd.xlane.f32.xlu0 %v6164
    %v6292 = vpop.xlane.xlu0 %6291
    %6293 = vadd.xlane.f32.xlu0 %v6166
    %v6294 = vpop.xlane.xlu0 %6293
    %6295 = vadd.xlane.f32.xlu0 %v6168
    %v6296 = vpop.xlane.xlu0 %6295
    %6297 = vadd.xlane.f32.xlu0 %v6170
    %v6298 = vpop.xlane.xlu0 %6297
    %6299 = vadd.xlane.f32.xlu0 %v6172
    %v6300 = vpop.xlane.xlu0 %6299
    %6301 = vadd.xlane.f32.xlu0 %v6174
    %v6302 = vpop.xlane.xlu0 %6301
    %6303 = vadd.xlane.f32.xlu0 %v6176
    %v6304 = vpop.xlane.xlu0 %6303
    %6305 = vadd.xlane.f32.xlu0 %v6178
    %v6306 = vpop.xlane.xlu0 %6305
    %6307 = vadd.xlane.f32.xlu0 %v6180
    %v6308 = vpop.xlane.xlu0 %6307
    %6309 = vadd.xlane.f32.xlu0 %v6182
    %v6310 = vpop.xlane.xlu0 %6309
    %6311 = vadd.xlane.f32.xlu0 %v6184
    %v6312 = vpop.xlane.xlu0 %6311
    %6313 = vadd.xlane.f32.xlu0 %v6186
    %v6314 = vpop.xlane.xlu0 %6313
    %6315 = vadd.xlane.f32.xlu0 %v6188
    %v6316 = vpop.xlane.xlu0 %6315
    %6317 = vadd.xlane.f32.xlu0 %v6190
    %v6318 = vpop.xlane.xlu0 %6317
    %6319 = vadd.xlane.f32.xlu0 %v6192
    %v6320 = vpop.xlane.xlu0 %6319
    %6321 = vadd.xlane.f32.xlu0 %v6194
    %v6322 = vpop.xlane.xlu0 %6321
    %6323 = vadd.xlane.f32.xlu0 %v6196
    %v6324 = vpop.xlane.xlu0 %6323
    %6325 = vadd.xlane.f32.xlu0 %v6198
    %v6326 = vpop.xlane.xlu0 %6325
    %6327 = vadd.xlane.f32.xlu0 %v6200
    %v6328 = vpop.xlane.xlu0 %6327
    %6329 = vadd.xlane.f32.xlu0 %v6202
    %v6330 = vpop.xlane.xlu0 %6329
    %6331 = vadd.xlane.f32.xlu0 %v6204
    %v6332 = vpop.xlane.xlu0 %6331
    %6333 = vadd.xlane.f32.xlu0 %v6206
    %v6334 = vpop.xlane.xlu0 %6333
    %6335 = vadd.xlane.f32.xlu0 %v6208
    %v6336 = vpop.xlane.xlu0 %6335
    %6337 = vadd.xlane.f32.xlu0 %v6210
    %v6338 = vpop.xlane.xlu0 %6337
    %6339 = vadd.xlane.f32.xlu0 %v6212
    %v6340 = vpop.xlane.xlu0 %6339
    %6341 = vadd.xlane.f32.xlu0 %v6214
    %v6342 = vpop.xlane.xlu0 %6341
    %6343 = vadd.xlane.f32.xlu0 %v6216
    %v6344 = vpop.xlane.xlu0 %6343
    %6345 = vadd.xlane.f32.xlu0 %v6218
    %v6346 = vpop.xlane.xlu0 %6345
    %6347 = vadd.xlane.f32.xlu0 %v6220
    %v6348 = vpop.xlane.xlu0 %6347
    %6349 = vadd.xlane.f32.xlu0 %v6222
    %v6350 = vpop.xlane.xlu0 %6349
    %6351 = vadd.xlane.f32.xlu0 %v6224
    %v6352 = vpop.xlane.xlu0 %6351
    %6353 = vadd.xlane.f32.xlu0 %v6226
    %v6354 = vpop.xlane.xlu0 %6353
    %6355 = vadd.xlane.f32.xlu0 %v6228
    %v6356 = vpop.xlane.xlu0 %6355
    %6357 = vadd.xlane.f32.xlu0 %v6230
    %v6358 = vpop.xlane.xlu0 %6357
    %6359 = vadd.xlane.f32.xlu0 %v6232
    %v6360 = vpop.xlane.xlu0 %6359
    %6361 = vadd.xlane.f32.xlu0 %v6234
    %v6362 = vpop.xlane.xlu0 %6361
    %6363 = vadd.xlane.f32.xlu0 %v6236
    %v6364 = vpop.xlane.xlu0 %6363
    %v6365 = vlog2.pop %v6238
    %v6366 = vmul.f32 %v6365, 0.6931472
    %v6367 = vlog2.pop %v6240
    %v6368 = vmul.f32 %v6367, 0.6931472
    %v6369 = vlog2.pop %v6242
    %v6370 = vmul.f32 %v6369, 0.6931472
    %v6371 = vlog2.pop %v6244
    %v6372 = vmul.f32 %v6371, 0.6931472
    %v6373 = vlog2.pop %v6246
    %v6374 = vmul.f32 %v6373, 0.6931472
    %v6375 = vlog2.pop %v6248
    %v6376 = vmul.f32 %v6375, 0.6931472
    %v6377 = vlog2.pop %v6250
    %v6378 = vmul.f32 %v6377, 0.6931472
    %v6379 = vlog2.pop %v6252
    %v6380 = vmul.f32 %v6379, 0.6931472
    %v6381 = vlog2.pop %v6254
    %v6382 = vmul.f32 %v6381, 0.6931472
    %v6383 = vlog2.pop %v6256
    %v6384 = vmul.f32 %v6383, 0.6931472
    %v6385 = vlog2.pop %v6258
    %v6386 = vmul.f32 %v6385, 0.6931472
    %v6387 = vlog2.pop %v6260
    %v6388 = vmul.f32 %v6387, 0.6931472
    %v6389 = vlog2.pop %v6262
    %v6390 = vmul.f32 %v6389, 0.6931472
    %v6391 = vlog2.pop %v6264
    %v6392 = vmul.f32 %v6391, 0.6931472
    %v6393 = vlog2.pop %v6266
    %v6394 = vmul.f32 %v6393, 0.6931472
    %v6395 = vlog2.pop %v6268
    %v6396 = vmul.f32 %v6395, 0.6931472
    %v6397 = vlog2.pop %v6270
    %v6398 = vmul.f32 %v6397, 0.6931472
    %v6399 = vlog2.pop %v6272
    %v6400 = vmul.f32 %v6399, 0.6931472
    %v6401 = vlog2.pop %v6274
    %v6402 = vmul.f32 %v6401, 0.6931472
    %v6403 = vlog2.pop %v6276
    %v6404 = vmul.f32 %v6403, 0.6931472
    %v6405 = vlog2.pop %v6278
    %v6406 = vmul.f32 %v6405, 0.6931472
    %v6407 = vlog2.pop %v6280
    %v6408 = vmul.f32 %v6407, 0.6931472
    %v6409 = vlog2.pop %v6282
    %v6410 = vmul.f32 %v6409, 0.6931472
    %v6411 = vlog2.pop %v6284
    %v6412 = vmul.f32 %v6411, 0.6931472
    %v6413 = vlog2.pop %v6286
    %v6414 = vmul.f32 %v6413, 0.6931472
    %v6415 = vlog2.pop %v6288
    %v6416 = vmul.f32 %v6415, 0.6931472
    %v6417 = vlog2.pop %v6290
    %v6418 = vmul.f32 %v6417, 0.6931472
    %v6419 = vlog2.pop %v6292
    %v6420 = vmul.f32 %v6419, 0.6931472
    %v6421 = vlog2.pop %v6294
    %v6422 = vmul.f32 %v6421, 0.6931472
    %v6423 = vlog2.pop %v6296
    %v6424 = vmul.f32 %v6423, 0.6931472
    %v6425 = vlog2.pop %v6298
    %v6426 = vmul.f32 %v6425, 0.6931472
    %v6427 = vlog2.pop %v6300
    %v6428 = vmul.f32 %v6427, 0.6931472
    %v6429 = vlog2.pop %v6302
    %v6430 = vmul.f32 %v6429, 0.6931472
    %v6431 = vlog2.pop %v6304
    %v6432 = vmul.f32 %v6431, 0.6931472
    %v6433 = vlog2.pop %v6306
    %v6434 = vmul.f32 %v6433, 0.6931472
    %v6435 = vlog2.pop %v6308
    %v6436 = vmul.f32 %v6435, 0.6931472
    %v6437 = vlog2.pop %v6310
    %v6438 = vmul.f32 %v6437, 0.6931472
    %v6439 = vlog2.pop %v6312
    %v6440 = vmul.f32 %v6439, 0.6931472
    %v6441 = vlog2.pop %v6314
    %v6442 = vmul.f32 %v6441, 0.6931472
    %v6443 = vlog2.pop %v6316
    %v6444 = vmul.f32 %v6443, 0.6931472
    %v6445 = vlog2.pop %v6318
    %v6446 = vmul.f32 %v6445, 0.6931472
    %v6447 = vlog2.pop %v6320
    %v6448 = vmul.f32 %v6447, 0.6931472
    %v6449 = vlog2.pop %v6322
    %v6450 = vmul.f32 %v6449, 0.6931472
    %v6451 = vlog2.pop %v6324
    %v6452 = vmul.f32 %v6451, 0.6931472
    %v6453 = vlog2.pop %v6326
    %v6454 = vmul.f32 %v6453, 0.6931472
    %v6455 = vlog2.pop %v6328
    %v6456 = vmul.f32 %v6455, 0.6931472
    %v6457 = vlog2.pop %v6330
    %v6458 = vmul.f32 %v6457, 0.6931472
    %v6459 = vlog2.pop %v6332
    %v6460 = vmul.f32 %v6459, 0.6931472
    %v6461 = vlog2.pop %v6334
    %v6462 = vmul.f32 %v6461, 0.6931472
    %v6463 = vlog2.pop %v6336
    %v6464 = vmul.f32 %v6463, 0.6931472
    %v6465 = vlog2.pop %v6338
    %v6466 = vmul.f32 %v6465, 0.6931472
    %v6467 = vlog2.pop %v6340
    %v6468 = vmul.f32 %v6467, 0.6931472
    %v6469 = vlog2.pop %v6342
    %v6470 = vmul.f32 %v6469, 0.6931472
    %v6471 = vlog2.pop %v6344
    %v6472 = vmul.f32 %v6471, 0.6931472
    %v6473 = vlog2.pop %v6346
    %v6474 = vmul.f32 %v6473, 0.6931472
    %v6475 = vlog2.pop %v6348
    %v6476 = vmul.f32 %v6475, 0.6931472
    %v6477 = vlog2.pop %v6350
    %v6478 = vmul.f32 %v6477, 0.6931472
    %v6479 = vlog2.pop %v6352
    %v6480 = vmul.f32 %v6479, 0.6931472
    %v6481 = vlog2.pop %v6354
    %v6482 = vmul.f32 %v6481, 0.6931472
    %v6483 = vlog2.pop %v6356
    %v6484 = vmul.f32 %v6483, 0.6931472
    %v6485 = vlog2.pop %v6358
    %v6486 = vmul.f32 %v6485, 0.6931472
    %v6487 = vlog2.pop %v6360
    %v6488 = vmul.f32 %v6487, 0.6931472
    %v6489 = vlog2.pop %v6362
    %v6490 = vmul.f32 %v6489, 0.6931472
    %v6491 = vlog2.pop %v6364
    %v6492 = vmul.f32 %v6491, 0.6931472
    %v6493 = vsub.f32 %v6045, %v6366
    %v6494 = vsub.f32 %v6046, %v6368
    %v6495 = vsub.f32 %v6047, %v6370
    %v6496 = vsub.f32 %v6048, %v6372
    %v6497 = vsub.f32 %v6049, %v6374
    %v6498 = vsub.f32 %v6050, %v6376
    %v6499 = vsub.f32 %v6051, %v6378
    %v6500 = vsub.f32 %v6052, %v6380
    %v6501 = vsub.f32 %v6053, %v6382
    %v6502 = vsub.f32 %v6054, %v6384
    %v6503 = vsub.f32 %v6055, %v6386
    %v6504 = vsub.f32 %v6056, %v6388
    %v6505 = vsub.f32 %v6057, %v6390
    %v6506 = vsub.f32 %v6058, %v6392
    %v6507 = vsub.f32 %v6059, %v6394
    %v6508 = vsub.f32 %v6060, %v6396
    %v6509 = vsub.f32 %v6061, %v6398
    %v6510 = vsub.f32 %v6062, %v6400
    %v6511 = vsub.f32 %v6063, %v6402
    %v6512 = vsub.f32 %v6064, %v6404
    %v6513 = vsub.f32 %v6065, %v6406
    %v6514 = vsub.f32 %v6066, %v6408
    %v6515 = vsub.f32 %v6067, %v6410
    %v6516 = vsub.f32 %v6068, %v6412
    %v6517 = vsub.f32 %v6069, %v6414
    %v6518 = vsub.f32 %v6070, %v6416
    %v6519 = vsub.f32 %v6071, %v6418
    %v6520 = vsub.f32 %v6072, %v6420
    %v6521 = vsub.f32 %v6073, %v6422
    %v6522 = vsub.f32 %v6074, %v6424
    %v6523 = vsub.f32 %v6075, %v6426
    %v6524 = vsub.f32 %v6076, %v6428
    %v6525 = vsub.f32 %v6077, %v6430
    %v6526 = vsub.f32 %v6078, %v6432
    %v6527 = vsub.f32 %v6079, %v6434
    %v6528 = vsub.f32 %v6080, %v6436
    %v6529 = vsub.f32 %v6081, %v6438
    %v6530 = vsub.f32 %v6082, %v6440
    %v6531 = vsub.f32 %v6083, %v6442
    %v6532 = vsub.f32 %v6084, %v6444
    %v6533 = vsub.f32 %v6085, %v6446
    %v6534 = vsub.f32 %v6086, %v6448
    %v6535 = vsub.f32 %v6087, %v6450
    %v6536 = vsub.f32 %v6088, %v6452
    %v6537 = vsub.f32 %v6089, %v6454
    %v6538 = vsub.f32 %v6090, %v6456
    %v6539 = vsub.f32 %v6091, %v6458
    %v6540 = vsub.f32 %v6092, %v6460
    %v6541 = vsub.f32 %v6093, %v6462
    %v6542 = vsub.f32 %v6094, %v6464
    %v6543 = vsub.f32 %v6095, %v6466
    %v6544 = vsub.f32 %v6096, %v6468
    %v6545 = vsub.f32 %v6097, %v6470
    %v6546 = vsub.f32 %v6098, %v6472
    %v6547 = vsub.f32 %v6099, %v6474
    %v6548 = vsub.f32 %v6100, %v6476
    %v6549 = vsub.f32 %v6101, %v6478
    %v6550 = vsub.f32 %v6102, %v6480
    %v6551 = vsub.f32 %v6103, %v6482
    %v6552 = vsub.f32 %v6104, %v6484
    %v6553 = vsub.f32 %v6105, %v6486
    %v6554 = vsub.f32 %v6106, %v6488
    %v6555 = vsub.f32 %v6107, %v6490
    %v6556 = vsub.f32 %v6108, %v6492
    %6557 = vst [vmem:[#allocation11] sm:$0xff] %v6493
    %6558 = vst [vmem:[#allocation11 + $0x8] sm:$0xff] %v6494
    %6559 = vst [vmem:[#allocation11 + $0x10] sm:$0xff] %v6495
    %6560 = vst [vmem:[#allocation11 + $0x18] sm:$0xff] %v6496
    %6561 = vst [vmem:[#allocation11 + $0x20] sm:$0xff] %v6497
    %6562 = vst [vmem:[#allocation11 + $0x28] sm:$0xff] %v6498
    %6563 = vst [vmem:[#allocation11 + $0x30] sm:$0xff] %v6499
    %6564 = vst [vmem:[#allocation11 + $0x38] sm:$0xff] %v6500
    %6565 = vst [vmem:[#allocation11 + $0x40] sm:$0xff] %v6501
    %6566 = vst [vmem:[#allocation11 + $0x48] sm:$0xff] %v6502
    %6567 = vst [vmem:[#allocation11 + $0x50] sm:$0xff] %v6503
    %6568 = vst [vmem:[#allocation11 + $0x58] sm:$0xff] %v6504
    %6569 = vst [vmem:[#allocation11 + $0x60] sm:$0xff] %v6505
    %6570 = vst [vmem:[#allocation11 + $0x68] sm:$0xff] %v6506
    %6571 = vst [vmem:[#allocation11 + $0x70] sm:$0xff] %v6507
    %6572 = vst [vmem:[#allocation11 + $0x78] sm:$0xff] %v6508
    %6573 = vst [vmem:[#allocation11 + $0x80] sm:$0xff] %v6509
    %6574 = vst [vmem:[#allocation11 + $0x88] sm:$0xff] %v6510
    %6575 = vst [vmem:[#allocation11 + $0x90] sm:$0xff] %v6511
    %6576 = vst [vmem:[#allocation11 + $0x98] sm:$0xff] %v6512
    %6577 = vst [vmem:[#allocation11 + $0xa0] sm:$0xff] %v6513
    %6578 = vst [vmem:[#allocation11 + $0xa8] sm:$0xff] %v6514
    %6579 = vst [vmem:[#allocation11 + $0xb0] sm:$0xff] %v6515
    %6580 = vst [vmem:[#allocation11 + $0xb8] sm:$0xff] %v6516
    %6581 = vst [vmem:[#allocation11 + $0xc0] sm:$0xff] %v6517
    %6582 = vst [vmem:[#allocation11 + $0xc8] sm:$0xff] %v6518
    %6583 = vst [vmem:[#allocation11 + $0xd0] sm:$0xff] %v6519
    %6584 = vst [vmem:[#allocation11 + $0xd8] sm:$0xff] %v6520
    %6585 = vst [vmem:[#allocation11 + $0xe0] sm:$0xff] %v6521
    %6586 = vst [vmem:[#allocation11 + $0xe8] sm:$0xff] %v6522
    %6587 = vst [vmem:[#allocation11 + $0xf0] sm:$0xff] %v6523
    %6588 = vst [vmem:[#allocation11 + $0xf8] sm:$0xff] %v6524
    %6589 = vst [vmem:[#allocation11 + $0x100] sm:$0xff] %v6525
    %6590 = vst [vmem:[#allocation11 + $0x108] sm:$0xff] %v6526
    %6591 = vst [vmem:[#allocation11 + $0x110] sm:$0xff] %v6527
    %6592 = vst [vmem:[#allocation11 + $0x118] sm:$0xff] %v6528
    %6593 = vst [vmem:[#allocation11 + $0x120] sm:$0xff] %v6529
    %6594 = vst [vmem:[#allocation11 + $0x128] sm:$0xff] %v6530
    %6595 = vst [vmem:[#allocation11 + $0x130] sm:$0xff] %v6531
    %6596 = vst [vmem:[#allocation11 + $0x138] sm:$0xff] %v6532
    %6597 = vst [vmem:[#allocation11 + $0x140] sm:$0xff] %v6533
    %6598 = vst [vmem:[#allocation11 + $0x148] sm:$0xff] %v6534
    %6599 = vst [vmem:[#allocation11 + $0x150] sm:$0xff] %v6535
    %6600 = vst [vmem:[#allocation11 + $0x158] sm:$0xff] %v6536
    %6601 = vst [vmem:[#allocation11 + $0x160] sm:$0xff] %v6537
    %6602 = vst [vmem:[#allocation11 + $0x168] sm:$0xff] %v6538
    %6603 = vst [vmem:[#allocation11 + $0x170] sm:$0xff] %v6539
    %6604 = vst [vmem:[#allocation11 + $0x178] sm:$0xff] %v6540
    %6605 = vst [vmem:[#allocation11 + $0x180] sm:$0xff] %v6541
    %6606 = vst [vmem:[#allocation11 + $0x188] sm:$0xff] %v6542
    %6607 = vst [vmem:[#allocation11 + $0x190] sm:$0xff] %v6543
    %6608 = vst [vmem:[#allocation11 + $0x198] sm:$0xff] %v6544
    %6609 = vst [vmem:[#allocation11 + $0x1a0] sm:$0xff] %v6545
    %6610 = vst [vmem:[#allocation11 + $0x1a8] sm:$0xff] %v6546
    %6611 = vst [vmem:[#allocation11 + $0x1b0] sm:$0xff] %v6547
    %6612 = vst [vmem:[#allocation11 + $0x1b8] sm:$0xff] %v6548
    %6613 = vst [vmem:[#allocation11 + $0x1c0] sm:$0xff] %v6549
    %6614 = vst [vmem:[#allocation11 + $0x1c8] sm:$0xff] %v6550
    %6615 = vst [vmem:[#allocation11 + $0x1d0] sm:$0xff] %v6551
    %6616 = vst [vmem:[#allocation11 + $0x1d8] sm:$0xff] %v6552
    %6617 = vst [vmem:[#allocation11 + $0x1e0] sm:$0xff] %v6553
    %6618 = vst [vmem:[#allocation11 + $0x1e8] sm:$0xff] %v6554
    %6619 = vst [vmem:[#allocation11 + $0x1f0] sm:$0xff] %v6555
    %6620 = vst [vmem:[#allocation11 + $0x1f8] sm:$0xff] %v6556
    // Predicated region
    $region50: #{tpu_custom_call.1} parent=1 // pred_check
      _
    $region51: #{tpu_custom_call.1} parent=1 // pred_check_branch
      %6622 = sbr.rel (0) target = $region53
    $region52: #{tpu_custom_call.1} parent=1 // pred_region
      %s6624 = ssub.s32 8192, 8192
      %6625 = vsyncadd [#allocation4], %s6624
      %s6626 = sshll.u32 [#allocation11], 4
      %s6627 = int_to_ptr.vmem [resolvable:$true] %s6626
      %6632 = dma.vmem_to_hbm [thread:$0]  %s6627, 8192, %s7, [#allocation4], 128, 128, 8
    $region53: #{tpu_custom_call.1} parent=1 // pred_fallthru
      _
    // Predicated region
    $region54: #{tpu_custom_call.1} parent=1 // pred_check
      _
    $region55: #{tpu_custom_call.1} parent=1 // pred_check_branch
      %6634 = sbr.rel (0) target = $region57
    $region56: #{tpu_custom_call.1} parent=1 // pred_region
      %6635 = dma.done [#allocation4], 8192
    $region57: #{tpu_custom_call.1} parent=1 // pred_fallthru
      _
    %6636 = vsyncpa [#allocation3], 1
    %6637 = vsyncpa [#allocation6], 1
    %6638 = vsyncpa [#allocation9], 1
    %6639 = vsyncpa [#allocation4], 1

</llo_original>
